<compile_context>
chip_gen: v7x
topology: tpu7x:2x2x1
jax: 0.10.0
libtpu: 0.0.40
codegen_flags: <defaults>
</compile_context>

<pallas_src>
import functools

import jax
import jax.numpy as jnp
from jax.experimental import pallas as pl
from jax.experimental.pallas import tpu as pltpu

LRELU_SLOPE = 0.2
BN_EPS = 1e-5
LANES = 128
VMEM_LIMIT = 32 * 1024 * 1024  # safe on v5e/v6e (128 MiB) and v7x (64 MiB)


def _round_up(x, m):
    return (x + m - 1) // m * m


def _detect_megacore():
    """True on chips with >1 TensorCore sharing a grid (v4 / v5p / v7x)."""
    try:
        kind = jax.devices()[0].device_kind.lower()
    except Exception:
        return False
    return any(tag in kind for tag in ("v4", "v5p", "v7", "7x"))


_MEGACORE = _detect_megacore()


# ---------------------------------------------------------------------------
# Pallas kernel
# ---------------------------------------------------------------------------
def _conv_kernel(p_ref, w_ref, *refs, act, with_stats, use_acc):
    """[TM,TK] @ [TK,Cp] conv-as-matmul tile.

    nk == 1 (use_acc=False): direct dot -> (stats) -> (LeakyReLU) -> bf16 store.
    nk  > 1 (use_acc=True) : f32 VMEM accumulator with pl.when init/finalize.
    Stats (per-tile column sum / sum-of-squares of the raw conv output) are
    emitted only when with_stats=True.
    """
    if with_stats:
        o_ref, sum_ref, ssq_ref = refs[0], refs[1], refs[2]
        rest = refs[3:]
    else:
        o_ref = refs[0]
        sum_ref = ssq_ref = None
        rest = refs[1:]

    def finalize(y):  # y: [TM, Cp] float32
        if with_stats:
            s = jnp.sum(y, axis=0, keepdims=True)        # [1, Cp]
            q = jnp.sum(y * y, axis=0, keepdims=True)    # [1, Cp]
            sum_ref[...] = jnp.broadcast_to(s[None], sum_ref.shape)
            ssq_ref[...] = jnp.broadcast_to(q[None], ssq_ref.shape)
        if act == "leaky":
            y = jnp.where(y > 0, y, LRELU_SLOPE * y)
        o_ref[...] = y.astype(o_ref.dtype)

    if use_acc:
        acc_ref = rest[0]
        k = pl.program_id(1)

        @pl.when(k == 0)
        def _():
            acc_ref[...] = jnp.zeros_like(acc_ref)

        acc_ref[...] += jnp.dot(p_ref[...], w_ref[...],
                                preferred_element_type=jnp.float32)

        @pl.when(k == pl.num_programs(1) - 1)
        def _():
            finalize(acc_ref[...])
    else:
        finalize(jnp.dot(p_ref[...], w_ref[...],
                         preferred_element_type=jnp.float32))


# ---------------------------------------------------------------------------
# Pallas wrapper
# ---------------------------------------------------------------------------
def _conv_tiles(M):
    if _MEGACORE and M > 8:
        # At least two M tiles so both TensorCores get work.
        TM = min(1024, _round_up(pl.cdiv(M, 2), 8))
    else:
        # Single TC: one big tile (fewer grid steps), capped for VMEM headroom.
        TM = min(1024, _round_up(M, 8))
    Mp = _round_up(M, TM)
    return TM, Mp


def conv_matmul(patches, w_mat, *, act="none", with_stats=False):
    """patches [M,K] (bf16) @ w_mat [K,Cp] (bf16, lane-dense Cp).

    Returns (y_bf16 [Mp,Cp], Cp) or (y_bf16, colsum [Cp], colssq [Cp], Cp).
    """
    M, K = patches.shape
    Kw, Cp = w_mat.shape
    assert K == Kw and Cp % LANES == 0

    TM, Mp = _conv_tiles(M)
    TK = K
    if K > 1024 and K % 512 == 0:
        TK = 512
    nm, nk = Mp // TM, K // TK
    use_acc = nk > 1

    p = patches.astype(jnp.bfloat16)
    if Mp != M:
        # Zero rows contribute exactly 0 to colsum/colssq -> stats stay exact.
        p = jnp.pad(p, ((0, Mp - M), (0, 0)))

    kernel = functools.partial(_conv_kernel, act=act,
                               with_stats=with_stats, use_acc=use_acc)

    if with_stats:
        out_shape = (jax.ShapeDtypeStruct((Mp, Cp), jnp.bfloat16),
                     jax.ShapeDtypeStruct((nm, 8, Cp), jnp.float32),
                     jax.ShapeDtypeStruct((nm, 8, Cp), jnp.float32))
        out_specs = (pl.BlockSpec((TM, Cp), lambda i, k: (i, 0)),
                     pl.BlockSpec((1, 8, Cp), lambda i, k: (i, 0, 0)),
                     pl.BlockSpec((1, 8, Cp), lambda i, k: (i, 0, 0)))
    else:
        out_shape = jax.ShapeDtypeStruct((Mp, Cp), jnp.bfloat16)
        out_specs = pl.BlockSpec((TM, Cp), lambda i, k: (i, 0))

    cost = pl.CostEstimate(
        flops=2 * Mp * K * Cp,
        transcendentals=0,
        bytes_accessed=Mp * K * 2 + nm * K * Cp * 2 + Mp * Cp * 2)

    res = pl.pallas_call(
        kernel,
        out_shape=out_shape,
        grid=(nm, nk),
        in_specs=[pl.BlockSpec((TM, TK), lambda i, k: (i, k)),
                  pl.BlockSpec((TK, Cp), lambda i, k: (k, 0))],
        out_specs=out_specs,
        scratch_shapes=[pltpu.VMEM((TM, Cp), jnp.float32)] if use_acc else [],
        compiler_params=pltpu.CompilerParams(
            dimension_semantics=("parallel", "arbitrary"),
            vmem_limit_bytes=VMEM_LIMIT),
        cost_estimate=cost,
    )(p, w_mat)

    if with_stats:
        y, tsum, tssq = res
        colsum = jnp.sum(tsum[:, 0, :], axis=0)
        colssq = jnp.sum(tssq[:, 0, :], axis=0)
        return y, colsum, colssq, Cp
    return res, Cp


# ---------------------------------------------------------------------------
# XLA-side glue: patch extraction (strided slices, NHWC) & weight prep
# ---------------------------------------------------------------------------
def extract_patches_nhwc(x, c_take, k, stride, pad):
    """x [N,H,W,C>=c_take] -> patches [N*Ho*Wo, k*k*c_take], features (kh,kw,c)."""
    N, H, W, _ = x.shape
    xs = x[..., :c_take]
    if pad:
        xs = jnp.pad(xs, ((0, 0), (pad, pad), (pad, pad), (0, 0)))
    Ho = (H + 2 * pad - k) // stride + 1
    Wo = (W + 2 * pad - k) // stride + 1
    cols = []
    for kh in range(k):
        for kw in range(k):
            cols.append(xs[:, kh:kh + (Ho - 1) * stride + 1:stride,
                              kw:kw + (Wo - 1) * stride + 1:stride, :])
    patches = jnp.concatenate(cols, axis=-1)                 # [N,Ho,Wo,k*k*c]
    return patches.reshape(N * Ho * Wo, k * k * c_take), Ho, Wo


def prepare_params(params):
    """One-time torch-layout -> kernel-ready conversion (call OUTSIDE jit).

    Conv weights: OIHW -> [kh*kw*C_in_pad, C_out_pad] bf16 (C_in padded to x8 so
    K is lane dense, C_out padded to 128 lanes). Gamma/beta zero-padded to Cp.
    Returns (arrays_pytree, static_meta).
    """
    arrays = {}
    c_in_pad, c_out = [], []
    for i in (1, 2, 3, 4):
        w = params[f"w{i}"]                                  # OIHW
        C_out, C_in, kh, kw = w.shape
        C_in_p = _round_up(C_in, 8)
        C_out_p = _round_up(C_out, LANES)
        wm = jnp.pad(w, ((0, C_out_p - C_out), (0, C_in_p - C_in), (0, 0), (0, 0)))
        wm = wm.transpose(2, 3, 1, 0).reshape(kh * kw * C_in_p, C_out_p)
        arrays[f"w{i}"] = wm.astype(jnp.bfloat16)
        c_in_pad.append(C_in_p)
        c_out.append(C_out)
        if i > 1:
            g = params[f"g{i}"].reshape(-1).astype(jnp.float32)
            b = params[f"b{i}"].reshape(-1).astype(jnp.float32)
            arrays[f"g{i}"] = jnp.pad(g, (0, C_out_p - C_out))
            arrays[f"b{i}"] = jnp.pad(b, (0, C_out_p - C_out))
    # Final 1-channel conv: tiny, done in plain jnp (f32).
    w5 = params["w5"]
    arrays["w5"] = w5.transpose(2, 3, 1, 0).reshape(-1, w5.shape[0]).astype(jnp.float32)
    meta = {"c_in_pad": tuple(c_in_pad), "c_out": tuple(c_out)}
    return arrays, meta


# ---------------------------------------------------------------------------
# Discriminator forward
# ---------------------------------------------------------------------------
def discriminator_forward(x_nchw, arrays, *, meta):
    N = x_nchw.shape[0]
    c_in_pad = meta["c_in_pad"]
    c_out = meta["c_out"]

    # NHWC once, stays NHWC/bf16 between layers; pad channels so K is lane dense.
    x = x_nchw.transpose(0, 2, 3, 1).astype(jnp.bfloat16)
    pad_c = c_in_pad[0] - x.shape[-1]
    if pad_c:
        x = jnp.pad(x, ((0, 0), (0, 0), (0, 0), (0, pad_c)))

    # block 1: Conv(k4 s2 p1) + LeakyReLU (fused in the matmul kernel, no stats)
    patches, Ho, Wo = extract_patches_nhwc(x, c_in_pad[0], 4, 2, 1)
    M = N * Ho * Wo
    y, Cp = conv_matmul(patches, arrays["w1"], act="leaky", with_stats=False)
    x = y[:M].reshape(N, Ho, Wo, Cp)

    # blocks 2-4: Conv(k4 s2 p1) -> BatchNorm (batch stats from kernel) -> LeakyReLU
    for li, i in enumerate((2, 3, 4), start=1):
        patches, Ho, Wo = extract_patches_nhwc(x, c_in_pad[li], 4, 2, 1)
        M = N * Ho * Wo
        y, colsum, colssq, Cp = conv_matmul(patches, arrays[f"w{i}"],
                                            act="none", with_stats=True)
        mean = colsum / M
        var = jnp.maximum(colssq / M - mean * mean, 0.0)     # biased variance
        scale = arrays[f"g{i}"] * jax.lax.rsqrt(var + BN_EPS)
        shift = arrays[f"b{i}"] - mean * scale
        # Plain jnp: XLA fuses this with the next layer's patch extraction.
        v = y[:M].astype(jnp.float32) * scale + shift
        v = jnp.where(v > 0, v, LRELU_SLOPE * v)
        x = v.astype(jnp.bfloat16).reshape(N, Ho, Wo, Cp)

    # block 5: Conv(k4 s1 p0, C_out=1) + Sigmoid — tiny, keep in plain JAX.
    h = x[:, :, :, :c_out[3]].reshape(N, -1).astype(jnp.float32)  # (kh,kw,c) order
    logits = jnp.dot(h, arrays["w5"], preferred_element_type=jnp.float32)
    return jax.nn.sigmoid(logits).reshape(N, 1, 1, 1)


# ---------------------------------------------------------------------------
# Pure-JAX f32 reference (torch semantics)
# ---------------------------------------------------------------------------
def _ref_forward(x, params):
    def conv(x, w, stride, pad):
        return jax.lax.conv_general_dilated(
            x, w, (stride, stride), ((pad, pad), (pad, pad)),
            dimension_numbers=("NCHW", "OIHW", "NCHW"))

    def bn(x, g, b):
        mean = jnp.mean(x, axis=(0, 2, 3), keepdims=True)
        var = jnp.mean(jnp.square(x - mean), axis=(0, 2, 3), keepdims=True)
        return (x - mean) * jax.lax.rsqrt(var + BN_EPS) * g.reshape(1, -1, 1, 1) \
            + b.reshape(1, -1, 1, 1)

    lrelu = lambda v: jnp.where(v > 0, v, LRELU_SLOPE * v)
    h = lrelu(conv(x, params["w1"], 2, 1))
    for i in (2, 3, 4):
        h = lrelu(bn(conv(h, params[f"w{i}"], 2, 1), params[f"g{i}"], params[f"b{i}"]))
    return jax.nn.sigmoid(conv(h, params["w5"], 1, 0))


# ---------------------------------------------------------------------------
if __name__ == "__main__":
    # DCGAN discriminator needs 64x64 spatial input so the final k=4 s=1 p=0 conv
    # produces a 1x1 map.  Keep batch / channels small.
    N, c_in, dim_d, H = 2, 3, 8, 64

    key = jax.random.PRNGKey(0)
    kx, k1, k2, k3, k4, k5 = jax.random.split(key, 6)
    x = jax.random.normal(kx, (N, c_in, H, H), jnp.float32)

    params = {
        "w1": 0.05 * jax.random.normal(k1, (dim_d, c_in, 4, 4), jnp.float32),
        "w2": 0.05 * jax.random.normal(k2, (dim_d * 2, dim_d, 4, 4), jnp.float32),
        "w3": 0.05 * jax.random.normal(k3, (dim_d * 4, dim_d * 2, 4, 4), jnp.float32),
        "w4": 0.05 * jax.random.normal(k4, (dim_d * 8, dim_d * 4, 4, 4), jnp.float32),
        "w5": 0.05 * jax.random.normal(k5, (1, dim_d * 8, 4, 4), jnp.float32),
        # BatchNorm affine params (PyTorch default init: gamma=1, beta=0)
        "g2": jnp.ones((dim_d * 2,), jnp.float32),
        "b2": jnp.zeros((dim_d * 2,), jnp.float32),
        "g3": jnp.ones((dim_d * 4,), jnp.float32),
        "b3": jnp.zeros((dim_d * 4,), jnp.float32),
        "g4": jnp.ones((dim_d * 8,), jnp.float32),
        "b4": jnp.zeros((dim_d * 8,), jnp.float32),
    }

    # One-time weight layout / padding / cast — outside the jitted forward.
    arrays, meta = prepare_params(params)
    arrays = jax.device_put(arrays)

    fwd = jax.jit(functools.partial(discriminator_forward, meta=meta))
    out = jax.block_until_ready(fwd(x, arrays))
    assert out.shape == (N, 1, 1, 1), out.shape
    assert bool(jnp.all(jnp.isfinite(out)))

    ref = jax.block_until_ready(_ref_forward(x, params))
    # bf16 MXU operands + bf16 inter-layer activations vs f32 reference.
    assert bool(jnp.allclose(out, ref, atol=5e-2, rtol=5e-2)), (out, ref)

    print("KERNEL_OK")
</pallas_src>

<mosaic_0001>
module attributes {stable_mosaic.version = 11 : i64} {
  func.func @_conv_kernel(%arg0: i32, %arg1: i32, %arg2: memref<1024x128xbf16, #tpu.memory_space<vmem>>, %arg3: memref<128x128xbf16, #tpu.memory_space<vmem>>, %arg4: memref<1024x128xbf16, #tpu.memory_space<vmem>>) attributes {dimension_semantics = [#tpu.dimension_semantics<parallel>, #tpu.dimension_semantics<arbitrary>], iteration_bounds = array<i64: 2, 1>, scalar_prefetch = 0 : i64, scratch_operands = 0 : i64, tpu.core_type = #tpu.core_type<tc>, window_params = [{transform_indices = @transform_0, window_bounds = array<i64: 1024, 128>}, {transform_indices = @transform_1, window_bounds = array<i64: 128, 128>}, {transform_indices = @transform_2, window_bounds = array<i64: 1024, 128>}]} {
    %c0 = arith.constant 0 : index
    %c0_0 = arith.constant 0 : index
    %0 = vector.load %arg2[%c0, %c0_0] : memref<1024x128xbf16, #tpu.memory_space<vmem>>, vector<1024x128xbf16>
    %c0_1 = arith.constant 0 : index
    %c0_2 = arith.constant 0 : index
    %1 = vector.load %arg3[%c0_1, %c0_2] : memref<128x128xbf16, #tpu.memory_space<vmem>>, vector<128x128xbf16>
    %cst = arith.constant dense<0.000000e+00> : vector<1024x128xf32>
    %2 = tpu.matmul %0, %1, %cst {dimension_numbers = #tpu.dot_dimension_numbers<[1], [0], [0], [1], [0, 0, 1, 1], [], []>} : vector<1024x128xbf16>, vector<128x128xbf16>, vector<1024x128xf32> -> vector<1024x128xf32>
    %cst_3 = arith.constant 0.000000e+00 : f32
    %3 = vector.broadcast %cst_3 : f32 to vector<1024x128xf32>
    %4 = arith.cmpf ogt, %2, %3 : vector<1024x128xf32>
    %cst_4 = arith.constant 2.000000e-01 : f32
    %5 = vector.broadcast %cst_4 : f32 to vector<1024x128xf32>
    %6 = arith.mulf %5, %2 : vector<1024x128xf32>
    %7 = arith.select %4, %2, %6 : vector<1024x128xi1>, vector<1024x128xf32>
    %8 = arith.truncf %7 : vector<1024x128xf32> to vector<1024x128xbf16>
    %c0_5 = arith.constant 0 : index
    %c0_6 = arith.constant 0 : index
    %9 = vector.load %arg4[%c0_5, %c0_6] : memref<1024x128xbf16, #tpu.memory_space<vmem>>, vector<1024x128xbf16>
    tpu.vector_store %arg4[%c0_5, %c0_6], %8 {strides = array<i32>} : memref<1024x128xbf16, #tpu.memory_space<vmem>>, vector<1024x128xbf16>,
    return
  }
  func.func @transform_0(%arg0: i32, %arg1: i32) -> (i32, i32) {
    %c0_i32 = arith.constant 0 : i32
    return %arg0, %arg1 : i32, i32
  }
  func.func @transform_1(%arg0: i32, %arg1: i32) -> (i32, i32) {
    %c0_i32 = arith.constant 0 : i32
    %c0_i32_0 = arith.constant 0 : i32
    return %arg1, %c0_i32 : i32, i32
  }
  func.func @transform_2(%arg0: i32, %arg1: i32) -> (i32, i32) {
    %c0_i32 = arith.constant 0 : i32
    %c0_i32_0 = arith.constant 0 : i32
    return %arg0, %c0_i32 : i32, i32
  }
}

module attributes {stable_mosaic.version = 11 : i64} {
  func.func @_conv_kernel(%arg0: i32, %arg1: i32, %arg2: memref<512x128xbf16, #tpu.memory_space<vmem>>, %arg3: memref<128x128xbf16, #tpu.memory_space<vmem>>, %arg4: memref<512x128xbf16, #tpu.memory_space<vmem>>, %arg5: memref<1x8x128xf32, #tpu.memory_space<vmem>>, %arg6: memref<1x8x128xf32, #tpu.memory_space<vmem>>) attributes {dimension_semantics = [#tpu.dimension_semantics<parallel>, #tpu.dimension_semantics<arbitrary>], iteration_bounds = array<i64: 1, 1>, scalar_prefetch = 0 : i64, scratch_operands = 0 : i64, tpu.core_type = #tpu.core_type<tc>, window_params = [{transform_indices = @transform_0, window_bounds = array<i64: 512, 128>}, {transform_indices = @transform_1, window_bounds = array<i64: 128, 128>}, {transform_indices = @transform_2, window_bounds = array<i64: 512, 128>}, {transform_indices = @transform_3, window_bounds = array<i64: 1, 8, 128>}, {transform_indices = @transform_4, window_bounds = array<i64: 1, 8, 128>}]} {
    %c0 = arith.constant 0 : index
    %c0_0 = arith.constant 0 : index
    %0 = vector.load %arg2[%c0, %c0_0] : memref<512x128xbf16, #tpu.memory_space<vmem>>, vector<512x128xbf16>
    %c0_1 = arith.constant 0 : index
    %c0_2 = arith.constant 0 : index
    %1 = vector.load %arg3[%c0_1, %c0_2] : memref<128x128xbf16, #tpu.memory_space<vmem>>, vector<128x128xbf16>
    %cst = arith.constant dense<0.000000e+00> : vector<512x128xf32>
    %2 = tpu.matmul %0, %1, %cst {dimension_numbers = #tpu.dot_dimension_numbers<[1], [0], [0], [1], [0, 0, 1, 1], [], []>} : vector<512x128xbf16>, vector<128x128xbf16>, vector<512x128xf32> -> vector<512x128xf32>
    %cst_3 = arith.constant dense<0.000000e+00> : vector<128xf32>
    %3 = vector.multi_reduction <add>, %2, %cst_3 [0] : vector<512x128xf32> to vector<128xf32>
    %4 = vector.shape_cast %3 : vector<128xf32> to vector<1x128xf32>
    %5 = arith.mulf %2, %2 : vector<512x128xf32>
    %cst_4 = arith.constant dense<0.000000e+00> : vector<128xf32>
    %6 = vector.multi_reduction <add>, %5, %cst_4 [0] : vector<512x128xf32> to vector<128xf32>
    %7 = vector.shape_cast %6 : vector<128xf32> to vector<1x128xf32>
    %8 = vector.shape_cast %4 : vector<1x128xf32> to vector<1x1x128xf32>
    %9 = vector.shape_cast %8 : vector<1x1x128xf32> to vector<1x1x128xf32>
    %10 = vector.broadcast %9 : vector<1x1x128xf32> to vector<1x8x128xf32>
    %c0_5 = arith.constant 0 : index
    %c0_6 = arith.constant 0 : index
    %c0_7 = arith.constant 0 : index
    %11 = vector.load %arg5[%c0_5, %c0_6, %c0_7] : memref<1x8x128xf32, #tpu.memory_space<vmem>>, vector<1x8x128xf32>
    tpu.vector_store %arg5[%c0_5, %c0_6, %c0_7], %10 {strides = array<i32>} : memref<1x8x128xf32, #tpu.memory_space<vmem>>, vector<1x8x128xf32>,
    %12 = vector.shape_cast %7 : vector<1x128xf32> to vector<1x1x128xf32>
    %13 = vector.shape_cast %12 : vector<1x1x128xf32> to vector<1x1x128xf32>
    %14 = vector.broadcast %13 : vector<1x1x128xf32> to vector<1x8x128xf32>
    %c0_8 = arith.constant 0 : index
    %c0_9 = arith.constant 0 : index
    %c0_10 = arith.constant 0 : index
    %15 = vector.load %arg6[%c0_8, %c0_9, %c0_10] : memref<1x8x128xf32, #tpu.memory_space<vmem>>, vector<1x8x128xf32>
    tpu.vector_store %arg6[%c0_8, %c0_9, %c0_10], %14 {strides = array<i32>} : memref<1x8x128xf32, #tpu.memory_space<vmem>>, vector<1x8x128xf32>,
    %16 = arith.truncf %2 : vector<512x128xf32> to vector<512x128xbf16>
    %c0_11 = arith.constant 0 : index
    %c0_12 = arith.constant 0 : index
    %17 = vector.load %arg4[%c0_11, %c0_12] : memref<512x128xbf16, #tpu.memory_space<vmem>>, vector<512x128xbf16>
    tpu.vector_store %arg4[%c0_11, %c0_12], %16 {strides = array<i32>} : memref<512x128xbf16, #tpu.memory_space<vmem>>, vector<512x128xbf16>,
    return
  }
  func.func @transform_0(%arg0: i32, %arg1: i32) -> (i32, i32) {
    %c0_i32 = arith.constant 0 : i32
    return %arg0, %arg1 : i32, i32
  }
  func.func @transform_1(%arg0: i32, %arg1: i32) -> (i32, i32) {
    %c0_i32 = arith.constant 0 : i32
    %c0_i32_0 = arith.constant 0 : i32
    return %arg1, %c0_i32 : i32, i32
  }
  func.func @transform_2(%arg0: i32, %arg1: i32) -> (i32, i32) {
    %c0_i32 = arith.constant 0 : i32
    %c0_i32_0 = arith.constant 0 : i32
    return %arg0, %c0_i32 : i32, i32
  }
  func.func @transform_3(%arg0: i32, %arg1: i32) -> (i32, i32, i32) {
    %c0_i32 = arith.constant 0 : i32
    %c0_i32_0 = arith.constant 0 : i32
    %c0_i32_1 = arith.constant 0 : i32
    return %arg0, %c0_i32, %c0_i32_0 : i32, i32, i32
  }
  func.func @transform_4(%arg0: i32, %arg1: i32) -> (i32, i32, i32) {
    %c0_i32 = arith.constant 0 : i32
    %c0_i32_0 = arith.constant 0 : i32
    %c0_i32_1 = arith.constant 0 : i32
    return %arg0, %c0_i32, %c0_i32_0 : i32, i32, i32
  }
}

module attributes {stable_mosaic.version = 11 : i64} {
  func.func @_conv_kernel(%arg0: i32, %arg1: i32, %arg2: memref<128x256xbf16, #tpu.memory_space<vmem>>, %arg3: memref<256x128xbf16, #tpu.memory_space<vmem>>, %arg4: memref<128x128xbf16, #tpu.memory_space<vmem>>, %arg5: memref<1x8x128xf32, #tpu.memory_space<vmem>>, %arg6: memref<1x8x128xf32, #tpu.memory_space<vmem>>) attributes {dimension_semantics = [#tpu.dimension_semantics<parallel>, #tpu.dimension_semantics<arbitrary>], iteration_bounds = array<i64: 1, 1>, scalar_prefetch = 0 : i64, scratch_operands = 0 : i64, tpu.core_type = #tpu.core_type<tc>, window_params = [{transform_indices = @transform_0, window_bounds = array<i64: 128, 256>}, {transform_indices = @transform_1, window_bounds = array<i64: 256, 128>}, {transform_indices = @transform_2, window_bounds = array<i64: 128, 128>}, {transform_indices = @transform_3, window_bounds = array<i64: 1, 8, 128>}, {transform_indices = @transform_4, window_bounds = array<i64: 1, 8, 128>}]} {
    %c0 = arith.constant 0 : index
    %c0_0 = arith.constant 0 : index
    %0 = vector.load %arg2[%c0, %c0_0] : memref<128x256xbf16, #tpu.memory_space<vmem>>, vector<128x256xbf16>
    %c0_1 = arith.constant 0 : index
    %c0_2 = arith.constant 0 : index
    %1 = vector.load %arg3[%c0_1, %c0_2] : memref<256x128xbf16, #tpu.memory_space<vmem>>, vector<256x128xbf16>
    %cst = arith.constant dense<0.000000e+00> : vector<128x128xf32>
    %2 = tpu.matmul %0, %1, %cst {dimension_numbers = #tpu.dot_dimension_numbers<[1], [0], [0], [1], [0, 0, 1, 1], [], []>} : vector<128x256xbf16>, vector<256x128xbf16>, vector<128x128xf32> -> vector<128x128xf32>
    %cst_3 = arith.constant dense<0.000000e+00> : vector<128xf32>
    %3 = vector.multi_reduction <add>, %2, %cst_3 [0] : vector<128x128xf32> to vector<128xf32>
    %4 = vector.shape_cast %3 : vector<128xf32> to vector<1x128xf32>
    %5 = arith.mulf %2, %2 : vector<128x128xf32>
    %cst_4 = arith.constant dense<0.000000e+00> : vector<128xf32>
    %6 = vector.multi_reduction <add>, %5, %cst_4 [0] : vector<128x128xf32> to vector<128xf32>
    %7 = vector.shape_cast %6 : vector<128xf32> to vector<1x128xf32>
    %8 = vector.shape_cast %4 : vector<1x128xf32> to vector<1x1x128xf32>
    %9 = vector.shape_cast %8 : vector<1x1x128xf32> to vector<1x1x128xf32>
    %10 = vector.broadcast %9 : vector<1x1x128xf32> to vector<1x8x128xf32>
    %c0_5 = arith.constant 0 : index
    %c0_6 = arith.constant 0 : index
    %c0_7 = arith.constant 0 : index
    %11 = vector.load %arg5[%c0_5, %c0_6, %c0_7] : memref<1x8x128xf32, #tpu.memory_space<vmem>>, vector<1x8x128xf32>
    tpu.vector_store %arg5[%c0_5, %c0_6, %c0_7], %10 {strides = array<i32>} : memref<1x8x128xf32, #tpu.memory_space<vmem>>, vector<1x8x128xf32>,
    %12 = vector.shape_cast %7 : vector<1x128xf32> to vector<1x1x128xf32>
    %13 = vector.shape_cast %12 : vector<1x1x128xf32> to vector<1x1x128xf32>
    %14 = vector.broadcast %13 : vector<1x1x128xf32> to vector<1x8x128xf32>
    %c0_8 = arith.constant 0 : index
    %c0_9 = arith.constant 0 : index
    %c0_10 = arith.constant 0 : index
    %15 = vector.load %arg6[%c0_8, %c0_9, %c0_10] : memref<1x8x128xf32, #tpu.memory_space<vmem>>, vector<1x8x128xf32>
    tpu.vector_store %arg6[%c0_8, %c0_9, %c0_10], %14 {strides = array<i32>} : memref<1x8x128xf32, #tpu.memory_space<vmem>>, vector<1x8x128xf32>,
    %16 = arith.truncf %2 : vector<128x128xf32> to vector<128x128xbf16>
    %c0_11 = arith.constant 0 : index
    %c0_12 = arith.constant 0 : index
    %17 = vector.load %arg4[%c0_11, %c0_12] : memref<128x128xbf16, #tpu.memory_space<vmem>>, vector<128x128xbf16>
    tpu.vector_store %arg4[%c0_11, %c0_12], %16 {strides = array<i32>} : memref<128x128xbf16, #tpu.memory_space<vmem>>, vector<128x128xbf16>,
    return
  }
  func.func @transform_0(%arg0: i32, %arg1: i32) -> (i32, i32) {
    %c0_i32 = arith.constant 0 : i32
    return %arg0, %arg1 : i32, i32
  }
  func.func @transform_1(%arg0: i32, %arg1: i32) -> (i32, i32) {
    %c0_i32 = arith.constant 0 : i32
    %c0_i32_0 = arith.constant 0 : i32
    return %arg1, %c0_i32 : i32, i32
  }
  func.func @transform_2(%arg0: i32, %arg1: i32) -> (i32, i32) {
    %c0_i32 = arith.constant 0 : i32
    %c0_i32_0 = arith.constant 0 : i32
    return %arg0, %c0_i32 : i32, i32
  }
  func.func @transform_3(%arg0: i32, %arg1: i32) -> (i32, i32, i32) {
    %c0_i32 = arith.constant 0 : i32
    %c0_i32_0 = arith.constant 0 : i32
    %c0_i32_1 = arith.constant 0 : i32
    return %arg0, %c0_i32, %c0_i32_0 : i32, i32, i32
  }
  func.func @transform_4(%arg0: i32, %arg1: i32) -> (i32, i32, i32) {
    %c0_i32 = arith.constant 0 : i32
    %c0_i32_0 = arith.constant 0 : i32
    %c0_i32_1 = arith.constant 0 : i32
    return %arg0, %c0_i32, %c0_i32_0 : i32, i32, i32
  }
}

module attributes {stable_mosaic.version = 11 : i64} {
  func.func @_conv_kernel(%arg0: i32, %arg1: i32, %arg2: memref<32x512xbf16, #tpu.memory_space<vmem>>, %arg3: memref<512x128xbf16, #tpu.memory_space<vmem>>, %arg4: memref<32x128xbf16, #tpu.memory_space<vmem>>, %arg5: memref<1x8x128xf32, #tpu.memory_space<vmem>>, %arg6: memref<1x8x128xf32, #tpu.memory_space<vmem>>) attributes {dimension_semantics = [#tpu.dimension_semantics<parallel>, #tpu.dimension_semantics<arbitrary>], iteration_bounds = array<i64: 1, 1>, scalar_prefetch = 0 : i64, scratch_operands = 0 : i64, tpu.core_type = #tpu.core_type<tc>, window_params = [{transform_indices = @transform_0, window_bounds = array<i64: 32, 512>}, {transform_indices = @transform_1, window_bounds = array<i64: 512, 128>}, {transform_indices = @transform_2, window_bounds = array<i64: 32, 128>}, {transform_indices = @transform_3, window_bounds = array<i64: 1, 8, 128>}, {transform_indices = @transform_4, window_bounds = array<i64: 1, 8, 128>}]} {
    %c0 = arith.constant 0 : index
    %c0_0 = arith.constant 0 : index
    %0 = vector.load %arg2[%c0, %c0_0] : memref<32x512xbf16, #tpu.memory_space<vmem>>, vector<32x512xbf16>
    %c0_1 = arith.constant 0 : index
    %c0_2 = arith.constant 0 : index
    %1 = vector.load %arg3[%c0_1, %c0_2] : memref<512x128xbf16, #tpu.memory_space<vmem>>, vector<512x128xbf16>
    %cst = arith.constant dense<0.000000e+00> : vector<32x128xf32>
    %2 = tpu.matmul %0, %1, %cst {dimension_numbers = #tpu.dot_dimension_numbers<[1], [0], [0], [1], [0, 0, 1, 1], [], []>} : vector<32x512xbf16>, vector<512x128xbf16>, vector<32x128xf32> -> vector<32x128xf32>
    %cst_3 = arith.constant dense<0.000000e+00> : vector<128xf32>
    %3 = vector.multi_reduction <add>, %2, %cst_3 [0] : vector<32x128xf32> to vector<128xf32>
    %4 = vector.shape_cast %3 : vector<128xf32> to vector<1x128xf32>
    %5 = arith.mulf %2, %2 : vector<32x128xf32>
    %cst_4 = arith.constant dense<0.000000e+00> : vector<128xf32>
    %6 = vector.multi_reduction <add>, %5, %cst_4 [0] : vector<32x128xf32> to vector<128xf32>
    %7 = vector.shape_cast %6 : vector<128xf32> to vector<1x128xf32>
    %8 = vector.shape_cast %4 : vector<1x128xf32> to vector<1x1x128xf32>
    %9 = vector.shape_cast %8 : vector<1x1x128xf32> to vector<1x1x128xf32>
    %10 = vector.broadcast %9 : vector<1x1x128xf32> to vector<1x8x128xf32>
    %c0_5 = arith.constant 0 : index
    %c0_6 = arith.constant 0 : index
    %c0_7 = arith.constant 0 : index
    %11 = vector.load %arg5[%c0_5, %c0_6, %c0_7] : memref<1x8x128xf32, #tpu.memory_space<vmem>>, vector<1x8x128xf32>
    tpu.vector_store %arg5[%c0_5, %c0_6, %c0_7], %10 {strides = array<i32>} : memref<1x8x128xf32, #tpu.memory_space<vmem>>, vector<1x8x128xf32>,
    %12 = vector.shape_cast %7 : vector<1x128xf32> to vector<1x1x128xf32>
    %13 = vector.shape_cast %12 : vector<1x1x128xf32> to vector<1x1x128xf32>
    %14 = vector.broadcast %13 : vector<1x1x128xf32> to vector<1x8x128xf32>
    %c0_8 = arith.constant 0 : index
    %c0_9 = arith.constant 0 : index
    %c0_10 = arith.constant 0 : index
    %15 = vector.load %arg6[%c0_8, %c0_9, %c0_10] : memref<1x8x128xf32, #tpu.memory_space<vmem>>, vector<1x8x128xf32>
    tpu.vector_store %arg6[%c0_8, %c0_9, %c0_10], %14 {strides = array<i32>} : memref<1x8x128xf32, #tpu.memory_space<vmem>>, vector<1x8x128xf32>,
    %16 = arith.truncf %2 : vector<32x128xf32> to vector<32x128xbf16>
    %c0_11 = arith.constant 0 : index
    %c0_12 = arith.constant 0 : index
    %17 = vector.load %arg4[%c0_11, %c0_12] : memref<32x128xbf16, #tpu.memory_space<vmem>>, vector<32x128xbf16>
    tpu.vector_store %arg4[%c0_11, %c0_12], %16 {strides = array<i32>} : memref<32x128xbf16, #tpu.memory_space<vmem>>, vector<32x128xbf16>,
    return
  }
  func.func @transform_0(%arg0: i32, %arg1: i32) -> (i32, i32) {
    %c0_i32 = arith.constant 0 : i32
    return %arg0, %arg1 : i32, i32
  }
  func.func @transform_1(%arg0: i32, %arg1: i32) -> (i32, i32) {
    %c0_i32 = arith.constant 0 : i32
    %c0_i32_0 = arith.constant 0 : i32
    return %arg1, %c0_i32 : i32, i32
  }
  func.func @transform_2(%arg0: i32, %arg1: i32) -> (i32, i32) {
    %c0_i32 = arith.constant 0 : i32
    %c0_i32_0 = arith.constant 0 : i32
    return %arg0, %c0_i32 : i32, i32
  }
  func.func @transform_3(%arg0: i32, %arg1: i32) -> (i32, i32, i32) {
    %c0_i32 = arith.constant 0 : i32
    %c0_i32_0 = arith.constant 0 : i32
    %c0_i32_1 = arith.constant 0 : i32
    return %arg0, %c0_i32, %c0_i32_0 : i32, i32, i32
  }
  func.func @transform_4(%arg0: i32, %arg1: i32) -> (i32, i32, i32) {
    %c0_i32 = arith.constant 0 : i32
    %c0_i32_0 = arith.constant 0 : i32
    %c0_i32_1 = arith.constant 0 : i32
    return %arg0, %c0_i32, %c0_i32_0 : i32, i32, i32
  }
}

</mosaic_0001>

<llo_original>
// kernel: discriminator_forward.4
$region0: #{discriminator_forward.4}
  #allocation0 [shape = 'u32[]', space=smem, size = 0x4, offset = 0x4, fixed_abs, tag = 'smem constant byte address 0x4 - core index']
  #allocation1 [shape = 'u32[144,128]{1,0:T(1,128)}', space=vmem, size = 0x12000, scoped, tag = 'internal scratch']
  %s0 = inlined_call_operand.vmem [shape: bf16[2048,128], index: 0, kind: input, shape index: {}]
  %s1 = inlined_call_operand.vmem [shape: bf16[128,128], index: 1, kind: input, shape index: {}]
  %s2 = inlined_call_operand.vmem [shape: bf16[2048,128], index: 2, kind: output, shape index: {}]
  %s3 = sld [smem:[#allocation0]]
  $region41: #{discriminator_forward.4} parent=0
    _
  %s5 = ssub.s32 1, %s3
  %s6 = scalar_select 0, %s5, %s3
  loop: start=0, step=1, limit=4
  $region2: #{discriminator_forward.4} parent=0 // loop_pre_header
    _
  $region3: #{discriminator_forward.4} parent=0 // loop_header
    %s8 = sphi 0, %s12
    %p9 = scmp.ge.s32.totalorder %s8, 4
    %s15 = sphi 0, %s27
    %s16 = sphi 0, %s23
    %s17 = sphi 0, %s15
    %s18 = sphi 0, %s16
    %s19 = sphi 0, %s17
    %s20 = sphi 0, %s18
    %s32 = sphi 0, %s34
    %s35 = sphi 0, %s32
    %s36 = sphi 0, %s35
    %s52 = sphi 0, %s36
    %s58 = sphi 0, %s60
    %s61 = sphi 0, %s58
    %s62 = sphi 0, %s61
    %s78 = sphi 0, %s62
    %s84 = sphi 0, %s86
    %s87 = sphi 0, %s84
    %s88 = sphi 0, %s87
    %s104 = sphi 0, %s88
  $region4: #{discriminator_forward.4} parent=0 // loop_header_branch
    %11 = sbr.rel (%p9) target = $region8
  $region5: #{discriminator_forward.4} parent=0 // loop_body
    %s13 = ssub.s32 %s8, 1
    %s14 = ssub.s32 %s8, 2
    %s21 = sadd.s32 1, %s16
    %p22 = scmp.ge.s32.totalorder %s21, 1
    %s23 = scalar_select %p22, 0, %s21
    %s24 = sadd.s32 1, %s15
    %s25 = scalar_select %p22, %s24, %s15
    %p26 = scmp.ge.s32.totalorder %s25, 2
    %s27 = scalar_select %p26, 0, %s25
    %s28 = ssub.s32 %s15, %s27
    %s29 = ssub.s32 %s16, %s23
    %s30 = sor.u32 %s28, %s29
    %p31 = scmp.eq.s32.totalorder %s30, 0
    %s33 = sadd.s32 %s32, 1
    %s34 = scalar_select %p31, %s32, %s33
    %p37 = pneg %p31
    %p38 = scmp.eq.s32.totalorder %s8, 1
    %p39 = por %p37, %p38
    %p40 = scmp.ne.s32.totalorder %s32, %s35
    %p41 = scmp.eq.s32.totalorder %s8, 0
    %p42 = por %p40, %p41
    %p43 = scmp.ne.s32.totalorder %s32, %s35
    %p44 = scmp.eq.s32.totalorder %s13, 1
    %p45 = por %p43, %p44
    %p46 = scmp.ne.s32.totalorder %s35, %s36
    %p47 = scmp.eq.s32.totalorder %s13, 0
    %p48 = por %p46, %p47
    %p49 = scmp.ne.s32.totalorder %s35, %s36
    %p50 = scmp.eq.s32.totalorder %s14, 1
    %p51 = por %p49, %p50
    %p53 = scmp.ne.s32.totalorder %s36, %s52
    %p54 = scmp.eq.s32.totalorder %s14, 0
    %p55 = por %p53, %p54
    %s56 = ssub.s32 %s16, %s23
    %p57 = scmp.eq.s32.totalorder %s56, 0
    %s59 = sadd.s32 %s58, 1
    %s60 = scalar_select %p57, %s58, %s59
    %p63 = pneg %p57
    %p64 = scmp.eq.s32.totalorder %s8, 1
    %p65 = por %p63, %p64
    %p66 = scmp.ne.s32.totalorder %s58, %s61
    %p67 = scmp.eq.s32.totalorder %s8, 0
    %p68 = por %p66, %p67
    %p69 = scmp.ne.s32.totalorder %s58, %s61
    %p70 = scmp.eq.s32.totalorder %s13, 1
    %p71 = por %p69, %p70
    %p72 = scmp.ne.s32.totalorder %s61, %s62
    %p73 = scmp.eq.s32.totalorder %s13, 0
    %p74 = por %p72, %p73
    %p75 = scmp.ne.s32.totalorder %s61, %s62
    %p76 = scmp.eq.s32.totalorder %s14, 1
    %p77 = por %p75, %p76
    %p79 = scmp.ne.s32.totalorder %s62, %s78
    %p80 = scmp.eq.s32.totalorder %s14, 0
    %p81 = por %p79, %p80
    %s82 = ssub.s32 %s15, %s27
    %p83 = scmp.eq.s32.totalorder %s82, 0
    %s85 = sadd.s32 %s84, 1
    %s86 = scalar_select %p83, %s84, %s85
    %p89 = pneg %p83
    %p90 = scmp.eq.s32.totalorder %s8, 1
    %p91 = por %p89, %p90
    %p92 = scmp.ne.s32.totalorder %s84, %s87
    %p93 = scmp.eq.s32.totalorder %s8, 0
    %p94 = por %p92, %p93
    %p95 = scmp.ne.s32.totalorder %s84, %s87
    %p96 = scmp.eq.s32.totalorder %s13, 1
    %p97 = por %p95, %p96
    %p98 = scmp.ne.s32.totalorder %s87, %s88
    %p99 = scmp.eq.s32.totalorder %s13, 0
    %p100 = por %p98, %p99
    %p101 = scmp.ne.s32.totalorder %s87, %s88
    %p102 = scmp.eq.s32.totalorder %s14, 1
    %p103 = por %p101, %p102
    %p105 = scmp.ne.s32.totalorder %s88, %s104
    %p106 = scmp.eq.s32.totalorder %s14, 0
    %p107 = por %p105, %p106
    %p108 = scmp.le.s32.totalorder 1, %s8
    %p109 = scmp.lt.s32.totalorder %s8, 3
    %p110 = pnand %p108, %p109
    %p111 = pneg %p110
    // Predicated region
    $region9: #{discriminator_forward.4} parent=5 // pred_check
      _
    $region10: #{discriminator_forward.4} parent=5 // pred_check_branch
      %113 = sbr.rel (%p110) target = $region12
    $region11: #{discriminator_forward.4} parent=5 // pred_region
      %s114 = ssub.s32 %s8, 1
      // Predicated region
      $region13: #{discriminator_forward.4} parent=11 // pred_check
        %p115 = pneg %p74
      $region14: #{discriminator_forward.4} parent=11 // pred_check_branch
        %117 = sbr.rel (%p115) target = $region16
      $region15: #{discriminator_forward.4} parent=11 // pred_region
        %s118 = smul.u32 16, %s18
        %p119 = scmp.lt.s32.totalorder %s118, 15
        %s120 = scalar_select %p119, %s118, 15
        %s121 = smul.addr %s120, 4
        %s122 = scalar_lea.vmem %s1, %s121
        %s123 = smul.u32 16, %s18
      $region16: #{discriminator_forward.4} parent=11 // pred_fallthru
        _
    $region12: #{discriminator_forward.4} parent=5 // pred_fallthru
      _
    %p124 = scmp.lt.s32.totalorder %s8, 2
    // Predicated region
    $region17: #{discriminator_forward.4} parent=5 // pred_check
      %p125 = pneg %p124
    $region18: #{discriminator_forward.4} parent=5 // pred_check_branch
      %127 = sbr.rel (%p125) target = $region20
    $region19: #{discriminator_forward.4} parent=5 // pred_region
      // Predicated region
      $region21: #{discriminator_forward.4} parent=19 // pred_check
        %p128 = pneg %p42
      $region22: #{discriminator_forward.4} parent=19 // pred_check_branch
        %130 = sbr.rel (%p128) target = $region24
      $region23: #{discriminator_forward.4} parent=19 // pred_region
        %s131 = smul.u32 128, %s15
        %p132 = scmp.lt.s32.totalorder %s131, 255
        %s133 = scalar_select %p132, %s131, 255
        %p134 = scmp.lt.s32.totalorder %s16, 0
        %s135 = scalar_select %p134, %s16, 0
        %s136 = sadd.s32 %s135, %s133
        %s137 = smul.addr %s136, 4
        %s138 = scalar_lea.vmem %s0, %s137
        %s139 = smul.u32 128, %s15
      $region24: #{discriminator_forward.4} parent=19 // pred_fallthru
        _
    $region20: #{discriminator_forward.4} parent=5 // pred_fallthru
      _
    %p140 = scmp.le.s32.totalorder 1, %s8
    %p141 = scmp.lt.s32.totalorder %s8, 3
    %p142 = pnand %p140, %p141
    %p143 = pneg %p142
    // Predicated region
    $region25: #{discriminator_forward.4} parent=5 // pred_check
      _
    $region26: #{discriminator_forward.4} parent=5 // pred_check_branch
      %145 = sbr.rel (%p142) target = $region28
    $region27: #{discriminator_forward.4} parent=5 // pred_region
      %s146 = ssub.s32 %s8, 1
      %s147 = smul.u32 128, %s17
      %p148 = scmp.lt.s32.totalorder %s147, 255
      %s149 = scalar_select %p148, %s147, 255
      %p150 = scmp.lt.s32.totalorder %s18, 0
      %s151 = scalar_select %p150, %s18, 0
      %s152 = sadd.s32 %s151, %s149
      %s153 = smul.addr %s152, 4
      %s154 = scalar_lea.vmem %s0, %s153
      %p155 = pneg %p48
      %p156 = pneg %p45
      %s157 = smul.u32 16, %s18
      %p158 = scmp.lt.s32.totalorder %s157, 15
      %s159 = scalar_select %p158, %s157, 15
      %s160 = smul.addr %s159, 4
      %s161 = scalar_lea.vmem %s1, %s160
      %p162 = pneg %p74
      %p163 = pneg %p71
      %p164 = pneg %p100
      %p165 = pneg %p97
      %s166 = smul.u32 128, %s17
      %p167 = scmp.lt.s32.totalorder %s166, 255
      %s168 = scalar_select %p167, %s166, 255
      %s169 = smul.addr %s168, 4
      %s170 = scalar_lea.vmem %s2, %s169
      %s171 = smul.u32 128, %s17
      %p172 = scmp.lt.s32.totalorder %s171, 255
      %s173 = scalar_select %p172, %s171, 255
      %p174 = scmp.lt.s32.totalorder %s18, 0
      %s175 = scalar_select %p174, %s18, 0
      %s176 = sadd.s32 %s175, %s173
      %s177 = smul.addr %s176, 4
      %s178 = scalar_lea.vmem %s0, %s177
      %s179 = smul.u32 128, %s17
      %s180 = smul.u32 16, %s18
      %p181 = scmp.lt.s32.totalorder %s180, 15
      %s182 = scalar_select %p181, %s180, 15
      %s183 = smul.addr %s182, 4
      %s184 = scalar_lea.vmem %s1, %s183
      %s185 = smul.u32 16, %s18
      %s186 = smul.u32 128, %s17
      %p187 = scmp.lt.s32.totalorder %s186, 255
      %s188 = scalar_select %p187, %s186, 255
      %s189 = smul.addr %s188, 4
      %s190 = scalar_lea.vmem %s2, %s189
      %s191 = smul.u32 128, %s17
      %v193 = vld [vmem:[%s178] sm:$0xf]
      %v194 = vld [vmem:[%s178 + $0x4] sm:$0xf]
      %v195 = vld [vmem:[%s178 + $0x8] sm:$0xf]
      %v196 = vld [vmem:[%s178 + $0xc] sm:$0xf]
      %v197 = vld [vmem:[%s178 + $0x10] sm:$0xf]
      %v198 = vld [vmem:[%s178 + $0x14] sm:$0xf]
      %v199 = vld [vmem:[%s178 + $0x18] sm:$0xf]
      %v200 = vld [vmem:[%s178 + $0x1c] sm:$0xf]
      %v201 = vld [vmem:[%s178 + $0x20] sm:$0xf]
      %v202 = vld [vmem:[%s178 + $0x24] sm:$0xf]
      %v203 = vld [vmem:[%s178 + $0x28] sm:$0xf]
      %v204 = vld [vmem:[%s178 + $0x2c] sm:$0xf]
      %v205 = vld [vmem:[%s178 + $0x30] sm:$0xf]
      %v206 = vld [vmem:[%s178 + $0x34] sm:$0xf]
      %v207 = vld [vmem:[%s178 + $0x38] sm:$0xf]
      %v208 = vld [vmem:[%s178 + $0x3c] sm:$0xf]
      %v209 = vld [vmem:[%s178 + $0x40] sm:$0xf]
      %v210 = vld [vmem:[%s178 + $0x44] sm:$0xf]
      %v211 = vld [vmem:[%s178 + $0x48] sm:$0xf]
      %v212 = vld [vmem:[%s178 + $0x4c] sm:$0xf]
      %v213 = vld [vmem:[%s178 + $0x50] sm:$0xf]
      %v214 = vld [vmem:[%s178 + $0x54] sm:$0xf]
      %v215 = vld [vmem:[%s178 + $0x58] sm:$0xf]
      %v216 = vld [vmem:[%s178 + $0x5c] sm:$0xf]
      %v217 = vld [vmem:[%s178 + $0x60] sm:$0xf]
      %v218 = vld [vmem:[%s178 + $0x64] sm:$0xf]
      %v219 = vld [vmem:[%s178 + $0x68] sm:$0xf]
      %v220 = vld [vmem:[%s178 + $0x6c] sm:$0xf]
      %v221 = vld [vmem:[%s178 + $0x70] sm:$0xf]
      %v222 = vld [vmem:[%s178 + $0x74] sm:$0xf]
      %v223 = vld [vmem:[%s178 + $0x78] sm:$0xf]
      %v224 = vld [vmem:[%s178 + $0x7c] sm:$0xf]
      %v225 = vld [vmem:[%s178 + $0x80] sm:$0xf]
      %v226 = vld [vmem:[%s178 + $0x84] sm:$0xf]
      %v227 = vld [vmem:[%s178 + $0x88] sm:$0xf]
      %v228 = vld [vmem:[%s178 + $0x8c] sm:$0xf]
      %v229 = vld [vmem:[%s178 + $0x90] sm:$0xf]
      %v230 = vld [vmem:[%s178 + $0x94] sm:$0xf]
      %v231 = vld [vmem:[%s178 + $0x98] sm:$0xf]
      %v232 = vld [vmem:[%s178 + $0x9c] sm:$0xf]
      %v233 = vld [vmem:[%s178 + $0xa0] sm:$0xf]
      %v234 = vld [vmem:[%s178 + $0xa4] sm:$0xf]
      %v235 = vld [vmem:[%s178 + $0xa8] sm:$0xf]
      %v236 = vld [vmem:[%s178 + $0xac] sm:$0xf]
      %v237 = vld [vmem:[%s178 + $0xb0] sm:$0xf]
      %v238 = vld [vmem:[%s178 + $0xb4] sm:$0xf]
      %v239 = vld [vmem:[%s178 + $0xb8] sm:$0xf]
      %v240 = vld [vmem:[%s178 + $0xbc] sm:$0xf]
      %v241 = vld [vmem:[%s178 + $0xc0] sm:$0xf]
      %v242 = vld [vmem:[%s178 + $0xc4] sm:$0xf]
      %v243 = vld [vmem:[%s178 + $0xc8] sm:$0xf]
      %v244 = vld [vmem:[%s178 + $0xcc] sm:$0xf]
      %v245 = vld [vmem:[%s178 + $0xd0] sm:$0xf]
      %v246 = vld [vmem:[%s178 + $0xd4] sm:$0xf]
      %v247 = vld [vmem:[%s178 + $0xd8] sm:$0xf]
      %v248 = vld [vmem:[%s178 + $0xdc] sm:$0xf]
      %v249 = vld [vmem:[%s178 + $0xe0] sm:$0xf]
      %v250 = vld [vmem:[%s178 + $0xe4] sm:$0xf]
      %v251 = vld [vmem:[%s178 + $0xe8] sm:$0xf]
      %v252 = vld [vmem:[%s178 + $0xec] sm:$0xf]
      %v253 = vld [vmem:[%s178 + $0xf0] sm:$0xf]
      %v254 = vld [vmem:[%s178 + $0xf4] sm:$0xf]
      %v255 = vld [vmem:[%s178 + $0xf8] sm:$0xf]
      %v256 = vld [vmem:[%s178 + $0xfc] sm:$0xf]
      %v257 = vld [vmem:[%s178 + $0x100] sm:$0xf]
      %v258 = vld [vmem:[%s178 + $0x104] sm:$0xf]
      %v259 = vld [vmem:[%s178 + $0x108] sm:$0xf]
      %v260 = vld [vmem:[%s178 + $0x10c] sm:$0xf]
      %v261 = vld [vmem:[%s178 + $0x110] sm:$0xf]
      %v262 = vld [vmem:[%s178 + $0x114] sm:$0xf]
      %v263 = vld [vmem:[%s178 + $0x118] sm:$0xf]
      %v264 = vld [vmem:[%s178 + $0x11c] sm:$0xf]
      %v265 = vld [vmem:[%s178 + $0x120] sm:$0xf]
      %v266 = vld [vmem:[%s178 + $0x124] sm:$0xf]
      %v267 = vld [vmem:[%s178 + $0x128] sm:$0xf]
      %v268 = vld [vmem:[%s178 + $0x12c] sm:$0xf]
      %v269 = vld [vmem:[%s178 + $0x130] sm:$0xf]
      %v270 = vld [vmem:[%s178 + $0x134] sm:$0xf]
      %v271 = vld [vmem:[%s178 + $0x138] sm:$0xf]
      %v272 = vld [vmem:[%s178 + $0x13c] sm:$0xf]
      %v273 = vld [vmem:[%s178 + $0x140] sm:$0xf]
      %v274 = vld [vmem:[%s178 + $0x144] sm:$0xf]
      %v275 = vld [vmem:[%s178 + $0x148] sm:$0xf]
      %v276 = vld [vmem:[%s178 + $0x14c] sm:$0xf]
      %v277 = vld [vmem:[%s178 + $0x150] sm:$0xf]
      %v278 = vld [vmem:[%s178 + $0x154] sm:$0xf]
      %v279 = vld [vmem:[%s178 + $0x158] sm:$0xf]
      %v280 = vld [vmem:[%s178 + $0x15c] sm:$0xf]
      %v281 = vld [vmem:[%s178 + $0x160] sm:$0xf]
      %v282 = vld [vmem:[%s178 + $0x164] sm:$0xf]
      %v283 = vld [vmem:[%s178 + $0x168] sm:$0xf]
      %v284 = vld [vmem:[%s178 + $0x16c] sm:$0xf]
      %v285 = vld [vmem:[%s178 + $0x170] sm:$0xf]
      %v286 = vld [vmem:[%s178 + $0x174] sm:$0xf]
      %v287 = vld [vmem:[%s178 + $0x178] sm:$0xf]
      %v288 = vld [vmem:[%s178 + $0x17c] sm:$0xf]
      %v289 = vld [vmem:[%s178 + $0x180] sm:$0xf]
      %v290 = vld [vmem:[%s178 + $0x184] sm:$0xf]
      %v291 = vld [vmem:[%s178 + $0x188] sm:$0xf]
      %v292 = vld [vmem:[%s178 + $0x18c] sm:$0xf]
      %v293 = vld [vmem:[%s178 + $0x190] sm:$0xf]
      %v294 = vld [vmem:[%s178 + $0x194] sm:$0xf]
      %v295 = vld [vmem:[%s178 + $0x198] sm:$0xf]
      %v296 = vld [vmem:[%s178 + $0x19c] sm:$0xf]
      %v297 = vld [vmem:[%s178 + $0x1a0] sm:$0xf]
      %v298 = vld [vmem:[%s178 + $0x1a4] sm:$0xf]
      %v299 = vld [vmem:[%s178 + $0x1a8] sm:$0xf]
      %v300 = vld [vmem:[%s178 + $0x1ac] sm:$0xf]
      %v301 = vld [vmem:[%s178 + $0x1b0] sm:$0xf]
      %v302 = vld [vmem:[%s178 + $0x1b4] sm:$0xf]
      %v303 = vld [vmem:[%s178 + $0x1b8] sm:$0xf]
      %v304 = vld [vmem:[%s178 + $0x1bc] sm:$0xf]
      %v305 = vld [vmem:[%s178 + $0x1c0] sm:$0xf]
      %v306 = vld [vmem:[%s178 + $0x1c4] sm:$0xf]
      %v307 = vld [vmem:[%s178 + $0x1c8] sm:$0xf]
      %v308 = vld [vmem:[%s178 + $0x1cc] sm:$0xf]
      %v309 = vld [vmem:[%s178 + $0x1d0] sm:$0xf]
      %v310 = vld [vmem:[%s178 + $0x1d4] sm:$0xf]
      %v311 = vld [vmem:[%s178 + $0x1d8] sm:$0xf]
      %v312 = vld [vmem:[%s178 + $0x1dc] sm:$0xf]
      %v313 = vld [vmem:[%s178 + $0x1e0] sm:$0xf]
      %v314 = vld [vmem:[%s178 + $0x1e4] sm:$0xf]
      %v315 = vld [vmem:[%s178 + $0x1e8] sm:$0xf]
      %v316 = vld [vmem:[%s178 + $0x1ec] sm:$0xf]
      %v317 = vld [vmem:[%s178 + $0x1f0] sm:$0xf]
      %v318 = vld [vmem:[%s178 + $0x1f4] sm:$0xf]
      %v319 = vld [vmem:[%s178 + $0x1f8] sm:$0xf]
      %v320 = vld [vmem:[%s178 + $0x1fc] sm:$0xf]
      %v321 = vld [vmem:[%s184] sm:$0xf]
      %v322 = vld [vmem:[%s184 + $0x4] sm:$0xf]
      %v323 = vld [vmem:[%s184 + $0x8] sm:$0xf]
      %v324 = vld [vmem:[%s184 + $0xc] sm:$0xf]
      %v325 = vld [vmem:[%s184 + $0x10] sm:$0xf]
      %v326 = vld [vmem:[%s184 + $0x14] sm:$0xf]
      %v327 = vld [vmem:[%s184 + $0x18] sm:$0xf]
      %v328 = vld [vmem:[%s184 + $0x1c] sm:$0xf]
      %v329 = vld [vmem:[%s184 + $0x20] sm:$0xf]
      %v330 = vld [vmem:[%s184 + $0x24] sm:$0xf]
      %v331 = vld [vmem:[%s184 + $0x28] sm:$0xf]
      %v332 = vld [vmem:[%s184 + $0x2c] sm:$0xf]
      %v333 = vld [vmem:[%s184 + $0x30] sm:$0xf]
      %v334 = vld [vmem:[%s184 + $0x34] sm:$0xf]
      %v335 = vld [vmem:[%s184 + $0x38] sm:$0xf]
      %v336 = vld [vmem:[%s184 + $0x3c] sm:$0xf]
      %v465 = vunpack.c.l.b16 %v193
      %v466 = vunpack.c.l.b16 %v194
      %v467 = vunpack.c.l.b16 %v195
      %v468 = vunpack.c.l.b16 %v196
      %v469 = vunpack.c.l.b16 %v197
      %v470 = vunpack.c.l.b16 %v198
      %v471 = vunpack.c.l.b16 %v199
      %v472 = vunpack.c.l.b16 %v200
      %v473 = vunpack.c.l.b16 %v201
      %v474 = vunpack.c.l.b16 %v202
      %v475 = vunpack.c.l.b16 %v203
      %v476 = vunpack.c.l.b16 %v204
      %v477 = vunpack.c.l.b16 %v205
      %v478 = vunpack.c.l.b16 %v206
      %v479 = vunpack.c.l.b16 %v207
      %v480 = vunpack.c.l.b16 %v208
      %v481 = vunpack.c.l.b16 %v209
      %v482 = vunpack.c.l.b16 %v210
      %v483 = vunpack.c.l.b16 %v211
      %v484 = vunpack.c.l.b16 %v212
      %v485 = vunpack.c.l.b16 %v213
      %v486 = vunpack.c.l.b16 %v214
      %v487 = vunpack.c.l.b16 %v215
      %v488 = vunpack.c.l.b16 %v216
      %v489 = vunpack.c.l.b16 %v217
      %v490 = vunpack.c.l.b16 %v218
      %v491 = vunpack.c.l.b16 %v219
      %v492 = vunpack.c.l.b16 %v220
      %v493 = vunpack.c.l.b16 %v221
      %v494 = vunpack.c.l.b16 %v222
      %v495 = vunpack.c.l.b16 %v223
      %v496 = vunpack.c.l.b16 %v224
      %v497 = vunpack.c.l.b16 %v225
      %v498 = vunpack.c.l.b16 %v226
      %v499 = vunpack.c.l.b16 %v227
      %v500 = vunpack.c.l.b16 %v228
      %v501 = vunpack.c.l.b16 %v229
      %v502 = vunpack.c.l.b16 %v230
      %v503 = vunpack.c.l.b16 %v231
      %v504 = vunpack.c.l.b16 %v232
      %v505 = vunpack.c.l.b16 %v233
      %v506 = vunpack.c.l.b16 %v234
      %v507 = vunpack.c.l.b16 %v235
      %v508 = vunpack.c.l.b16 %v236
      %v509 = vunpack.c.l.b16 %v237
      %v510 = vunpack.c.l.b16 %v238
      %v511 = vunpack.c.l.b16 %v239
      %v512 = vunpack.c.l.b16 %v240
      %v513 = vunpack.c.l.b16 %v241
      %v514 = vunpack.c.l.b16 %v242
      %v515 = vunpack.c.l.b16 %v243
      %v516 = vunpack.c.l.b16 %v244
      %v517 = vunpack.c.l.b16 %v245
      %v518 = vunpack.c.l.b16 %v246
      %v519 = vunpack.c.l.b16 %v247
      %v520 = vunpack.c.l.b16 %v248
      %v521 = vunpack.c.l.b16 %v249
      %v522 = vunpack.c.l.b16 %v250
      %v523 = vunpack.c.l.b16 %v251
      %v524 = vunpack.c.l.b16 %v252
      %v525 = vunpack.c.l.b16 %v253
      %v526 = vunpack.c.l.b16 %v254
      %v527 = vunpack.c.l.b16 %v255
      %v528 = vunpack.c.l.b16 %v256
      %v529 = vunpack.c.l.b16 %v257
      %v530 = vunpack.c.l.b16 %v258
      %v531 = vunpack.c.l.b16 %v259
      %v532 = vunpack.c.l.b16 %v260
      %v533 = vunpack.c.l.b16 %v261
      %v534 = vunpack.c.l.b16 %v262
      %v535 = vunpack.c.l.b16 %v263
      %v536 = vunpack.c.l.b16 %v264
      %v537 = vunpack.c.l.b16 %v265
      %v538 = vunpack.c.l.b16 %v266
      %v539 = vunpack.c.l.b16 %v267
      %v540 = vunpack.c.l.b16 %v268
      %v541 = vunpack.c.l.b16 %v269
      %v542 = vunpack.c.l.b16 %v270
      %v543 = vunpack.c.l.b16 %v271
      %v544 = vunpack.c.l.b16 %v272
      %v545 = vunpack.c.l.b16 %v273
      %v546 = vunpack.c.l.b16 %v274
      %v547 = vunpack.c.l.b16 %v275
      %v548 = vunpack.c.l.b16 %v276
      %v549 = vunpack.c.l.b16 %v277
      %v550 = vunpack.c.l.b16 %v278
      %v551 = vunpack.c.l.b16 %v279
      %v552 = vunpack.c.l.b16 %v280
      %v553 = vunpack.c.l.b16 %v281
      %v554 = vunpack.c.l.b16 %v282
      %v555 = vunpack.c.l.b16 %v283
      %v556 = vunpack.c.l.b16 %v284
      %v557 = vunpack.c.l.b16 %v285
      %v558 = vunpack.c.l.b16 %v286
      %v559 = vunpack.c.l.b16 %v287
      %v560 = vunpack.c.l.b16 %v288
      %v561 = vunpack.c.l.b16 %v289
      %v562 = vunpack.c.l.b16 %v290
      %v563 = vunpack.c.l.b16 %v291
      %v564 = vunpack.c.l.b16 %v292
      %v565 = vunpack.c.l.b16 %v293
      %v566 = vunpack.c.l.b16 %v294
      %v567 = vunpack.c.l.b16 %v295
      %v568 = vunpack.c.l.b16 %v296
      %v569 = vunpack.c.l.b16 %v297
      %v570 = vunpack.c.l.b16 %v298
      %v571 = vunpack.c.l.b16 %v299
      %v572 = vunpack.c.l.b16 %v300
      %v573 = vunpack.c.l.b16 %v301
      %v574 = vunpack.c.l.b16 %v302
      %v575 = vunpack.c.l.b16 %v303
      %v576 = vunpack.c.l.b16 %v304
      %v577 = vunpack.c.l.b16 %v305
      %v578 = vunpack.c.l.b16 %v306
      %v579 = vunpack.c.l.b16 %v307
      %v580 = vunpack.c.l.b16 %v308
      %v581 = vunpack.c.l.b16 %v309
      %v582 = vunpack.c.l.b16 %v310
      %v583 = vunpack.c.l.b16 %v311
      %v584 = vunpack.c.l.b16 %v312
      %v585 = vunpack.c.l.b16 %v313
      %v586 = vunpack.c.l.b16 %v314
      %v587 = vunpack.c.l.b16 %v315
      %v588 = vunpack.c.l.b16 %v316
      %v589 = vunpack.c.l.b16 %v317
      %v590 = vunpack.c.l.b16 %v318
      %v591 = vunpack.c.l.b16 %v319
      %v592 = vunpack.c.l.b16 %v320
      %v593 = vpack.c.b16 %v466, %v465
      %v594 = vpack.c.b16 %v468, %v467
      %v595 = vpack.c.b16 %v470, %v469
      %v596 = vpack.c.b16 %v472, %v471
      %v597 = vpack.c.b16 %v474, %v473
      %v598 = vpack.c.b16 %v476, %v475
      %v599 = vpack.c.b16 %v478, %v477
      %v600 = vpack.c.b16 %v480, %v479
      %v601 = vpack.c.b16 %v482, %v481
      %v602 = vpack.c.b16 %v484, %v483
      %v603 = vpack.c.b16 %v486, %v485
      %v604 = vpack.c.b16 %v488, %v487
      %v605 = vpack.c.b16 %v490, %v489
      %v606 = vpack.c.b16 %v492, %v491
      %v607 = vpack.c.b16 %v494, %v493
      %v608 = vpack.c.b16 %v496, %v495
      %v609 = vpack.c.b16 %v498, %v497
      %v610 = vpack.c.b16 %v500, %v499
      %v611 = vpack.c.b16 %v502, %v501
      %v612 = vpack.c.b16 %v504, %v503
      %v613 = vpack.c.b16 %v506, %v505
      %v614 = vpack.c.b16 %v508, %v507
      %v615 = vpack.c.b16 %v510, %v509
      %v616 = vpack.c.b16 %v512, %v511
      %v617 = vpack.c.b16 %v514, %v513
      %v618 = vpack.c.b16 %v516, %v515
      %v619 = vpack.c.b16 %v518, %v517
      %v620 = vpack.c.b16 %v520, %v519
      %v621 = vpack.c.b16 %v522, %v521
      %v622 = vpack.c.b16 %v524, %v523
      %v623 = vpack.c.b16 %v526, %v525
      %v624 = vpack.c.b16 %v528, %v527
      %v625 = vpack.c.b16 %v530, %v529
      %v626 = vpack.c.b16 %v532, %v531
      %v627 = vpack.c.b16 %v534, %v533
      %v628 = vpack.c.b16 %v536, %v535
      %v629 = vpack.c.b16 %v538, %v537
      %v630 = vpack.c.b16 %v540, %v539
      %v631 = vpack.c.b16 %v542, %v541
      %v632 = vpack.c.b16 %v544, %v543
      %v633 = vpack.c.b16 %v546, %v545
      %v634 = vpack.c.b16 %v548, %v547
      %v635 = vpack.c.b16 %v550, %v549
      %v636 = vpack.c.b16 %v552, %v551
      %v637 = vpack.c.b16 %v554, %v553
      %v638 = vpack.c.b16 %v556, %v555
      %v639 = vpack.c.b16 %v558, %v557
      %v640 = vpack.c.b16 %v560, %v559
      %v641 = vpack.c.b16 %v562, %v561
      %v642 = vpack.c.b16 %v564, %v563
      %v643 = vpack.c.b16 %v566, %v565
      %v644 = vpack.c.b16 %v568, %v567
      %v645 = vpack.c.b16 %v570, %v569
      %v646 = vpack.c.b16 %v572, %v571
      %v647 = vpack.c.b16 %v574, %v573
      %v648 = vpack.c.b16 %v576, %v575
      %v649 = vpack.c.b16 %v578, %v577
      %v650 = vpack.c.b16 %v580, %v579
      %v651 = vpack.c.b16 %v582, %v581
      %v652 = vpack.c.b16 %v584, %v583
      %v653 = vpack.c.b16 %v586, %v585
      %v654 = vpack.c.b16 %v588, %v587
      %v655 = vpack.c.b16 %v590, %v589
      %v656 = vpack.c.b16 %v592, %v591
      %v737 = vunpack.c.l.b16 %v321
      %v738 = vunpack.c.l.b16 %v322
      %v739 = vunpack.c.l.b16 %v323
      %v740 = vunpack.c.l.b16 %v324
      %v741 = vunpack.c.l.b16 %v325
      %v742 = vunpack.c.l.b16 %v326
      %v743 = vunpack.c.l.b16 %v327
      %v744 = vunpack.c.l.b16 %v328
      %v745 = vunpack.c.l.b16 %v329
      %v746 = vunpack.c.l.b16 %v330
      %v747 = vunpack.c.l.b16 %v331
      %v748 = vunpack.c.l.b16 %v332
      %v749 = vunpack.c.l.b16 %v333
      %v750 = vunpack.c.l.b16 %v334
      %v751 = vunpack.c.l.b16 %v335
      %v752 = vunpack.c.l.b16 %v336
      %v753 = vpack.c.b16 %v738, %v737
      %v754 = vpack.c.b16 %v740, %v739
      %v755 = vpack.c.b16 %v742, %v741
      %v756 = vpack.c.b16 %v744, %v743
      %v757 = vpack.c.b16 %v746, %v745
      %v758 = vpack.c.b16 %v748, %v747
      %v759 = vpack.c.b16 %v750, %v749
      %v760 = vpack.c.b16 %v752, %v751
      %769 = vmatprep.subr.bf16.mxu0 0
      %770 = vmatpush1.bf16.msra.mxu0 %v753
      %771 = vmatprep.subr.bf16.mxu0 0
      %772 = vmatpush1.bf16.msra.mxu0 %v754
      %773 = vmatprep.subr.bf16.mxu0 0
      %774 = vmatpush1.bf16.msra.mxu0 %v755
      %775 = vmatprep.subr.bf16.mxu0 0
      %776 = vmatpush1.bf16.msra.mxu0 %v756
      %777 = vmatprep.subr.bf16.mxu0 0
      %778 = vmatpush1.bf16.msra.mxu0 %v757
      %779 = vmatprep.subr.bf16.mxu0 0
      %780 = vmatpush1.bf16.msra.mxu0 %v758
      %781 = vmatprep.subr.bf16.mxu0 0
      %782 = vmatpush1.bf16.msra.mxu0 %v759
      %783 = vmatprep.subr.bf16.mxu0 0
      %784 = vmatpush1.bf16.msra.mxu0 %v760
      %785 = vmatprep.subr.bf16.mxu0 0
      %786 = vmatpush1.bf16.msra.mxu0 0
      %787 = vmatprep.subr.bf16.mxu0 0
      %788 = vmatpush1.bf16.msra.mxu0 0
      %789 = vmatprep.subr.bf16.mxu0 0
      %790 = vmatpush1.bf16.msra.mxu0 0
      %791 = vmatprep.subr.bf16.mxu0 0
      %792 = vmatpush1.bf16.msra.mxu0 0
      %793 = vmatprep.subr.bf16.mxu0 0
      %794 = vmatpush1.bf16.msra.mxu0 0
      %795 = vmatprep.subr.bf16.mxu0 0
      %796 = vmatpush1.bf16.msra.mxu0 0
      %797 = vmatprep.subr.bf16.mxu0 0
      %798 = vmatpush1.bf16.msra.mxu0 0
      %799 = vmatprep.subr.bf16.mxu0 0
      %800 = vmatpush1.bf16.msra.mxu0 0
      %801 = vmatprep.mubr.bf16.mxu0 0
      %802 = vmatmul.mubr.bf16.gmra.mrb[0].mxu0 %v593
      %v803 = vpop.f32.mrb[0].mxu0
      %v804 = vadd.f32 0.0, %v803
      %v805 = vpop.f32.mrb[0].mxu0
      %v806 = vpop.f32.mrb[0].mxu0
      %v807 = vadd.f32 0.0, %v806
      %v808 = vpop.f32.mrb[0].mxu0
      %809 = vmatprep.mubr.bf16.mxu0 0
      %810 = vmatmul.mubr.bf16.gmra.mrb[0].mxu0 %v594
      %v811 = vpop.f32.mrb[0].mxu0
      %v812 = vadd.f32 0.0, %v811
      %v813 = vpop.f32.mrb[0].mxu0
      %v814 = vpop.f32.mrb[0].mxu0
      %v815 = vadd.f32 0.0, %v814
      %v816 = vpop.f32.mrb[0].mxu0
      %817 = vmatprep.mubr.bf16.mxu0 0
      %818 = vmatmul.mubr.bf16.gmra.mrb[0].mxu0 %v595
      %v819 = vpop.f32.mrb[0].mxu0
      %v820 = vadd.f32 0.0, %v819
      %v821 = vpop.f32.mrb[0].mxu0
      %v822 = vpop.f32.mrb[0].mxu0
      %v823 = vadd.f32 0.0, %v822
      %v824 = vpop.f32.mrb[0].mxu0
      %825 = vmatprep.mubr.bf16.mxu0 0
      %826 = vmatmul.mubr.bf16.gmra.mrb[0].mxu0 %v596
      %v827 = vpop.f32.mrb[0].mxu0
      %v828 = vadd.f32 0.0, %v827
      %v829 = vpop.f32.mrb[0].mxu0
      %v830 = vpop.f32.mrb[0].mxu0
      %v831 = vadd.f32 0.0, %v830
      %v832 = vpop.f32.mrb[0].mxu0
      %833 = vmatprep.mubr.bf16.mxu0 0
      %834 = vmatmul.mubr.bf16.gmra.mrb[0].mxu0 %v597
      %v835 = vpop.f32.mrb[0].mxu0
      %v836 = vadd.f32 0.0, %v835
      %v837 = vpop.f32.mrb[0].mxu0
      %v838 = vpop.f32.mrb[0].mxu0
      %v839 = vadd.f32 0.0, %v838
      %v840 = vpop.f32.mrb[0].mxu0
      %841 = vmatprep.mubr.bf16.mxu0 0
      %842 = vmatmul.mubr.bf16.gmra.mrb[0].mxu0 %v598
      %v843 = vpop.f32.mrb[0].mxu0
      %v844 = vadd.f32 0.0, %v843
      %v845 = vpop.f32.mrb[0].mxu0
      %v846 = vpop.f32.mrb[0].mxu0
      %v847 = vadd.f32 0.0, %v846
      %v848 = vpop.f32.mrb[0].mxu0
      %849 = vmatprep.mubr.bf16.mxu0 0
      %850 = vmatmul.mubr.bf16.gmra.mrb[0].mxu0 %v599
      %v851 = vpop.f32.mrb[0].mxu0
      %v852 = vadd.f32 0.0, %v851
      %v853 = vpop.f32.mrb[0].mxu0
      %v854 = vpop.f32.mrb[0].mxu0
      %v855 = vadd.f32 0.0, %v854
      %v856 = vpop.f32.mrb[0].mxu0
      %857 = vmatprep.mubr.bf16.mxu0 0
      %858 = vmatmul.mubr.bf16.gmra.mrb[0].mxu0 %v600
      %v859 = vpop.f32.mrb[0].mxu0
      %v860 = vadd.f32 0.0, %v859
      %v861 = vpop.f32.mrb[0].mxu0
      %v862 = vpop.f32.mrb[0].mxu0
      %v863 = vadd.f32 0.0, %v862
      %v864 = vpop.f32.mrb[0].mxu0
      %865 = vmatprep.mubr.bf16.mxu0 0
      %866 = vmatmul.mubr.bf16.gmra.mrb[0].mxu0 %v601
      %v867 = vpop.f32.mrb[0].mxu0
      %v868 = vadd.f32 0.0, %v867
      %v869 = vpop.f32.mrb[0].mxu0
      %v870 = vpop.f32.mrb[0].mxu0
      %v871 = vadd.f32 0.0, %v870
      %v872 = vpop.f32.mrb[0].mxu0
      %873 = vmatprep.mubr.bf16.mxu0 0
      %874 = vmatmul.mubr.bf16.gmra.mrb[0].mxu0 %v602
      %v875 = vpop.f32.mrb[0].mxu0
      %v876 = vadd.f32 0.0, %v875
      %v877 = vpop.f32.mrb[0].mxu0
      %v878 = vpop.f32.mrb[0].mxu0
      %v879 = vadd.f32 0.0, %v878
      %v880 = vpop.f32.mrb[0].mxu0
      %881 = vmatprep.mubr.bf16.mxu0 0
      %882 = vmatmul.mubr.bf16.gmra.mrb[0].mxu0 %v603
      %v883 = vpop.f32.mrb[0].mxu0
      %v884 = vadd.f32 0.0, %v883
      %v885 = vpop.f32.mrb[0].mxu0
      %v886 = vpop.f32.mrb[0].mxu0
      %v887 = vadd.f32 0.0, %v886
      %v888 = vpop.f32.mrb[0].mxu0
      %889 = vmatprep.mubr.bf16.mxu0 0
      %890 = vmatmul.mubr.bf16.gmra.mrb[0].mxu0 %v604
      %v891 = vpop.f32.mrb[0].mxu0
      %v892 = vadd.f32 0.0, %v891
      %v893 = vpop.f32.mrb[0].mxu0
      %v894 = vpop.f32.mrb[0].mxu0
      %v895 = vadd.f32 0.0, %v894
      %v896 = vpop.f32.mrb[0].mxu0
      %897 = vmatprep.mubr.bf16.mxu0 0
      %898 = vmatmul.mubr.bf16.gmra.mrb[0].mxu0 %v605
      %v899 = vpop.f32.mrb[0].mxu0
      %v900 = vadd.f32 0.0, %v899
      %v901 = vpop.f32.mrb[0].mxu0
      %v902 = vpop.f32.mrb[0].mxu0
      %v903 = vadd.f32 0.0, %v902
      %v904 = vpop.f32.mrb[0].mxu0
      %905 = vmatprep.mubr.bf16.mxu0 0
      %906 = vmatmul.mubr.bf16.gmra.mrb[0].mxu0 %v606
      %v907 = vpop.f32.mrb[0].mxu0
      %v908 = vadd.f32 0.0, %v907
      %v909 = vpop.f32.mrb[0].mxu0
      %v910 = vpop.f32.mrb[0].mxu0
      %v911 = vadd.f32 0.0, %v910
      %v912 = vpop.f32.mrb[0].mxu0
      %913 = vmatprep.mubr.bf16.mxu0 0
      %914 = vmatmul.mubr.bf16.gmra.mrb[0].mxu0 %v607
      %v915 = vpop.f32.mrb[0].mxu0
      %v916 = vadd.f32 0.0, %v915
      %v917 = vpop.f32.mrb[0].mxu0
      %v918 = vpop.f32.mrb[0].mxu0
      %v919 = vadd.f32 0.0, %v918
      %v920 = vpop.f32.mrb[0].mxu0
      %921 = vmatprep.mubr.bf16.mxu0 0
      %922 = vmatmul.mubr.bf16.gmra.mrb[0].mxu0 %v608
      %v923 = vpop.f32.mrb[0].mxu0
      %v924 = vadd.f32 0.0, %v923
      %v925 = vpop.f32.mrb[0].mxu0
      %v926 = vpop.f32.mrb[0].mxu0
      %v927 = vadd.f32 0.0, %v926
      %v928 = vpop.f32.mrb[0].mxu0
      %929 = vmatprep.mubr.bf16.mxu0 0
      %930 = vmatmul.mubr.bf16.gmra.mrb[0].mxu0 %v609
      %v931 = vpop.f32.mrb[0].mxu0
      %v932 = vadd.f32 0.0, %v931
      %v933 = vpop.f32.mrb[0].mxu0
      %v934 = vpop.f32.mrb[0].mxu0
      %v935 = vadd.f32 0.0, %v934
      %v936 = vpop.f32.mrb[0].mxu0
      %937 = vmatprep.mubr.bf16.mxu0 0
      %938 = vmatmul.mubr.bf16.gmra.mrb[0].mxu0 %v610
      %v939 = vpop.f32.mrb[0].mxu0
      %v940 = vadd.f32 0.0, %v939
      %v941 = vpop.f32.mrb[0].mxu0
      %v942 = vpop.f32.mrb[0].mxu0
      %v943 = vadd.f32 0.0, %v942
      %v944 = vpop.f32.mrb[0].mxu0
      %945 = vmatprep.mubr.bf16.mxu0 0
      %946 = vmatmul.mubr.bf16.gmra.mrb[0].mxu0 %v611
      %v947 = vpop.f32.mrb[0].mxu0
      %v948 = vadd.f32 0.0, %v947
      %v949 = vpop.f32.mrb[0].mxu0
      %v950 = vpop.f32.mrb[0].mxu0
      %v951 = vadd.f32 0.0, %v950
      %v952 = vpop.f32.mrb[0].mxu0
      %953 = vmatprep.mubr.bf16.mxu0 0
      %954 = vmatmul.mubr.bf16.gmra.mrb[0].mxu0 %v612
      %v955 = vpop.f32.mrb[0].mxu0
      %v956 = vadd.f32 0.0, %v955
      %v957 = vpop.f32.mrb[0].mxu0
      %v958 = vpop.f32.mrb[0].mxu0
      %v959 = vadd.f32 0.0, %v958
      %v960 = vpop.f32.mrb[0].mxu0
      %961 = vmatprep.mubr.bf16.mxu0 0
      %962 = vmatmul.mubr.bf16.gmra.mrb[0].mxu0 %v613
      %v963 = vpop.f32.mrb[0].mxu0
      %v964 = vadd.f32 0.0, %v963
      %v965 = vpop.f32.mrb[0].mxu0
      %v966 = vpop.f32.mrb[0].mxu0
      %v967 = vadd.f32 0.0, %v966
      %v968 = vpop.f32.mrb[0].mxu0
      %969 = vmatprep.mubr.bf16.mxu0 0
      %970 = vmatmul.mubr.bf16.gmra.mrb[0].mxu0 %v614
      %v971 = vpop.f32.mrb[0].mxu0
      %v972 = vadd.f32 0.0, %v971
      %v973 = vpop.f32.mrb[0].mxu0
      %v974 = vpop.f32.mrb[0].mxu0
      %v975 = vadd.f32 0.0, %v974
      %v976 = vpop.f32.mrb[0].mxu0
      %977 = vmatprep.mubr.bf16.mxu0 0
      %978 = vmatmul.mubr.bf16.gmra.mrb[0].mxu0 %v615
      %v979 = vpop.f32.mrb[0].mxu0
      %v980 = vadd.f32 0.0, %v979
      %v981 = vpop.f32.mrb[0].mxu0
      %v982 = vpop.f32.mrb[0].mxu0
      %v983 = vadd.f32 0.0, %v982
      %v984 = vpop.f32.mrb[0].mxu0
      %985 = vmatprep.mubr.bf16.mxu0 0
      %986 = vmatmul.mubr.bf16.gmra.mrb[0].mxu0 %v616
      %v987 = vpop.f32.mrb[0].mxu0
      %v988 = vadd.f32 0.0, %v987
      %v989 = vpop.f32.mrb[0].mxu0
      %v990 = vpop.f32.mrb[0].mxu0
      %v991 = vadd.f32 0.0, %v990
      %v992 = vpop.f32.mrb[0].mxu0
      %993 = vmatprep.mubr.bf16.mxu0 0
      %994 = vmatmul.mubr.bf16.gmra.mrb[0].mxu0 %v617
      %v995 = vpop.f32.mrb[0].mxu0
      %v996 = vadd.f32 0.0, %v995
      %v997 = vpop.f32.mrb[0].mxu0
      %v998 = vpop.f32.mrb[0].mxu0
      %v999 = vadd.f32 0.0, %v998
      %v1000 = vpop.f32.mrb[0].mxu0
      %1001 = vmatprep.mubr.bf16.mxu0 0
      %1002 = vmatmul.mubr.bf16.gmra.mrb[0].mxu0 %v618
      %v1003 = vpop.f32.mrb[0].mxu0
      %v1004 = vadd.f32 0.0, %v1003
      %v1005 = vpop.f32.mrb[0].mxu0
      %v1006 = vpop.f32.mrb[0].mxu0
      %v1007 = vadd.f32 0.0, %v1006
      %v1008 = vpop.f32.mrb[0].mxu0
      %1009 = vmatprep.mubr.bf16.mxu0 0
      %1010 = vmatmul.mubr.bf16.gmra.mrb[0].mxu0 %v619
      %v1011 = vpop.f32.mrb[0].mxu0
      %v1012 = vadd.f32 0.0, %v1011
      %v1013 = vpop.f32.mrb[0].mxu0
      %v1014 = vpop.f32.mrb[0].mxu0
      %v1015 = vadd.f32 0.0, %v1014
      %v1016 = vpop.f32.mrb[0].mxu0
      %1017 = vmatprep.mubr.bf16.mxu0 0
      %1018 = vmatmul.mubr.bf16.gmra.mrb[0].mxu0 %v620
      %v1019 = vpop.f32.mrb[0].mxu0
      %v1020 = vadd.f32 0.0, %v1019
      %v1021 = vpop.f32.mrb[0].mxu0
      %v1022 = vpop.f32.mrb[0].mxu0
      %v1023 = vadd.f32 0.0, %v1022
      %v1024 = vpop.f32.mrb[0].mxu0
      %1025 = vmatprep.mubr.bf16.mxu0 0
      %1026 = vmatmul.mubr.bf16.gmra.mrb[0].mxu0 %v621
      %v1027 = vpop.f32.mrb[0].mxu0
      %v1028 = vadd.f32 0.0, %v1027
      %v1029 = vpop.f32.mrb[0].mxu0
      %v1030 = vpop.f32.mrb[0].mxu0
      %v1031 = vadd.f32 0.0, %v1030
      %v1032 = vpop.f32.mrb[0].mxu0
      %1033 = vmatprep.mubr.bf16.mxu0 0
      %1034 = vmatmul.mubr.bf16.gmra.mrb[0].mxu0 %v622
      %v1035 = vpop.f32.mrb[0].mxu0
      %v1036 = vadd.f32 0.0, %v1035
      %v1037 = vpop.f32.mrb[0].mxu0
      %v1038 = vpop.f32.mrb[0].mxu0
      %v1039 = vadd.f32 0.0, %v1038
      %v1040 = vpop.f32.mrb[0].mxu0
      %1041 = vmatprep.mubr.bf16.mxu0 0
      %1042 = vmatmul.mubr.bf16.gmra.mrb[0].mxu0 %v623
      %v1043 = vpop.f32.mrb[0].mxu0
      %v1044 = vadd.f32 0.0, %v1043
      %v1045 = vpop.f32.mrb[0].mxu0
      %v1046 = vpop.f32.mrb[0].mxu0
      %v1047 = vadd.f32 0.0, %v1046
      %v1048 = vpop.f32.mrb[0].mxu0
      %1049 = vmatprep.mubr.bf16.mxu0 0
      %1050 = vmatmul.mubr.bf16.gmra.mrb[0].mxu0 %v624
      %v1051 = vpop.f32.mrb[0].mxu0
      %v1052 = vadd.f32 0.0, %v1051
      %v1053 = vpop.f32.mrb[0].mxu0
      %v1054 = vpop.f32.mrb[0].mxu0
      %v1055 = vadd.f32 0.0, %v1054
      %v1056 = vpop.f32.mrb[0].mxu0
      %1057 = vmatprep.mubr.bf16.mxu0 0
      %1058 = vmatmul.mubr.bf16.gmra.mrb[0].mxu0 %v625
      %v1059 = vpop.f32.mrb[0].mxu0
      %v1060 = vadd.f32 0.0, %v1059
      %v1061 = vpop.f32.mrb[0].mxu0
      %v1062 = vpop.f32.mrb[0].mxu0
      %v1063 = vadd.f32 0.0, %v1062
      %v1064 = vpop.f32.mrb[0].mxu0
      %1065 = vmatprep.mubr.bf16.mxu0 0
      %1066 = vmatmul.mubr.bf16.gmra.mrb[0].mxu0 %v626
      %v1067 = vpop.f32.mrb[0].mxu0
      %v1068 = vadd.f32 0.0, %v1067
      %v1069 = vpop.f32.mrb[0].mxu0
      %v1070 = vpop.f32.mrb[0].mxu0
      %v1071 = vadd.f32 0.0, %v1070
      %v1072 = vpop.f32.mrb[0].mxu0
      %1073 = vmatprep.mubr.bf16.mxu0 0
      %1074 = vmatmul.mubr.bf16.gmra.mrb[0].mxu0 %v627
      %v1075 = vpop.f32.mrb[0].mxu0
      %v1076 = vadd.f32 0.0, %v1075
      %v1077 = vpop.f32.mrb[0].mxu0
      %v1078 = vpop.f32.mrb[0].mxu0
      %v1079 = vadd.f32 0.0, %v1078
      %v1080 = vpop.f32.mrb[0].mxu0
      %1081 = vmatprep.mubr.bf16.mxu0 0
      %1082 = vmatmul.mubr.bf16.gmra.mrb[0].mxu0 %v628
      %v1083 = vpop.f32.mrb[0].mxu0
      %v1084 = vadd.f32 0.0, %v1083
      %v1085 = vpop.f32.mrb[0].mxu0
      %v1086 = vpop.f32.mrb[0].mxu0
      %v1087 = vadd.f32 0.0, %v1086
      %v1088 = vpop.f32.mrb[0].mxu0
      %1089 = vmatprep.mubr.bf16.mxu0 0
      %1090 = vmatmul.mubr.bf16.gmra.mrb[0].mxu0 %v629
      %v1091 = vpop.f32.mrb[0].mxu0
      %v1092 = vadd.f32 0.0, %v1091
      %v1093 = vpop.f32.mrb[0].mxu0
      %v1094 = vpop.f32.mrb[0].mxu0
      %v1095 = vadd.f32 0.0, %v1094
      %v1096 = vpop.f32.mrb[0].mxu0
      %1097 = vmatprep.mubr.bf16.mxu0 0
      %1098 = vmatmul.mubr.bf16.gmra.mrb[0].mxu0 %v630
      %v1099 = vpop.f32.mrb[0].mxu0
      %v1100 = vadd.f32 0.0, %v1099
      %v1101 = vpop.f32.mrb[0].mxu0
      %v1102 = vpop.f32.mrb[0].mxu0
      %v1103 = vadd.f32 0.0, %v1102
      %v1104 = vpop.f32.mrb[0].mxu0
      %1105 = vmatprep.mubr.bf16.mxu0 0
      %1106 = vmatmul.mubr.bf16.gmra.mrb[0].mxu0 %v631
      %v1107 = vpop.f32.mrb[0].mxu0
      %v1108 = vadd.f32 0.0, %v1107
      %v1109 = vpop.f32.mrb[0].mxu0
      %v1110 = vpop.f32.mrb[0].mxu0
      %v1111 = vadd.f32 0.0, %v1110
      %v1112 = vpop.f32.mrb[0].mxu0
      %1113 = vmatprep.mubr.bf16.mxu0 0
      %1114 = vmatmul.mubr.bf16.gmra.mrb[0].mxu0 %v632
      %v1115 = vpop.f32.mrb[0].mxu0
      %v1116 = vadd.f32 0.0, %v1115
      %v1117 = vpop.f32.mrb[0].mxu0
      %v1118 = vpop.f32.mrb[0].mxu0
      %v1119 = vadd.f32 0.0, %v1118
      %v1120 = vpop.f32.mrb[0].mxu0
      %1121 = vmatprep.mubr.bf16.mxu0 0
      %1122 = vmatmul.mubr.bf16.gmra.mrb[0].mxu0 %v633
      %v1123 = vpop.f32.mrb[0].mxu0
      %v1124 = vadd.f32 0.0, %v1123
      %v1125 = vpop.f32.mrb[0].mxu0
      %v1126 = vpop.f32.mrb[0].mxu0
      %v1127 = vadd.f32 0.0, %v1126
      %v1128 = vpop.f32.mrb[0].mxu0
      %1129 = vmatprep.mubr.bf16.mxu0 0
      %1130 = vmatmul.mubr.bf16.gmra.mrb[0].mxu0 %v634
      %v1131 = vpop.f32.mrb[0].mxu0
      %v1132 = vadd.f32 0.0, %v1131
      %v1133 = vpop.f32.mrb[0].mxu0
      %v1134 = vpop.f32.mrb[0].mxu0
      %v1135 = vadd.f32 0.0, %v1134
      %v1136 = vpop.f32.mrb[0].mxu0
      %1137 = vmatprep.mubr.bf16.mxu0 0
      %1138 = vmatmul.mubr.bf16.gmra.mrb[0].mxu0 %v635
      %v1139 = vpop.f32.mrb[0].mxu0
      %v1140 = vadd.f32 0.0, %v1139
      %v1141 = vpop.f32.mrb[0].mxu0
      %v1142 = vpop.f32.mrb[0].mxu0
      %v1143 = vadd.f32 0.0, %v1142
      %v1144 = vpop.f32.mrb[0].mxu0
      %1145 = vmatprep.mubr.bf16.mxu0 0
      %1146 = vmatmul.mubr.bf16.gmra.mrb[0].mxu0 %v636
      %v1147 = vpop.f32.mrb[0].mxu0
      %v1148 = vadd.f32 0.0, %v1147
      %v1149 = vpop.f32.mrb[0].mxu0
      %v1150 = vpop.f32.mrb[0].mxu0
      %v1151 = vadd.f32 0.0, %v1150
      %v1152 = vpop.f32.mrb[0].mxu0
      %1153 = vmatprep.mubr.bf16.mxu0 0
      %1154 = vmatmul.mubr.bf16.gmra.mrb[0].mxu0 %v637
      %v1155 = vpop.f32.mrb[0].mxu0
      %v1156 = vadd.f32 0.0, %v1155
      %v1157 = vpop.f32.mrb[0].mxu0
      %v1158 = vpop.f32.mrb[0].mxu0
      %v1159 = vadd.f32 0.0, %v1158
      %v1160 = vpop.f32.mrb[0].mxu0
      %1161 = vmatprep.mubr.bf16.mxu0 0
      %1162 = vmatmul.mubr.bf16.gmra.mrb[0].mxu0 %v638
      %v1163 = vpop.f32.mrb[0].mxu0
      %v1164 = vadd.f32 0.0, %v1163
      %v1165 = vpop.f32.mrb[0].mxu0
      %v1166 = vpop.f32.mrb[0].mxu0
      %v1167 = vadd.f32 0.0, %v1166
      %v1168 = vpop.f32.mrb[0].mxu0
      %1169 = vmatprep.mubr.bf16.mxu0 0
      %1170 = vmatmul.mubr.bf16.gmra.mrb[0].mxu0 %v639
      %v1171 = vpop.f32.mrb[0].mxu0
      %v1172 = vadd.f32 0.0, %v1171
      %v1173 = vpop.f32.mrb[0].mxu0
      %v1174 = vpop.f32.mrb[0].mxu0
      %v1175 = vadd.f32 0.0, %v1174
      %v1176 = vpop.f32.mrb[0].mxu0
      %1177 = vmatprep.mubr.bf16.mxu0 0
      %1178 = vmatmul.mubr.bf16.gmra.mrb[0].mxu0 %v640
      %v1179 = vpop.f32.mrb[0].mxu0
      %v1180 = vadd.f32 0.0, %v1179
      %v1181 = vpop.f32.mrb[0].mxu0
      %v1182 = vpop.f32.mrb[0].mxu0
      %v1183 = vadd.f32 0.0, %v1182
      %v1184 = vpop.f32.mrb[0].mxu0
      %1185 = vmatprep.mubr.bf16.mxu0 0
      %1186 = vmatmul.mubr.bf16.gmra.mrb[0].mxu0 %v641
      %v1187 = vpop.f32.mrb[0].mxu0
      %v1188 = vadd.f32 0.0, %v1187
      %v1189 = vpop.f32.mrb[0].mxu0
      %v1190 = vpop.f32.mrb[0].mxu0
      %v1191 = vadd.f32 0.0, %v1190
      %v1192 = vpop.f32.mrb[0].mxu0
      %1193 = vmatprep.mubr.bf16.mxu0 0
      %1194 = vmatmul.mubr.bf16.gmra.mrb[0].mxu0 %v642
      %v1195 = vpop.f32.mrb[0].mxu0
      %v1196 = vadd.f32 0.0, %v1195
      %v1197 = vpop.f32.mrb[0].mxu0
      %v1198 = vpop.f32.mrb[0].mxu0
      %v1199 = vadd.f32 0.0, %v1198
      %v1200 = vpop.f32.mrb[0].mxu0
      %1201 = vmatprep.mubr.bf16.mxu0 0
      %1202 = vmatmul.mubr.bf16.gmra.mrb[0].mxu0 %v643
      %v1203 = vpop.f32.mrb[0].mxu0
      %v1204 = vadd.f32 0.0, %v1203
      %v1205 = vpop.f32.mrb[0].mxu0
      %v1206 = vpop.f32.mrb[0].mxu0
      %v1207 = vadd.f32 0.0, %v1206
      %v1208 = vpop.f32.mrb[0].mxu0
      %1209 = vmatprep.mubr.bf16.mxu0 0
      %1210 = vmatmul.mubr.bf16.gmra.mrb[0].mxu0 %v644
      %v1211 = vpop.f32.mrb[0].mxu0
      %v1212 = vadd.f32 0.0, %v1211
      %v1213 = vpop.f32.mrb[0].mxu0
      %v1214 = vpop.f32.mrb[0].mxu0
      %v1215 = vadd.f32 0.0, %v1214
      %v1216 = vpop.f32.mrb[0].mxu0
      %1217 = vmatprep.mubr.bf16.mxu0 0
      %1218 = vmatmul.mubr.bf16.gmra.mrb[0].mxu0 %v645
      %v1219 = vpop.f32.mrb[0].mxu0
      %v1220 = vadd.f32 0.0, %v1219
      %v1221 = vpop.f32.mrb[0].mxu0
      %v1222 = vpop.f32.mrb[0].mxu0
      %v1223 = vadd.f32 0.0, %v1222
      %v1224 = vpop.f32.mrb[0].mxu0
      %1225 = vmatprep.mubr.bf16.mxu0 0
      %1226 = vmatmul.mubr.bf16.gmra.mrb[0].mxu0 %v646
      %v1227 = vpop.f32.mrb[0].mxu0
      %v1228 = vadd.f32 0.0, %v1227
      %v1229 = vpop.f32.mrb[0].mxu0
      %v1230 = vpop.f32.mrb[0].mxu0
      %v1231 = vadd.f32 0.0, %v1230
      %v1232 = vpop.f32.mrb[0].mxu0
      %1233 = vmatprep.mubr.bf16.mxu0 0
      %1234 = vmatmul.mubr.bf16.gmra.mrb[0].mxu0 %v647
      %v1235 = vpop.f32.mrb[0].mxu0
      %v1236 = vadd.f32 0.0, %v1235
      %v1237 = vpop.f32.mrb[0].mxu0
      %v1238 = vpop.f32.mrb[0].mxu0
      %v1239 = vadd.f32 0.0, %v1238
      %v1240 = vpop.f32.mrb[0].mxu0
      %1241 = vmatprep.mubr.bf16.mxu0 0
      %1242 = vmatmul.mubr.bf16.gmra.mrb[0].mxu0 %v648
      %v1243 = vpop.f32.mrb[0].mxu0
      %v1244 = vadd.f32 0.0, %v1243
      %v1245 = vpop.f32.mrb[0].mxu0
      %v1246 = vpop.f32.mrb[0].mxu0
      %v1247 = vadd.f32 0.0, %v1246
      %v1248 = vpop.f32.mrb[0].mxu0
      %1249 = vmatprep.mubr.bf16.mxu0 0
      %1250 = vmatmul.mubr.bf16.gmra.mrb[0].mxu0 %v649
      %v1251 = vpop.f32.mrb[0].mxu0
      %v1252 = vadd.f32 0.0, %v1251
      %v1253 = vpop.f32.mrb[0].mxu0
      %v1254 = vpop.f32.mrb[0].mxu0
      %v1255 = vadd.f32 0.0, %v1254
      %v1256 = vpop.f32.mrb[0].mxu0
      %1257 = vmatprep.mubr.bf16.mxu0 0
      %1258 = vmatmul.mubr.bf16.gmra.mrb[0].mxu0 %v650
      %v1259 = vpop.f32.mrb[0].mxu0
      %v1260 = vadd.f32 0.0, %v1259
      %v1261 = vpop.f32.mrb[0].mxu0
      %v1262 = vpop.f32.mrb[0].mxu0
      %v1263 = vadd.f32 0.0, %v1262
      %v1264 = vpop.f32.mrb[0].mxu0
      %1265 = vmatprep.mubr.bf16.mxu0 0
      %1266 = vmatmul.mubr.bf16.gmra.mrb[0].mxu0 %v651
      %v1267 = vpop.f32.mrb[0].mxu0
      %v1268 = vadd.f32 0.0, %v1267
      %v1269 = vpop.f32.mrb[0].mxu0
      %v1270 = vpop.f32.mrb[0].mxu0
      %v1271 = vadd.f32 0.0, %v1270
      %v1272 = vpop.f32.mrb[0].mxu0
      %1273 = vmatprep.mubr.bf16.mxu0 0
      %1274 = vmatmul.mubr.bf16.gmra.mrb[0].mxu0 %v652
      %v1275 = vpop.f32.mrb[0].mxu0
      %v1276 = vadd.f32 0.0, %v1275
      %v1277 = vpop.f32.mrb[0].mxu0
      %v1278 = vpop.f32.mrb[0].mxu0
      %v1279 = vadd.f32 0.0, %v1278
      %v1280 = vpop.f32.mrb[0].mxu0
      %1281 = vmatprep.mubr.bf16.mxu0 0
      %1282 = vmatmul.mubr.bf16.gmra.mrb[0].mxu0 %v653
      %v1283 = vpop.f32.mrb[0].mxu0
      %v1284 = vadd.f32 0.0, %v1283
      %v1285 = vpop.f32.mrb[0].mxu0
      %v1286 = vpop.f32.mrb[0].mxu0
      %v1287 = vadd.f32 0.0, %v1286
      %v1288 = vpop.f32.mrb[0].mxu0
      %1289 = vmatprep.mubr.bf16.mxu0 0
      %1290 = vmatmul.mubr.bf16.gmra.mrb[0].mxu0 %v654
      %v1291 = vpop.f32.mrb[0].mxu0
      %v1292 = vadd.f32 0.0, %v1291
      %v1293 = vpop.f32.mrb[0].mxu0
      %v1294 = vpop.f32.mrb[0].mxu0
      %v1295 = vadd.f32 0.0, %v1294
      %v1296 = vpop.f32.mrb[0].mxu0
      %1297 = vmatprep.mubr.bf16.mxu0 0
      %1298 = vmatmul.mubr.bf16.gmra.mrb[0].mxu0 %v655
      %v1299 = vpop.f32.mrb[0].mxu0
      %v1300 = vadd.f32 0.0, %v1299
      %v1301 = vpop.f32.mrb[0].mxu0
      %v1302 = vpop.f32.mrb[0].mxu0
      %v1303 = vadd.f32 0.0, %v1302
      %v1304 = vpop.f32.mrb[0].mxu0
      %1305 = vmatprep.mubr.bf16.mxu0 0
      %1306 = vmatmul.mubr.bf16.gmra.mrb[0].mxu0 %v656
      %v1307 = vpop.f32.mrb[0].mxu0
      %v1308 = vadd.f32 0.0, %v1307
      %v1309 = vpop.f32.mrb[0].mxu0
      %v1310 = vpop.f32.mrb[0].mxu0
      %v1311 = vadd.f32 0.0, %v1310
      %v1312 = vpop.f32.mrb[0].mxu0
      %1313 = vdwg.mxu0
      %vm1314 = vcmp.gt.f32.partialorder %v804, 0.0
      %vm1315 = vcmp.gt.f32.partialorder %v807, 0.0
      %vm1316 = vcmp.gt.f32.partialorder %v812, 0.0
      %vm1317 = vcmp.gt.f32.partialorder %v815, 0.0
      %vm1318 = vcmp.gt.f32.partialorder %v820, 0.0
      %vm1319 = vcmp.gt.f32.partialorder %v823, 0.0
      %vm1320 = vcmp.gt.f32.partialorder %v828, 0.0
      %vm1321 = vcmp.gt.f32.partialorder %v831, 0.0
      %vm1322 = vcmp.gt.f32.partialorder %v836, 0.0
      %vm1323 = vcmp.gt.f32.partialorder %v839, 0.0
      %vm1324 = vcmp.gt.f32.partialorder %v844, 0.0
      %vm1325 = vcmp.gt.f32.partialorder %v847, 0.0
      %vm1326 = vcmp.gt.f32.partialorder %v852, 0.0
      %vm1327 = vcmp.gt.f32.partialorder %v855, 0.0
      %vm1328 = vcmp.gt.f32.partialorder %v860, 0.0
      %vm1329 = vcmp.gt.f32.partialorder %v863, 0.0
      %vm1330 = vcmp.gt.f32.partialorder %v868, 0.0
      %vm1331 = vcmp.gt.f32.partialorder %v871, 0.0
      %vm1332 = vcmp.gt.f32.partialorder %v876, 0.0
      %vm1333 = vcmp.gt.f32.partialorder %v879, 0.0
      %vm1334 = vcmp.gt.f32.partialorder %v884, 0.0
      %vm1335 = vcmp.gt.f32.partialorder %v887, 0.0
      %vm1336 = vcmp.gt.f32.partialorder %v892, 0.0
      %vm1337 = vcmp.gt.f32.partialorder %v895, 0.0
      %vm1338 = vcmp.gt.f32.partialorder %v900, 0.0
      %vm1339 = vcmp.gt.f32.partialorder %v903, 0.0
      %vm1340 = vcmp.gt.f32.partialorder %v908, 0.0
      %vm1341 = vcmp.gt.f32.partialorder %v911, 0.0
      %vm1342 = vcmp.gt.f32.partialorder %v916, 0.0
      %vm1343 = vcmp.gt.f32.partialorder %v919, 0.0
      %vm1344 = vcmp.gt.f32.partialorder %v924, 0.0
      %vm1345 = vcmp.gt.f32.partialorder %v927, 0.0
      %vm1346 = vcmp.gt.f32.partialorder %v932, 0.0
      %vm1347 = vcmp.gt.f32.partialorder %v935, 0.0
      %vm1348 = vcmp.gt.f32.partialorder %v940, 0.0
      %vm1349 = vcmp.gt.f32.partialorder %v943, 0.0
      %vm1350 = vcmp.gt.f32.partialorder %v948, 0.0
      %vm1351 = vcmp.gt.f32.partialorder %v951, 0.0
      %vm1352 = vcmp.gt.f32.partialorder %v956, 0.0
      %vm1353 = vcmp.gt.f32.partialorder %v959, 0.0
      %vm1354 = vcmp.gt.f32.partialorder %v964, 0.0
      %vm1355 = vcmp.gt.f32.partialorder %v967, 0.0
      %vm1356 = vcmp.gt.f32.partialorder %v972, 0.0
      %vm1357 = vcmp.gt.f32.partialorder %v975, 0.0
      %vm1358 = vcmp.gt.f32.partialorder %v980, 0.0
      %vm1359 = vcmp.gt.f32.partialorder %v983, 0.0
      %vm1360 = vcmp.gt.f32.partialorder %v988, 0.0
      %vm1361 = vcmp.gt.f32.partialorder %v991, 0.0
      %vm1362 = vcmp.gt.f32.partialorder %v996, 0.0
      %vm1363 = vcmp.gt.f32.partialorder %v999, 0.0
      %vm1364 = vcmp.gt.f32.partialorder %v1004, 0.0
      %vm1365 = vcmp.gt.f32.partialorder %v1007, 0.0
      %vm1366 = vcmp.gt.f32.partialorder %v1012, 0.0
      %vm1367 = vcmp.gt.f32.partialorder %v1015, 0.0
      %vm1368 = vcmp.gt.f32.partialorder %v1020, 0.0
      %vm1369 = vcmp.gt.f32.partialorder %v1023, 0.0
      %vm1370 = vcmp.gt.f32.partialorder %v1028, 0.0
      %vm1371 = vcmp.gt.f32.partialorder %v1031, 0.0
      %vm1372 = vcmp.gt.f32.partialorder %v1036, 0.0
      %vm1373 = vcmp.gt.f32.partialorder %v1039, 0.0
      %vm1374 = vcmp.gt.f32.partialorder %v1044, 0.0
      %vm1375 = vcmp.gt.f32.partialorder %v1047, 0.0
      %vm1376 = vcmp.gt.f32.partialorder %v1052, 0.0
      %vm1377 = vcmp.gt.f32.partialorder %v1055, 0.0
      %vm1378 = vcmp.gt.f32.partialorder %v1060, 0.0
      %vm1379 = vcmp.gt.f32.partialorder %v1063, 0.0
      %vm1380 = vcmp.gt.f32.partialorder %v1068, 0.0
      %vm1381 = vcmp.gt.f32.partialorder %v1071, 0.0
      %vm1382 = vcmp.gt.f32.partialorder %v1076, 0.0
      %vm1383 = vcmp.gt.f32.partialorder %v1079, 0.0
      %vm1384 = vcmp.gt.f32.partialorder %v1084, 0.0
      %vm1385 = vcmp.gt.f32.partialorder %v1087, 0.0
      %vm1386 = vcmp.gt.f32.partialorder %v1092, 0.0
      %vm1387 = vcmp.gt.f32.partialorder %v1095, 0.0
      %vm1388 = vcmp.gt.f32.partialorder %v1100, 0.0
      %vm1389 = vcmp.gt.f32.partialorder %v1103, 0.0
      %vm1390 = vcmp.gt.f32.partialorder %v1108, 0.0
      %vm1391 = vcmp.gt.f32.partialorder %v1111, 0.0
      %vm1392 = vcmp.gt.f32.partialorder %v1116, 0.0
      %vm1393 = vcmp.gt.f32.partialorder %v1119, 0.0
      %vm1394 = vcmp.gt.f32.partialorder %v1124, 0.0
      %vm1395 = vcmp.gt.f32.partialorder %v1127, 0.0
      %vm1396 = vcmp.gt.f32.partialorder %v1132, 0.0
      %vm1397 = vcmp.gt.f32.partialorder %v1135, 0.0
      %vm1398 = vcmp.gt.f32.partialorder %v1140, 0.0
      %vm1399 = vcmp.gt.f32.partialorder %v1143, 0.0
      %vm1400 = vcmp.gt.f32.partialorder %v1148, 0.0
      %vm1401 = vcmp.gt.f32.partialorder %v1151, 0.0
      %vm1402 = vcmp.gt.f32.partialorder %v1156, 0.0
      %vm1403 = vcmp.gt.f32.partialorder %v1159, 0.0
      %vm1404 = vcmp.gt.f32.partialorder %v1164, 0.0
      %vm1405 = vcmp.gt.f32.partialorder %v1167, 0.0
      %vm1406 = vcmp.gt.f32.partialorder %v1172, 0.0
      %vm1407 = vcmp.gt.f32.partialorder %v1175, 0.0
      %vm1408 = vcmp.gt.f32.partialorder %v1180, 0.0
      %vm1409 = vcmp.gt.f32.partialorder %v1183, 0.0
      %vm1410 = vcmp.gt.f32.partialorder %v1188, 0.0
      %vm1411 = vcmp.gt.f32.partialorder %v1191, 0.0
      %vm1412 = vcmp.gt.f32.partialorder %v1196, 0.0
      %vm1413 = vcmp.gt.f32.partialorder %v1199, 0.0
      %vm1414 = vcmp.gt.f32.partialorder %v1204, 0.0
      %vm1415 = vcmp.gt.f32.partialorder %v1207, 0.0
      %vm1416 = vcmp.gt.f32.partialorder %v1212, 0.0
      %vm1417 = vcmp.gt.f32.partialorder %v1215, 0.0
      %vm1418 = vcmp.gt.f32.partialorder %v1220, 0.0
      %vm1419 = vcmp.gt.f32.partialorder %v1223, 0.0
      %vm1420 = vcmp.gt.f32.partialorder %v1228, 0.0
      %vm1421 = vcmp.gt.f32.partialorder %v1231, 0.0
      %vm1422 = vcmp.gt.f32.partialorder %v1236, 0.0
      %vm1423 = vcmp.gt.f32.partialorder %v1239, 0.0
      %vm1424 = vcmp.gt.f32.partialorder %v1244, 0.0
      %vm1425 = vcmp.gt.f32.partialorder %v1247, 0.0
      %vm1426 = vcmp.gt.f32.partialorder %v1252, 0.0
      %vm1427 = vcmp.gt.f32.partialorder %v1255, 0.0
      %vm1428 = vcmp.gt.f32.partialorder %v1260, 0.0
      %vm1429 = vcmp.gt.f32.partialorder %v1263, 0.0
      %vm1430 = vcmp.gt.f32.partialorder %v1268, 0.0
      %vm1431 = vcmp.gt.f32.partialorder %v1271, 0.0
      %vm1432 = vcmp.gt.f32.partialorder %v1276, 0.0
      %vm1433 = vcmp.gt.f32.partialorder %v1279, 0.0
      %vm1434 = vcmp.gt.f32.partialorder %v1284, 0.0
      %vm1435 = vcmp.gt.f32.partialorder %v1287, 0.0
      %vm1436 = vcmp.gt.f32.partialorder %v1292, 0.0
      %vm1437 = vcmp.gt.f32.partialorder %v1295, 0.0
      %vm1438 = vcmp.gt.f32.partialorder %v1300, 0.0
      %vm1439 = vcmp.gt.f32.partialorder %v1303, 0.0
      %vm1440 = vcmp.gt.f32.partialorder %v1308, 0.0
      %vm1441 = vcmp.gt.f32.partialorder %v1311, 0.0
      %v1442 = vmul.f32 %v804, 0.2
      %v1443 = vmul.f32 %v807, 0.2
      %v1444 = vmul.f32 %v812, 0.2
      %v1445 = vmul.f32 %v815, 0.2
      %v1446 = vmul.f32 %v820, 0.2
      %v1447 = vmul.f32 %v823, 0.2
      %v1448 = vmul.f32 %v828, 0.2
      %v1449 = vmul.f32 %v831, 0.2
      %v1450 = vmul.f32 %v836, 0.2
      %v1451 = vmul.f32 %v839, 0.2
      %v1452 = vmul.f32 %v844, 0.2
      %v1453 = vmul.f32 %v847, 0.2
      %v1454 = vmul.f32 %v852, 0.2
      %v1455 = vmul.f32 %v855, 0.2
      %v1456 = vmul.f32 %v860, 0.2
      %v1457 = vmul.f32 %v863, 0.2
      %v1458 = vmul.f32 %v868, 0.2
      %v1459 = vmul.f32 %v871, 0.2
      %v1460 = vmul.f32 %v876, 0.2
      %v1461 = vmul.f32 %v879, 0.2
      %v1462 = vmul.f32 %v884, 0.2
      %v1463 = vmul.f32 %v887, 0.2
      %v1464 = vmul.f32 %v892, 0.2
      %v1465 = vmul.f32 %v895, 0.2
      %v1466 = vmul.f32 %v900, 0.2
      %v1467 = vmul.f32 %v903, 0.2
      %v1468 = vmul.f32 %v908, 0.2
      %v1469 = vmul.f32 %v911, 0.2
      %v1470 = vmul.f32 %v916, 0.2
      %v1471 = vmul.f32 %v919, 0.2
      %v1472 = vmul.f32 %v924, 0.2
      %v1473 = vmul.f32 %v927, 0.2
      %v1474 = vmul.f32 %v932, 0.2
      %v1475 = vmul.f32 %v935, 0.2
      %v1476 = vmul.f32 %v940, 0.2
      %v1477 = vmul.f32 %v943, 0.2
      %v1478 = vmul.f32 %v948, 0.2
      %v1479 = vmul.f32 %v951, 0.2
      %v1480 = vmul.f32 %v956, 0.2
      %v1481 = vmul.f32 %v959, 0.2
      %v1482 = vmul.f32 %v964, 0.2
      %v1483 = vmul.f32 %v967, 0.2
      %v1484 = vmul.f32 %v972, 0.2
      %v1485 = vmul.f32 %v975, 0.2
      %v1486 = vmul.f32 %v980, 0.2
      %v1487 = vmul.f32 %v983, 0.2
      %v1488 = vmul.f32 %v988, 0.2
      %v1489 = vmul.f32 %v991, 0.2
      %v1490 = vmul.f32 %v996, 0.2
      %v1491 = vmul.f32 %v999, 0.2
      %v1492 = vmul.f32 %v1004, 0.2
      %v1493 = vmul.f32 %v1007, 0.2
      %v1494 = vmul.f32 %v1012, 0.2
      %v1495 = vmul.f32 %v1015, 0.2
      %v1496 = vmul.f32 %v1020, 0.2
      %v1497 = vmul.f32 %v1023, 0.2
      %v1498 = vmul.f32 %v1028, 0.2
      %v1499 = vmul.f32 %v1031, 0.2
      %v1500 = vmul.f32 %v1036, 0.2
      %v1501 = vmul.f32 %v1039, 0.2
      %v1502 = vmul.f32 %v1044, 0.2
      %v1503 = vmul.f32 %v1047, 0.2
      %v1504 = vmul.f32 %v1052, 0.2
      %v1505 = vmul.f32 %v1055, 0.2
      %v1506 = vmul.f32 %v1060, 0.2
      %v1507 = vmul.f32 %v1063, 0.2
      %v1508 = vmul.f32 %v1068, 0.2
      %v1509 = vmul.f32 %v1071, 0.2
      %v1510 = vmul.f32 %v1076, 0.2
      %v1511 = vmul.f32 %v1079, 0.2
      %v1512 = vmul.f32 %v1084, 0.2
      %v1513 = vmul.f32 %v1087, 0.2
      %v1514 = vmul.f32 %v1092, 0.2
      %v1515 = vmul.f32 %v1095, 0.2
      %v1516 = vmul.f32 %v1100, 0.2
      %v1517 = vmul.f32 %v1103, 0.2
      %v1518 = vmul.f32 %v1108, 0.2
      %v1519 = vmul.f32 %v1111, 0.2
      %v1520 = vmul.f32 %v1116, 0.2
      %v1521 = vmul.f32 %v1119, 0.2
      %v1522 = vmul.f32 %v1124, 0.2
      %v1523 = vmul.f32 %v1127, 0.2
      %v1524 = vmul.f32 %v1132, 0.2
      %v1525 = vmul.f32 %v1135, 0.2
      %v1526 = vmul.f32 %v1140, 0.2
      %v1527 = vmul.f32 %v1143, 0.2
      %v1528 = vmul.f32 %v1148, 0.2
      %v1529 = vmul.f32 %v1151, 0.2
      %v1530 = vmul.f32 %v1156, 0.2
      %v1531 = vmul.f32 %v1159, 0.2
      %v1532 = vmul.f32 %v1164, 0.2
      %v1533 = vmul.f32 %v1167, 0.2
      %v1534 = vmul.f32 %v1172, 0.2
      %v1535 = vmul.f32 %v1175, 0.2
      %v1536 = vmul.f32 %v1180, 0.2
      %v1537 = vmul.f32 %v1183, 0.2
      %v1538 = vmul.f32 %v1188, 0.2
      %v1539 = vmul.f32 %v1191, 0.2
      %v1540 = vmul.f32 %v1196, 0.2
      %v1541 = vmul.f32 %v1199, 0.2
      %v1542 = vmul.f32 %v1204, 0.2
      %v1543 = vmul.f32 %v1207, 0.2
      %v1544 = vmul.f32 %v1212, 0.2
      %v1545 = vmul.f32 %v1215, 0.2
      %v1546 = vmul.f32 %v1220, 0.2
      %v1547 = vmul.f32 %v1223, 0.2
      %v1548 = vmul.f32 %v1228, 0.2
      %v1549 = vmul.f32 %v1231, 0.2
      %v1550 = vmul.f32 %v1236, 0.2
      %v1551 = vmul.f32 %v1239, 0.2
      %v1552 = vmul.f32 %v1244, 0.2
      %v1553 = vmul.f32 %v1247, 0.2
      %v1554 = vmul.f32 %v1252, 0.2
      %v1555 = vmul.f32 %v1255, 0.2
      %v1556 = vmul.f32 %v1260, 0.2
      %v1557 = vmul.f32 %v1263, 0.2
      %v1558 = vmul.f32 %v1268, 0.2
      %v1559 = vmul.f32 %v1271, 0.2
      %v1560 = vmul.f32 %v1276, 0.2
      %v1561 = vmul.f32 %v1279, 0.2
      %v1562 = vmul.f32 %v1284, 0.2
      %v1563 = vmul.f32 %v1287, 0.2
      %v1564 = vmul.f32 %v1292, 0.2
      %v1565 = vmul.f32 %v1295, 0.2
      %v1566 = vmul.f32 %v1300, 0.2
      %v1567 = vmul.f32 %v1303, 0.2
      %v1568 = vmul.f32 %v1308, 0.2
      %v1569 = vmul.f32 %v1311, 0.2
      %v1570 = vsel %vm1314, %v804, %v1442
      %v1571 = vsel %vm1315, %v807, %v1443
      %v1572 = vsel %vm1316, %v812, %v1444
      %v1573 = vsel %vm1317, %v815, %v1445
      %v1574 = vsel %vm1318, %v820, %v1446
      %v1575 = vsel %vm1319, %v823, %v1447
      %v1576 = vsel %vm1320, %v828, %v1448
      %v1577 = vsel %vm1321, %v831, %v1449
      %v1578 = vsel %vm1322, %v836, %v1450
      %v1579 = vsel %vm1323, %v839, %v1451
      %v1580 = vsel %vm1324, %v844, %v1452
      %v1581 = vsel %vm1325, %v847, %v1453
      %v1582 = vsel %vm1326, %v852, %v1454
      %v1583 = vsel %vm1327, %v855, %v1455
      %v1584 = vsel %vm1328, %v860, %v1456
      %v1585 = vsel %vm1329, %v863, %v1457
      %v1586 = vsel %vm1330, %v868, %v1458
      %v1587 = vsel %vm1331, %v871, %v1459
      %v1588 = vsel %vm1332, %v876, %v1460
      %v1589 = vsel %vm1333, %v879, %v1461
      %v1590 = vsel %vm1334, %v884, %v1462
      %v1591 = vsel %vm1335, %v887, %v1463
      %v1592 = vsel %vm1336, %v892, %v1464
      %v1593 = vsel %vm1337, %v895, %v1465
      %v1594 = vsel %vm1338, %v900, %v1466
      %v1595 = vsel %vm1339, %v903, %v1467
      %v1596 = vsel %vm1340, %v908, %v1468
      %v1597 = vsel %vm1341, %v911, %v1469
      %v1598 = vsel %vm1342, %v916, %v1470
      %v1599 = vsel %vm1343, %v919, %v1471
      %v1600 = vsel %vm1344, %v924, %v1472
      %v1601 = vsel %vm1345, %v927, %v1473
      %v1602 = vsel %vm1346, %v932, %v1474
      %v1603 = vsel %vm1347, %v935, %v1475
      %v1604 = vsel %vm1348, %v940, %v1476
      %v1605 = vsel %vm1349, %v943, %v1477
      %v1606 = vsel %vm1350, %v948, %v1478
      %v1607 = vsel %vm1351, %v951, %v1479
      %v1608 = vsel %vm1352, %v956, %v1480
      %v1609 = vsel %vm1353, %v959, %v1481
      %v1610 = vsel %vm1354, %v964, %v1482
      %v1611 = vsel %vm1355, %v967, %v1483
      %v1612 = vsel %vm1356, %v972, %v1484
      %v1613 = vsel %vm1357, %v975, %v1485
      %v1614 = vsel %vm1358, %v980, %v1486
      %v1615 = vsel %vm1359, %v983, %v1487
      %v1616 = vsel %vm1360, %v988, %v1488
      %v1617 = vsel %vm1361, %v991, %v1489
      %v1618 = vsel %vm1362, %v996, %v1490
      %v1619 = vsel %vm1363, %v999, %v1491
      %v1620 = vsel %vm1364, %v1004, %v1492
      %v1621 = vsel %vm1365, %v1007, %v1493
      %v1622 = vsel %vm1366, %v1012, %v1494
      %v1623 = vsel %vm1367, %v1015, %v1495
      %v1624 = vsel %vm1368, %v1020, %v1496
      %v1625 = vsel %vm1369, %v1023, %v1497
      %v1626 = vsel %vm1370, %v1028, %v1498
      %v1627 = vsel %vm1371, %v1031, %v1499
      %v1628 = vsel %vm1372, %v1036, %v1500
      %v1629 = vsel %vm1373, %v1039, %v1501
      %v1630 = vsel %vm1374, %v1044, %v1502
      %v1631 = vsel %vm1375, %v1047, %v1503
      %v1632 = vsel %vm1376, %v1052, %v1504
      %v1633 = vsel %vm1377, %v1055, %v1505
      %v1634 = vsel %vm1378, %v1060, %v1506
      %v1635 = vsel %vm1379, %v1063, %v1507
      %v1636 = vsel %vm1380, %v1068, %v1508
      %v1637 = vsel %vm1381, %v1071, %v1509
      %v1638 = vsel %vm1382, %v1076, %v1510
      %v1639 = vsel %vm1383, %v1079, %v1511
      %v1640 = vsel %vm1384, %v1084, %v1512
      %v1641 = vsel %vm1385, %v1087, %v1513
      %v1642 = vsel %vm1386, %v1092, %v1514
      %v1643 = vsel %vm1387, %v1095, %v1515
      %v1644 = vsel %vm1388, %v1100, %v1516
      %v1645 = vsel %vm1389, %v1103, %v1517
      %v1646 = vsel %vm1390, %v1108, %v1518
      %v1647 = vsel %vm1391, %v1111, %v1519
      %v1648 = vsel %vm1392, %v1116, %v1520
      %v1649 = vsel %vm1393, %v1119, %v1521
      %v1650 = vsel %vm1394, %v1124, %v1522
      %v1651 = vsel %vm1395, %v1127, %v1523
      %v1652 = vsel %vm1396, %v1132, %v1524
      %v1653 = vsel %vm1397, %v1135, %v1525
      %v1654 = vsel %vm1398, %v1140, %v1526
      %v1655 = vsel %vm1399, %v1143, %v1527
      %v1656 = vsel %vm1400, %v1148, %v1528
      %v1657 = vsel %vm1401, %v1151, %v1529
      %v1658 = vsel %vm1402, %v1156, %v1530
      %v1659 = vsel %vm1403, %v1159, %v1531
      %v1660 = vsel %vm1404, %v1164, %v1532
      %v1661 = vsel %vm1405, %v1167, %v1533
      %v1662 = vsel %vm1406, %v1172, %v1534
      %v1663 = vsel %vm1407, %v1175, %v1535
      %v1664 = vsel %vm1408, %v1180, %v1536
      %v1665 = vsel %vm1409, %v1183, %v1537
      %v1666 = vsel %vm1410, %v1188, %v1538
      %v1667 = vsel %vm1411, %v1191, %v1539
      %v1668 = vsel %vm1412, %v1196, %v1540
      %v1669 = vsel %vm1413, %v1199, %v1541
      %v1670 = vsel %vm1414, %v1204, %v1542
      %v1671 = vsel %vm1415, %v1207, %v1543
      %v1672 = vsel %vm1416, %v1212, %v1544
      %v1673 = vsel %vm1417, %v1215, %v1545
      %v1674 = vsel %vm1418, %v1220, %v1546
      %v1675 = vsel %vm1419, %v1223, %v1547
      %v1676 = vsel %vm1420, %v1228, %v1548
      %v1677 = vsel %vm1421, %v1231, %v1549
      %v1678 = vsel %vm1422, %v1236, %v1550
      %v1679 = vsel %vm1423, %v1239, %v1551
      %v1680 = vsel %vm1424, %v1244, %v1552
      %v1681 = vsel %vm1425, %v1247, %v1553
      %v1682 = vsel %vm1426, %v1252, %v1554
      %v1683 = vsel %vm1427, %v1255, %v1555
      %v1684 = vsel %vm1428, %v1260, %v1556
      %v1685 = vsel %vm1429, %v1263, %v1557
      %v1686 = vsel %vm1430, %v1268, %v1558
      %v1687 = vsel %vm1431, %v1271, %v1559
      %v1688 = vsel %vm1432, %v1276, %v1560
      %v1689 = vsel %vm1433, %v1279, %v1561
      %v1690 = vsel %vm1434, %v1284, %v1562
      %v1691 = vsel %vm1435, %v1287, %v1563
      %v1692 = vsel %vm1436, %v1292, %v1564
      %v1693 = vsel %vm1437, %v1295, %v1565
      %v1694 = vsel %vm1438, %v1300, %v1566
      %v1695 = vsel %vm1439, %v1303, %v1567
      %v1696 = vsel %vm1440, %v1308, %v1568
      %v1697 = vsel %vm1441, %v1311, %v1569
      %v1698 = vpack.c.bf16 %v1571, %v1570
      %v1699 = vpack.c.bf16 %v1573, %v1572
      %v1700 = vpack.c.bf16 %v1575, %v1574
      %v1701 = vpack.c.bf16 %v1577, %v1576
      %v1702 = vpack.c.bf16 %v1579, %v1578
      %v1703 = vpack.c.bf16 %v1581, %v1580
      %v1704 = vpack.c.bf16 %v1583, %v1582
      %v1705 = vpack.c.bf16 %v1585, %v1584
      %v1706 = vpack.c.bf16 %v1587, %v1586
      %v1707 = vpack.c.bf16 %v1589, %v1588
      %v1708 = vpack.c.bf16 %v1591, %v1590
      %v1709 = vpack.c.bf16 %v1593, %v1592
      %v1710 = vpack.c.bf16 %v1595, %v1594
      %v1711 = vpack.c.bf16 %v1597, %v1596
      %v1712 = vpack.c.bf16 %v1599, %v1598
      %v1713 = vpack.c.bf16 %v1601, %v1600
      %v1714 = vpack.c.bf16 %v1603, %v1602
      %v1715 = vpack.c.bf16 %v1605, %v1604
      %v1716 = vpack.c.bf16 %v1607, %v1606
      %v1717 = vpack.c.bf16 %v1609, %v1608
      %v1718 = vpack.c.bf16 %v1611, %v1610
      %v1719 = vpack.c.bf16 %v1613, %v1612
      %v1720 = vpack.c.bf16 %v1615, %v1614
      %v1721 = vpack.c.bf16 %v1617, %v1616
      %v1722 = vpack.c.bf16 %v1619, %v1618
      %v1723 = vpack.c.bf16 %v1621, %v1620
      %v1724 = vpack.c.bf16 %v1623, %v1622
      %v1725 = vpack.c.bf16 %v1625, %v1624
      %v1726 = vpack.c.bf16 %v1627, %v1626
      %v1727 = vpack.c.bf16 %v1629, %v1628
      %v1728 = vpack.c.bf16 %v1631, %v1630
      %v1729 = vpack.c.bf16 %v1633, %v1632
      %v1730 = vpack.c.bf16 %v1635, %v1634
      %v1731 = vpack.c.bf16 %v1637, %v1636
      %v1732 = vpack.c.bf16 %v1639, %v1638
      %v1733 = vpack.c.bf16 %v1641, %v1640
      %v1734 = vpack.c.bf16 %v1643, %v1642
      %v1735 = vpack.c.bf16 %v1645, %v1644
      %v1736 = vpack.c.bf16 %v1647, %v1646
      %v1737 = vpack.c.bf16 %v1649, %v1648
      %v1738 = vpack.c.bf16 %v1651, %v1650
      %v1739 = vpack.c.bf16 %v1653, %v1652
      %v1740 = vpack.c.bf16 %v1655, %v1654
      %v1741 = vpack.c.bf16 %v1657, %v1656
      %v1742 = vpack.c.bf16 %v1659, %v1658
      %v1743 = vpack.c.bf16 %v1661, %v1660
      %v1744 = vpack.c.bf16 %v1663, %v1662
      %v1745 = vpack.c.bf16 %v1665, %v1664
      %v1746 = vpack.c.bf16 %v1667, %v1666
      %v1747 = vpack.c.bf16 %v1669, %v1668
      %v1748 = vpack.c.bf16 %v1671, %v1670
      %v1749 = vpack.c.bf16 %v1673, %v1672
      %v1750 = vpack.c.bf16 %v1675, %v1674
      %v1751 = vpack.c.bf16 %v1677, %v1676
      %v1752 = vpack.c.bf16 %v1679, %v1678
      %v1753 = vpack.c.bf16 %v1681, %v1680
      %v1754 = vpack.c.bf16 %v1683, %v1682
      %v1755 = vpack.c.bf16 %v1685, %v1684
      %v1756 = vpack.c.bf16 %v1687, %v1686
      %v1757 = vpack.c.bf16 %v1689, %v1688
      %v1758 = vpack.c.bf16 %v1691, %v1690
      %v1759 = vpack.c.bf16 %v1693, %v1692
      %v1760 = vpack.c.bf16 %v1695, %v1694
      %v1761 = vpack.c.bf16 %v1697, %v1696
      %v1826 = vunpack.c.l.b16 %v1698
      %v1827 = vunpack.c.h.b16 %v1698
      %v1828 = vunpack.c.l.b16 %v1699
      %v1829 = vunpack.c.h.b16 %v1699
      %v1830 = vunpack.c.l.b16 %v1700
      %v1831 = vunpack.c.h.b16 %v1700
      %v1832 = vunpack.c.l.b16 %v1701
      %v1833 = vunpack.c.h.b16 %v1701
      %v1834 = vunpack.c.l.b16 %v1702
      %v1835 = vunpack.c.h.b16 %v1702
      %v1836 = vunpack.c.l.b16 %v1703
      %v1837 = vunpack.c.h.b16 %v1703
      %v1838 = vunpack.c.l.b16 %v1704
      %v1839 = vunpack.c.h.b16 %v1704
      %v1840 = vunpack.c.l.b16 %v1705
      %v1841 = vunpack.c.h.b16 %v1705
      %v1842 = vunpack.c.l.b16 %v1706
      %v1843 = vunpack.c.h.b16 %v1706
      %v1844 = vunpack.c.l.b16 %v1707
      %v1845 = vunpack.c.h.b16 %v1707
      %v1846 = vunpack.c.l.b16 %v1708
      %v1847 = vunpack.c.h.b16 %v1708
      %v1848 = vunpack.c.l.b16 %v1709
      %v1849 = vunpack.c.h.b16 %v1709
      %v1850 = vunpack.c.l.b16 %v1710
      %v1851 = vunpack.c.h.b16 %v1710
      %v1852 = vunpack.c.l.b16 %v1711
      %v1853 = vunpack.c.h.b16 %v1711
      %v1854 = vunpack.c.l.b16 %v1712
      %v1855 = vunpack.c.h.b16 %v1712
      %v1856 = vunpack.c.l.b16 %v1713
      %v1857 = vunpack.c.h.b16 %v1713
      %v1858 = vunpack.c.l.b16 %v1714
      %v1859 = vunpack.c.h.b16 %v1714
      %v1860 = vunpack.c.l.b16 %v1715
      %v1861 = vunpack.c.h.b16 %v1715
      %v1862 = vunpack.c.l.b16 %v1716
      %v1863 = vunpack.c.h.b16 %v1716
      %v1864 = vunpack.c.l.b16 %v1717
      %v1865 = vunpack.c.h.b16 %v1717
      %v1866 = vunpack.c.l.b16 %v1718
      %v1867 = vunpack.c.h.b16 %v1718
      %v1868 = vunpack.c.l.b16 %v1719
      %v1869 = vunpack.c.h.b16 %v1719
      %v1870 = vunpack.c.l.b16 %v1720
      %v1871 = vunpack.c.h.b16 %v1720
      %v1872 = vunpack.c.l.b16 %v1721
      %v1873 = vunpack.c.h.b16 %v1721
      %v1874 = vunpack.c.l.b16 %v1722
      %v1875 = vunpack.c.h.b16 %v1722
      %v1876 = vunpack.c.l.b16 %v1723
      %v1877 = vunpack.c.h.b16 %v1723
      %v1878 = vunpack.c.l.b16 %v1724
      %v1879 = vunpack.c.h.b16 %v1724
      %v1880 = vunpack.c.l.b16 %v1725
      %v1881 = vunpack.c.h.b16 %v1725
      %v1882 = vunpack.c.l.b16 %v1726
      %v1883 = vunpack.c.h.b16 %v1726
      %v1884 = vunpack.c.l.b16 %v1727
      %v1885 = vunpack.c.h.b16 %v1727
      %v1886 = vunpack.c.l.b16 %v1728
      %v1887 = vunpack.c.h.b16 %v1728
      %v1888 = vunpack.c.l.b16 %v1729
      %v1889 = vunpack.c.h.b16 %v1729
      %v1890 = vunpack.c.l.b16 %v1730
      %v1891 = vunpack.c.h.b16 %v1730
      %v1892 = vunpack.c.l.b16 %v1731
      %v1893 = vunpack.c.h.b16 %v1731
      %v1894 = vunpack.c.l.b16 %v1732
      %v1895 = vunpack.c.h.b16 %v1732
      %v1896 = vunpack.c.l.b16 %v1733
      %v1897 = vunpack.c.h.b16 %v1733
      %v1898 = vunpack.c.l.b16 %v1734
      %v1899 = vunpack.c.h.b16 %v1734
      %v1900 = vunpack.c.l.b16 %v1735
      %v1901 = vunpack.c.h.b16 %v1735
      %v1902 = vunpack.c.l.b16 %v1736
      %v1903 = vunpack.c.h.b16 %v1736
      %v1904 = vunpack.c.l.b16 %v1737
      %v1905 = vunpack.c.h.b16 %v1737
      %v1906 = vunpack.c.l.b16 %v1738
      %v1907 = vunpack.c.h.b16 %v1738
      %v1908 = vunpack.c.l.b16 %v1739
      %v1909 = vunpack.c.h.b16 %v1739
      %v1910 = vunpack.c.l.b16 %v1740
      %v1911 = vunpack.c.h.b16 %v1740
      %v1912 = vunpack.c.l.b16 %v1741
      %v1913 = vunpack.c.h.b16 %v1741
      %v1914 = vunpack.c.l.b16 %v1742
      %v1915 = vunpack.c.h.b16 %v1742
      %v1916 = vunpack.c.l.b16 %v1743
      %v1917 = vunpack.c.h.b16 %v1743
      %v1918 = vunpack.c.l.b16 %v1744
      %v1919 = vunpack.c.h.b16 %v1744
      %v1920 = vunpack.c.l.b16 %v1745
      %v1921 = vunpack.c.h.b16 %v1745
      %v1922 = vunpack.c.l.b16 %v1746
      %v1923 = vunpack.c.h.b16 %v1746
      %v1924 = vunpack.c.l.b16 %v1747
      %v1925 = vunpack.c.h.b16 %v1747
      %v1926 = vunpack.c.l.b16 %v1748
      %v1927 = vunpack.c.h.b16 %v1748
      %v1928 = vunpack.c.l.b16 %v1749
      %v1929 = vunpack.c.h.b16 %v1749
      %v1930 = vunpack.c.l.b16 %v1750
      %v1931 = vunpack.c.h.b16 %v1750
      %v1932 = vunpack.c.l.b16 %v1751
      %v1933 = vunpack.c.h.b16 %v1751
      %v1934 = vunpack.c.l.b16 %v1752
      %v1935 = vunpack.c.h.b16 %v1752
      %v1936 = vunpack.c.l.b16 %v1753
      %v1937 = vunpack.c.h.b16 %v1753
      %v1938 = vunpack.c.l.b16 %v1754
      %v1939 = vunpack.c.h.b16 %v1754
      %v1940 = vunpack.c.l.b16 %v1755
      %v1941 = vunpack.c.h.b16 %v1755
      %v1942 = vunpack.c.l.b16 %v1756
      %v1943 = vunpack.c.h.b16 %v1756
      %v1944 = vunpack.c.l.b16 %v1757
      %v1945 = vunpack.c.h.b16 %v1757
      %v1946 = vunpack.c.l.b16 %v1758
      %v1947 = vunpack.c.h.b16 %v1758
      %v1948 = vunpack.c.l.b16 %v1759
      %v1949 = vunpack.c.h.b16 %v1759
      %v1950 = vunpack.c.l.b16 %v1760
      %v1951 = vunpack.c.h.b16 %v1760
      %v1952 = vunpack.c.l.b16 %v1761
      %v1953 = vunpack.c.h.b16 %v1761
      %v1954 = vpack.c.b16 %v1826, %v1826
      %v1955 = vpack.c.b16 %v1827, %v1827
      %v1956 = vpack.c.b16 %v1828, %v1828
      %v1957 = vpack.c.b16 %v1829, %v1829
      %v1958 = vpack.c.b16 %v1830, %v1830
      %v1959 = vpack.c.b16 %v1831, %v1831
      %v1960 = vpack.c.b16 %v1832, %v1832
      %v1961 = vpack.c.b16 %v1833, %v1833
      %v1962 = vpack.c.b16 %v1834, %v1834
      %v1963 = vpack.c.b16 %v1835, %v1835
      %v1964 = vpack.c.b16 %v1836, %v1836
      %v1965 = vpack.c.b16 %v1837, %v1837
      %v1966 = vpack.c.b16 %v1838, %v1838
      %v1967 = vpack.c.b16 %v1839, %v1839
      %v1968 = vpack.c.b16 %v1840, %v1840
      %v1969 = vpack.c.b16 %v1841, %v1841
      %v1970 = vpack.c.b16 %v1842, %v1842
      %v1971 = vpack.c.b16 %v1843, %v1843
      %v1972 = vpack.c.b16 %v1844, %v1844
      %v1973 = vpack.c.b16 %v1845, %v1845
      %v1974 = vpack.c.b16 %v1846, %v1846
      %v1975 = vpack.c.b16 %v1847, %v1847
      %v1976 = vpack.c.b16 %v1848, %v1848
      %v1977 = vpack.c.b16 %v1849, %v1849
      %v1978 = vpack.c.b16 %v1850, %v1850
      %v1979 = vpack.c.b16 %v1851, %v1851
      %v1980 = vpack.c.b16 %v1852, %v1852
      %v1981 = vpack.c.b16 %v1853, %v1853
      %v1982 = vpack.c.b16 %v1854, %v1854
      %v1983 = vpack.c.b16 %v1855, %v1855
      %v1984 = vpack.c.b16 %v1856, %v1856
      %v1985 = vpack.c.b16 %v1857, %v1857
      %v1986 = vpack.c.b16 %v1858, %v1858
      %v1987 = vpack.c.b16 %v1859, %v1859
      %v1988 = vpack.c.b16 %v1860, %v1860
      %v1989 = vpack.c.b16 %v1861, %v1861
      %v1990 = vpack.c.b16 %v1862, %v1862
      %v1991 = vpack.c.b16 %v1863, %v1863
      %v1992 = vpack.c.b16 %v1864, %v1864
      %v1993 = vpack.c.b16 %v1865, %v1865
      %v1994 = vpack.c.b16 %v1866, %v1866
      %v1995 = vpack.c.b16 %v1867, %v1867
      %v1996 = vpack.c.b16 %v1868, %v1868
      %v1997 = vpack.c.b16 %v1869, %v1869
      %v1998 = vpack.c.b16 %v1870, %v1870
      %v1999 = vpack.c.b16 %v1871, %v1871
      %v2000 = vpack.c.b16 %v1872, %v1872
      %v2001 = vpack.c.b16 %v1873, %v1873
      %v2002 = vpack.c.b16 %v1874, %v1874
      %v2003 = vpack.c.b16 %v1875, %v1875
      %v2004 = vpack.c.b16 %v1876, %v1876
      %v2005 = vpack.c.b16 %v1877, %v1877
      %v2006 = vpack.c.b16 %v1878, %v1878
      %v2007 = vpack.c.b16 %v1879, %v1879
      %v2008 = vpack.c.b16 %v1880, %v1880
      %v2009 = vpack.c.b16 %v1881, %v1881
      %v2010 = vpack.c.b16 %v1882, %v1882
      %v2011 = vpack.c.b16 %v1883, %v1883
      %v2012 = vpack.c.b16 %v1884, %v1884
      %v2013 = vpack.c.b16 %v1885, %v1885
      %v2014 = vpack.c.b16 %v1886, %v1886
      %v2015 = vpack.c.b16 %v1887, %v1887
      %v2016 = vpack.c.b16 %v1888, %v1888
      %v2017 = vpack.c.b16 %v1889, %v1889
      %v2018 = vpack.c.b16 %v1890, %v1890
      %v2019 = vpack.c.b16 %v1891, %v1891
      %v2020 = vpack.c.b16 %v1892, %v1892
      %v2021 = vpack.c.b16 %v1893, %v1893
      %v2022 = vpack.c.b16 %v1894, %v1894
      %v2023 = vpack.c.b16 %v1895, %v1895
      %v2024 = vpack.c.b16 %v1896, %v1896
      %v2025 = vpack.c.b16 %v1897, %v1897
      %v2026 = vpack.c.b16 %v1898, %v1898
      %v2027 = vpack.c.b16 %v1899, %v1899
      %v2028 = vpack.c.b16 %v1900, %v1900
      %v2029 = vpack.c.b16 %v1901, %v1901
      %v2030 = vpack.c.b16 %v1902, %v1902
      %v2031 = vpack.c.b16 %v1903, %v1903
      %v2032 = vpack.c.b16 %v1904, %v1904
      %v2033 = vpack.c.b16 %v1905, %v1905
      %v2034 = vpack.c.b16 %v1906, %v1906
      %v2035 = vpack.c.b16 %v1907, %v1907
      %v2036 = vpack.c.b16 %v1908, %v1908
      %v2037 = vpack.c.b16 %v1909, %v1909
      %v2038 = vpack.c.b16 %v1910, %v1910
      %v2039 = vpack.c.b16 %v1911, %v1911
      %v2040 = vpack.c.b16 %v1912, %v1912
      %v2041 = vpack.c.b16 %v1913, %v1913
      %v2042 = vpack.c.b16 %v1914, %v1914
      %v2043 = vpack.c.b16 %v1915, %v1915
      %v2044 = vpack.c.b16 %v1916, %v1916
      %v2045 = vpack.c.b16 %v1917, %v1917
      %v2046 = vpack.c.b16 %v1918, %v1918
      %v2047 = vpack.c.b16 %v1919, %v1919
      %v2048 = vpack.c.b16 %v1920, %v1920
      %v2049 = vpack.c.b16 %v1921, %v1921
      %v2050 = vpack.c.b16 %v1922, %v1922
      %v2051 = vpack.c.b16 %v1923, %v1923
      %v2052 = vpack.c.b16 %v1924, %v1924
      %v2053 = vpack.c.b16 %v1925, %v1925
      %v2054 = vpack.c.b16 %v1926, %v1926
      %v2055 = vpack.c.b16 %v1927, %v1927
      %v2056 = vpack.c.b16 %v1928, %v1928
      %v2057 = vpack.c.b16 %v1929, %v1929
      %v2058 = vpack.c.b16 %v1930, %v1930
      %v2059 = vpack.c.b16 %v1931, %v1931
      %v2060 = vpack.c.b16 %v1932, %v1932
      %v2061 = vpack.c.b16 %v1933, %v1933
      %v2062 = vpack.c.b16 %v1934, %v1934
      %v2063 = vpack.c.b16 %v1935, %v1935
      %v2064 = vpack.c.b16 %v1936, %v1936
      %v2065 = vpack.c.b16 %v1937, %v1937
      %v2066 = vpack.c.b16 %v1938, %v1938
      %v2067 = vpack.c.b16 %v1939, %v1939
      %v2068 = vpack.c.b16 %v1940, %v1940
      %v2069 = vpack.c.b16 %v1941, %v1941
      %v2070 = vpack.c.b16 %v1942, %v1942
      %v2071 = vpack.c.b16 %v1943, %v1943
      %v2072 = vpack.c.b16 %v1944, %v1944
      %v2073 = vpack.c.b16 %v1945, %v1945
      %v2074 = vpack.c.b16 %v1946, %v1946
      %v2075 = vpack.c.b16 %v1947, %v1947
      %v2076 = vpack.c.b16 %v1948, %v1948
      %v2077 = vpack.c.b16 %v1949, %v1949
      %v2078 = vpack.c.b16 %v1950, %v1950
      %v2079 = vpack.c.b16 %v1951, %v1951
      %v2080 = vpack.c.b16 %v1952, %v1952
      %v2081 = vpack.c.b16 %v1953, %v1953
      %2210 = vst [vmem:[%s190] sm:$0xf] %v1954
      %2211 = vst [vmem:[%s190 + $0x4] sm:$0xf] %v1955
      %2212 = vst [vmem:[%s190 + $0x8] sm:$0xf] %v1956
      %2213 = vst [vmem:[%s190 + $0xc] sm:$0xf] %v1957
      %2214 = vst [vmem:[%s190 + $0x10] sm:$0xf] %v1958
      %2215 = vst [vmem:[%s190 + $0x14] sm:$0xf] %v1959
      %2216 = vst [vmem:[%s190 + $0x18] sm:$0xf] %v1960
      %2217 = vst [vmem:[%s190 + $0x1c] sm:$0xf] %v1961
      %2218 = vst [vmem:[%s190 + $0x20] sm:$0xf] %v1962
      %2219 = vst [vmem:[%s190 + $0x24] sm:$0xf] %v1963
      %2220 = vst [vmem:[%s190 + $0x28] sm:$0xf] %v1964
      %2221 = vst [vmem:[%s190 + $0x2c] sm:$0xf] %v1965
      %2222 = vst [vmem:[%s190 + $0x30] sm:$0xf] %v1966
      %2223 = vst [vmem:[%s190 + $0x34] sm:$0xf] %v1967
      %2224 = vst [vmem:[%s190 + $0x38] sm:$0xf] %v1968
      %2225 = vst [vmem:[%s190 + $0x3c] sm:$0xf] %v1969
      %2226 = vst [vmem:[%s190 + $0x40] sm:$0xf] %v1970
      %2227 = vst [vmem:[%s190 + $0x44] sm:$0xf] %v1971
      %2228 = vst [vmem:[%s190 + $0x48] sm:$0xf] %v1972
      %2229 = vst [vmem:[%s190 + $0x4c] sm:$0xf] %v1973
      %2230 = vst [vmem:[%s190 + $0x50] sm:$0xf] %v1974
      %2231 = vst [vmem:[%s190 + $0x54] sm:$0xf] %v1975
      %2232 = vst [vmem:[%s190 + $0x58] sm:$0xf] %v1976
      %2233 = vst [vmem:[%s190 + $0x5c] sm:$0xf] %v1977
      %2234 = vst [vmem:[%s190 + $0x60] sm:$0xf] %v1978
      %2235 = vst [vmem:[%s190 + $0x64] sm:$0xf] %v1979
      %2236 = vst [vmem:[%s190 + $0x68] sm:$0xf] %v1980
      %2237 = vst [vmem:[%s190 + $0x6c] sm:$0xf] %v1981
      %2238 = vst [vmem:[%s190 + $0x70] sm:$0xf] %v1982
      %2239 = vst [vmem:[%s190 + $0x74] sm:$0xf] %v1983
      %2240 = vst [vmem:[%s190 + $0x78] sm:$0xf] %v1984
      %2241 = vst [vmem:[%s190 + $0x7c] sm:$0xf] %v1985
      %2242 = vst [vmem:[%s190 + $0x80] sm:$0xf] %v1986
      %2243 = vst [vmem:[%s190 + $0x84] sm:$0xf] %v1987
      %2244 = vst [vmem:[%s190 + $0x88] sm:$0xf] %v1988
      %2245 = vst [vmem:[%s190 + $0x8c] sm:$0xf] %v1989
      %2246 = vst [vmem:[%s190 + $0x90] sm:$0xf] %v1990
      %2247 = vst [vmem:[%s190 + $0x94] sm:$0xf] %v1991
      %2248 = vst [vmem:[%s190 + $0x98] sm:$0xf] %v1992
      %2249 = vst [vmem:[%s190 + $0x9c] sm:$0xf] %v1993
      %2250 = vst [vmem:[%s190 + $0xa0] sm:$0xf] %v1994
      %2251 = vst [vmem:[%s190 + $0xa4] sm:$0xf] %v1995
      %2252 = vst [vmem:[%s190 + $0xa8] sm:$0xf] %v1996
      %2253 = vst [vmem:[%s190 + $0xac] sm:$0xf] %v1997
      %2254 = vst [vmem:[%s190 + $0xb0] sm:$0xf] %v1998
      %2255 = vst [vmem:[%s190 + $0xb4] sm:$0xf] %v1999
      %2256 = vst [vmem:[%s190 + $0xb8] sm:$0xf] %v2000
      %2257 = vst [vmem:[%s190 + $0xbc] sm:$0xf] %v2001
      %2258 = vst [vmem:[%s190 + $0xc0] sm:$0xf] %v2002
      %2259 = vst [vmem:[%s190 + $0xc4] sm:$0xf] %v2003
      %2260 = vst [vmem:[%s190 + $0xc8] sm:$0xf] %v2004
      %2261 = vst [vmem:[%s190 + $0xcc] sm:$0xf] %v2005
      %2262 = vst [vmem:[%s190 + $0xd0] sm:$0xf] %v2006
      %2263 = vst [vmem:[%s190 + $0xd4] sm:$0xf] %v2007
      %2264 = vst [vmem:[%s190 + $0xd8] sm:$0xf] %v2008
      %2265 = vst [vmem:[%s190 + $0xdc] sm:$0xf] %v2009
      %2266 = vst [vmem:[%s190 + $0xe0] sm:$0xf] %v2010
      %2267 = vst [vmem:[%s190 + $0xe4] sm:$0xf] %v2011
      %2268 = vst [vmem:[%s190 + $0xe8] sm:$0xf] %v2012
      %2269 = vst [vmem:[%s190 + $0xec] sm:$0xf] %v2013
      %2270 = vst [vmem:[%s190 + $0xf0] sm:$0xf] %v2014
      %2271 = vst [vmem:[%s190 + $0xf4] sm:$0xf] %v2015
      %2272 = vst [vmem:[%s190 + $0xf8] sm:$0xf] %v2016
      %2273 = vst [vmem:[%s190 + $0xfc] sm:$0xf] %v2017
      %2274 = vst [vmem:[%s190 + $0x100] sm:$0xf] %v2018
      %2275 = vst [vmem:[%s190 + $0x104] sm:$0xf] %v2019
      %2276 = vst [vmem:[%s190 + $0x108] sm:$0xf] %v2020
      %2277 = vst [vmem:[%s190 + $0x10c] sm:$0xf] %v2021
      %2278 = vst [vmem:[%s190 + $0x110] sm:$0xf] %v2022
      %2279 = vst [vmem:[%s190 + $0x114] sm:$0xf] %v2023
      %2280 = vst [vmem:[%s190 + $0x118] sm:$0xf] %v2024
      %2281 = vst [vmem:[%s190 + $0x11c] sm:$0xf] %v2025
      %2282 = vst [vmem:[%s190 + $0x120] sm:$0xf] %v2026
      %2283 = vst [vmem:[%s190 + $0x124] sm:$0xf] %v2027
      %2284 = vst [vmem:[%s190 + $0x128] sm:$0xf] %v2028
      %2285 = vst [vmem:[%s190 + $0x12c] sm:$0xf] %v2029
      %2286 = vst [vmem:[%s190 + $0x130] sm:$0xf] %v2030
      %2287 = vst [vmem:[%s190 + $0x134] sm:$0xf] %v2031
      %2288 = vst [vmem:[%s190 + $0x138] sm:$0xf] %v2032
      %2289 = vst [vmem:[%s190 + $0x13c] sm:$0xf] %v2033
      %2290 = vst [vmem:[%s190 + $0x140] sm:$0xf] %v2034
      %2291 = vst [vmem:[%s190 + $0x144] sm:$0xf] %v2035
      %2292 = vst [vmem:[%s190 + $0x148] sm:$0xf] %v2036
      %2293 = vst [vmem:[%s190 + $0x14c] sm:$0xf] %v2037
      %2294 = vst [vmem:[%s190 + $0x150] sm:$0xf] %v2038
      %2295 = vst [vmem:[%s190 + $0x154] sm:$0xf] %v2039
      %2296 = vst [vmem:[%s190 + $0x158] sm:$0xf] %v2040
      %2297 = vst [vmem:[%s190 + $0x15c] sm:$0xf] %v2041
      %2298 = vst [vmem:[%s190 + $0x160] sm:$0xf] %v2042
      %2299 = vst [vmem:[%s190 + $0x164] sm:$0xf] %v2043
      %2300 = vst [vmem:[%s190 + $0x168] sm:$0xf] %v2044
      %2301 = vst [vmem:[%s190 + $0x16c] sm:$0xf] %v2045
      %2302 = vst [vmem:[%s190 + $0x170] sm:$0xf] %v2046
      %2303 = vst [vmem:[%s190 + $0x174] sm:$0xf] %v2047
      %2304 = vst [vmem:[%s190 + $0x178] sm:$0xf] %v2048
      %2305 = vst [vmem:[%s190 + $0x17c] sm:$0xf] %v2049
      %2306 = vst [vmem:[%s190 + $0x180] sm:$0xf] %v2050
      %2307 = vst [vmem:[%s190 + $0x184] sm:$0xf] %v2051
      %2308 = vst [vmem:[%s190 + $0x188] sm:$0xf] %v2052
      %2309 = vst [vmem:[%s190 + $0x18c] sm:$0xf] %v2053
      %2310 = vst [vmem:[%s190 + $0x190] sm:$0xf] %v2054
      %2311 = vst [vmem:[%s190 + $0x194] sm:$0xf] %v2055
      %2312 = vst [vmem:[%s190 + $0x198] sm:$0xf] %v2056
      %2313 = vst [vmem:[%s190 + $0x19c] sm:$0xf] %v2057
      %2314 = vst [vmem:[%s190 + $0x1a0] sm:$0xf] %v2058
      %2315 = vst [vmem:[%s190 + $0x1a4] sm:$0xf] %v2059
      %2316 = vst [vmem:[%s190 + $0x1a8] sm:$0xf] %v2060
      %2317 = vst [vmem:[%s190 + $0x1ac] sm:$0xf] %v2061
      %2318 = vst [vmem:[%s190 + $0x1b0] sm:$0xf] %v2062
      %2319 = vst [vmem:[%s190 + $0x1b4] sm:$0xf] %v2063
      %2320 = vst [vmem:[%s190 + $0x1b8] sm:$0xf] %v2064
      %2321 = vst [vmem:[%s190 + $0x1bc] sm:$0xf] %v2065
      %2322 = vst [vmem:[%s190 + $0x1c0] sm:$0xf] %v2066
      %2323 = vst [vmem:[%s190 + $0x1c4] sm:$0xf] %v2067
      %2324 = vst [vmem:[%s190 + $0x1c8] sm:$0xf] %v2068
      %2325 = vst [vmem:[%s190 + $0x1cc] sm:$0xf] %v2069
      %2326 = vst [vmem:[%s190 + $0x1d0] sm:$0xf] %v2070
      %2327 = vst [vmem:[%s190 + $0x1d4] sm:$0xf] %v2071
      %2328 = vst [vmem:[%s190 + $0x1d8] sm:$0xf] %v2072
      %2329 = vst [vmem:[%s190 + $0x1dc] sm:$0xf] %v2073
      %2330 = vst [vmem:[%s190 + $0x1e0] sm:$0xf] %v2074
      %2331 = vst [vmem:[%s190 + $0x1e4] sm:$0xf] %v2075
      %2332 = vst [vmem:[%s190 + $0x1e8] sm:$0xf] %v2076
      %2333 = vst [vmem:[%s190 + $0x1ec] sm:$0xf] %v2077
      %2334 = vst [vmem:[%s190 + $0x1f0] sm:$0xf] %v2078
      %2335 = vst [vmem:[%s190 + $0x1f4] sm:$0xf] %v2079
      %2336 = vst [vmem:[%s190 + $0x1f8] sm:$0xf] %v2080
      %2337 = vst [vmem:[%s190 + $0x1fc] sm:$0xf] %v2081
      %s2338 = smul.u32 128, %s17
      %p2339 = scmp.lt.s32.totalorder %s2338, 255
      %s2340 = scalar_select %p2339, %s2338, 255
      %s2341 = smul.addr %s2340, 4
      %s2342 = scalar_lea.vmem %s2, %s2341
      // Predicated region
      $region29: #{discriminator_forward.4} parent=27 // pred_check
        %p2343 = pneg %p97
      $region30: #{discriminator_forward.4} parent=27 // pred_check_branch
        %2345 = sbr.rel (%p2343) target = $region32
      $region31: #{discriminator_forward.4} parent=27 // pred_region
        %s2346 = smul.u32 128, %s17
      $region32: #{discriminator_forward.4} parent=27 // pred_fallthru
        _
    $region28: #{discriminator_forward.4} parent=5 // pred_fallthru
      _
    %p2347 = scmp.le.s32.totalorder 2, %s8
    // Predicated region
    $region33: #{discriminator_forward.4} parent=5 // pred_check
      %p2348 = pneg %p2347
    $region34: #{discriminator_forward.4} parent=5 // pred_check_branch
      %2350 = sbr.rel (%p2348) target = $region36
    $region35: #{discriminator_forward.4} parent=5 // pred_region
      %s2351 = ssub.s32 %s8, 2
      // Predicated region
      $region37: #{discriminator_forward.4} parent=35 // pred_check
        %p2352 = pneg %p103
      $region38: #{discriminator_forward.4} parent=35 // pred_check_branch
        %2354 = sbr.rel (%p2352) target = $region40
      $region39: #{discriminator_forward.4} parent=35 // pred_region
        %s2355 = smul.u32 128, %s19
        %p2356 = scmp.lt.s32.totalorder %s2355, 255
        %s2357 = scalar_select %p2356, %s2355, 255
        %s2358 = smul.addr %s2357, 4
        %s2359 = scalar_lea.vmem %s2, %s2358
      $region40: #{discriminator_forward.4} parent=35 // pred_fallthru
        _
    $region36: #{discriminator_forward.4} parent=5 // pred_fallthru
      _
  $region6: #{discriminator_forward.4} parent=0 // loop_footer
    %s12 = sadd.s32 1, %s8
  $region7: #{discriminator_forward.4} parent=0 // loop_footer_branch
    %7 = sbr.rel target = $region3
  $region8: #{discriminator_forward.4} parent=0 // loop_exit
    _

// kernel: discriminator_forward.5
$region0: #{discriminator_forward.5}
  #allocation0 [shape = 'u32[]', space=smem, size = 0x4, offset = 0x4, fixed_abs, tag = 'smem constant byte address 0x4 - core index']
  #allocation1 [shape = 'u32[144,128]{1,0:T(1,128)}', space=vmem, size = 0x12000, scoped, tag = 'internal scratch']
  %s0 = inlined_call_operand.vmem [shape: bf16[512,128], index: 0, kind: input, shape index: {}]
  %s1 = inlined_call_operand.vmem [shape: bf16[128,128], index: 1, kind: input, shape index: {}]
  %s2 = inlined_call_operand.vmem [shape: bf16[512,128], index: 2, kind: output, shape index: {0}]
  %s3 = inlined_call_operand.vmem [shape: f32[1,8,128], index: 3, kind: output, shape index: {1}]
  %s4 = inlined_call_operand.vmem [shape: f32[1,8,128], index: 4, kind: output, shape index: {2}]
  %5 = xla_tuple %s2, %s3, %s4
  %s6 = sld [smem:[#allocation0]]
  $region34: #{discriminator_forward.5} parent=0
    _
  %s8 = ssub.s32 1, %s6
  %s9 = scalar_select 0, %s8, %s6
  // Predicated region
  $region2: #{discriminator_forward.5} parent=0 // pred_check
    _
  $region3: #{discriminator_forward.5} parent=0 // pred_check_branch
    %11 = sbr.rel (0) target = $region5
  $region4: #{discriminator_forward.5} parent=0 // pred_region
    _
  $region5: #{discriminator_forward.5} parent=0 // pred_fallthru
    _
  // Predicated region
  $region6: #{discriminator_forward.5} parent=0 // pred_check
    _
  $region7: #{discriminator_forward.5} parent=0 // pred_check_branch
    %13 = sbr.rel (0) target = $region9
  $region8: #{discriminator_forward.5} parent=0 // pred_region
    _
  $region9: #{discriminator_forward.5} parent=0 // pred_fallthru
    _
  %v15 = vld [vmem:[%s0] sm:$0xf]
  %v16 = vld [vmem:[%s0 + $0x4] sm:$0xf]
  %v17 = vld [vmem:[%s0 + $0x8] sm:$0xf]
  %v18 = vld [vmem:[%s0 + $0xc] sm:$0xf]
  %v19 = vld [vmem:[%s0 + $0x10] sm:$0xf]
  %v20 = vld [vmem:[%s0 + $0x14] sm:$0xf]
  %v21 = vld [vmem:[%s0 + $0x18] sm:$0xf]
  %v22 = vld [vmem:[%s0 + $0x1c] sm:$0xf]
  %v23 = vld [vmem:[%s0 + $0x20] sm:$0xf]
  %v24 = vld [vmem:[%s0 + $0x24] sm:$0xf]
  %v25 = vld [vmem:[%s0 + $0x28] sm:$0xf]
  %v26 = vld [vmem:[%s0 + $0x2c] sm:$0xf]
  %v27 = vld [vmem:[%s0 + $0x30] sm:$0xf]
  %v28 = vld [vmem:[%s0 + $0x34] sm:$0xf]
  %v29 = vld [vmem:[%s0 + $0x38] sm:$0xf]
  %v30 = vld [vmem:[%s0 + $0x3c] sm:$0xf]
  %v31 = vld [vmem:[%s0 + $0x40] sm:$0xf]
  %v32 = vld [vmem:[%s0 + $0x44] sm:$0xf]
  %v33 = vld [vmem:[%s0 + $0x48] sm:$0xf]
  %v34 = vld [vmem:[%s0 + $0x4c] sm:$0xf]
  %v35 = vld [vmem:[%s0 + $0x50] sm:$0xf]
  %v36 = vld [vmem:[%s0 + $0x54] sm:$0xf]
  %v37 = vld [vmem:[%s0 + $0x58] sm:$0xf]
  %v38 = vld [vmem:[%s0 + $0x5c] sm:$0xf]
  %v39 = vld [vmem:[%s0 + $0x60] sm:$0xf]
  %v40 = vld [vmem:[%s0 + $0x64] sm:$0xf]
  %v41 = vld [vmem:[%s0 + $0x68] sm:$0xf]
  %v42 = vld [vmem:[%s0 + $0x6c] sm:$0xf]
  %v43 = vld [vmem:[%s0 + $0x70] sm:$0xf]
  %v44 = vld [vmem:[%s0 + $0x74] sm:$0xf]
  %v45 = vld [vmem:[%s0 + $0x78] sm:$0xf]
  %v46 = vld [vmem:[%s0 + $0x7c] sm:$0xf]
  %v47 = vld [vmem:[%s0 + $0x80] sm:$0xf]
  %v48 = vld [vmem:[%s0 + $0x84] sm:$0xf]
  %v49 = vld [vmem:[%s0 + $0x88] sm:$0xf]
  %v50 = vld [vmem:[%s0 + $0x8c] sm:$0xf]
  %v51 = vld [vmem:[%s0 + $0x90] sm:$0xf]
  %v52 = vld [vmem:[%s0 + $0x94] sm:$0xf]
  %v53 = vld [vmem:[%s0 + $0x98] sm:$0xf]
  %v54 = vld [vmem:[%s0 + $0x9c] sm:$0xf]
  %v55 = vld [vmem:[%s0 + $0xa0] sm:$0xf]
  %v56 = vld [vmem:[%s0 + $0xa4] sm:$0xf]
  %v57 = vld [vmem:[%s0 + $0xa8] sm:$0xf]
  %v58 = vld [vmem:[%s0 + $0xac] sm:$0xf]
  %v59 = vld [vmem:[%s0 + $0xb0] sm:$0xf]
  %v60 = vld [vmem:[%s0 + $0xb4] sm:$0xf]
  %v61 = vld [vmem:[%s0 + $0xb8] sm:$0xf]
  %v62 = vld [vmem:[%s0 + $0xbc] sm:$0xf]
  %v63 = vld [vmem:[%s0 + $0xc0] sm:$0xf]
  %v64 = vld [vmem:[%s0 + $0xc4] sm:$0xf]
  %v65 = vld [vmem:[%s0 + $0xc8] sm:$0xf]
  %v66 = vld [vmem:[%s0 + $0xcc] sm:$0xf]
  %v67 = vld [vmem:[%s0 + $0xd0] sm:$0xf]
  %v68 = vld [vmem:[%s0 + $0xd4] sm:$0xf]
  %v69 = vld [vmem:[%s0 + $0xd8] sm:$0xf]
  %v70 = vld [vmem:[%s0 + $0xdc] sm:$0xf]
  %v71 = vld [vmem:[%s0 + $0xe0] sm:$0xf]
  %v72 = vld [vmem:[%s0 + $0xe4] sm:$0xf]
  %v73 = vld [vmem:[%s0 + $0xe8] sm:$0xf]
  %v74 = vld [vmem:[%s0 + $0xec] sm:$0xf]
  %v75 = vld [vmem:[%s0 + $0xf0] sm:$0xf]
  %v76 = vld [vmem:[%s0 + $0xf4] sm:$0xf]
  %v77 = vld [vmem:[%s0 + $0xf8] sm:$0xf]
  %v78 = vld [vmem:[%s0 + $0xfc] sm:$0xf]
  %v79 = vld [vmem:[%s1] sm:$0xf]
  %v80 = vld [vmem:[%s1 + $0x4] sm:$0xf]
  %v81 = vld [vmem:[%s1 + $0x8] sm:$0xf]
  %v82 = vld [vmem:[%s1 + $0xc] sm:$0xf]
  %v83 = vld [vmem:[%s1 + $0x10] sm:$0xf]
  %v84 = vld [vmem:[%s1 + $0x14] sm:$0xf]
  %v85 = vld [vmem:[%s1 + $0x18] sm:$0xf]
  %v86 = vld [vmem:[%s1 + $0x1c] sm:$0xf]
  %v87 = vld [vmem:[%s1 + $0x20] sm:$0xf]
  %v88 = vld [vmem:[%s1 + $0x24] sm:$0xf]
  %v89 = vld [vmem:[%s1 + $0x28] sm:$0xf]
  %v90 = vld [vmem:[%s1 + $0x2c] sm:$0xf]
  %v91 = vld [vmem:[%s1 + $0x30] sm:$0xf]
  %v92 = vld [vmem:[%s1 + $0x34] sm:$0xf]
  %v93 = vld [vmem:[%s1 + $0x38] sm:$0xf]
  %v94 = vld [vmem:[%s1 + $0x3c] sm:$0xf]
  %v159 = vunpack.c.l.b16 %v15
  %v160 = vunpack.c.l.b16 %v16
  %v161 = vunpack.c.l.b16 %v17
  %v162 = vunpack.c.l.b16 %v18
  %v163 = vunpack.c.l.b16 %v19
  %v164 = vunpack.c.l.b16 %v20
  %v165 = vunpack.c.l.b16 %v21
  %v166 = vunpack.c.l.b16 %v22
  %v167 = vunpack.c.l.b16 %v23
  %v168 = vunpack.c.l.b16 %v24
  %v169 = vunpack.c.l.b16 %v25
  %v170 = vunpack.c.l.b16 %v26
  %v171 = vunpack.c.l.b16 %v27
  %v172 = vunpack.c.l.b16 %v28
  %v173 = vunpack.c.l.b16 %v29
  %v174 = vunpack.c.l.b16 %v30
  %v175 = vunpack.c.l.b16 %v31
  %v176 = vunpack.c.l.b16 %v32
  %v177 = vunpack.c.l.b16 %v33
  %v178 = vunpack.c.l.b16 %v34
  %v179 = vunpack.c.l.b16 %v35
  %v180 = vunpack.c.l.b16 %v36
  %v181 = vunpack.c.l.b16 %v37
  %v182 = vunpack.c.l.b16 %v38
  %v183 = vunpack.c.l.b16 %v39
  %v184 = vunpack.c.l.b16 %v40
  %v185 = vunpack.c.l.b16 %v41
  %v186 = vunpack.c.l.b16 %v42
  %v187 = vunpack.c.l.b16 %v43
  %v188 = vunpack.c.l.b16 %v44
  %v189 = vunpack.c.l.b16 %v45
  %v190 = vunpack.c.l.b16 %v46
  %v191 = vunpack.c.l.b16 %v47
  %v192 = vunpack.c.l.b16 %v48
  %v193 = vunpack.c.l.b16 %v49
  %v194 = vunpack.c.l.b16 %v50
  %v195 = vunpack.c.l.b16 %v51
  %v196 = vunpack.c.l.b16 %v52
  %v197 = vunpack.c.l.b16 %v53
  %v198 = vunpack.c.l.b16 %v54
  %v199 = vunpack.c.l.b16 %v55
  %v200 = vunpack.c.l.b16 %v56
  %v201 = vunpack.c.l.b16 %v57
  %v202 = vunpack.c.l.b16 %v58
  %v203 = vunpack.c.l.b16 %v59
  %v204 = vunpack.c.l.b16 %v60
  %v205 = vunpack.c.l.b16 %v61
  %v206 = vunpack.c.l.b16 %v62
  %v207 = vunpack.c.l.b16 %v63
  %v208 = vunpack.c.l.b16 %v64
  %v209 = vunpack.c.l.b16 %v65
  %v210 = vunpack.c.l.b16 %v66
  %v211 = vunpack.c.l.b16 %v67
  %v212 = vunpack.c.l.b16 %v68
  %v213 = vunpack.c.l.b16 %v69
  %v214 = vunpack.c.l.b16 %v70
  %v215 = vunpack.c.l.b16 %v71
  %v216 = vunpack.c.l.b16 %v72
  %v217 = vunpack.c.l.b16 %v73
  %v218 = vunpack.c.l.b16 %v74
  %v219 = vunpack.c.l.b16 %v75
  %v220 = vunpack.c.l.b16 %v76
  %v221 = vunpack.c.l.b16 %v77
  %v222 = vunpack.c.l.b16 %v78
  %v223 = vpack.c.b16 %v160, %v159
  %v224 = vpack.c.b16 %v162, %v161
  %v225 = vpack.c.b16 %v164, %v163
  %v226 = vpack.c.b16 %v166, %v165
  %v227 = vpack.c.b16 %v168, %v167
  %v228 = vpack.c.b16 %v170, %v169
  %v229 = vpack.c.b16 %v172, %v171
  %v230 = vpack.c.b16 %v174, %v173
  %v231 = vpack.c.b16 %v176, %v175
  %v232 = vpack.c.b16 %v178, %v177
  %v233 = vpack.c.b16 %v180, %v179
  %v234 = vpack.c.b16 %v182, %v181
  %v235 = vpack.c.b16 %v184, %v183
  %v236 = vpack.c.b16 %v186, %v185
  %v237 = vpack.c.b16 %v188, %v187
  %v238 = vpack.c.b16 %v190, %v189
  %v239 = vpack.c.b16 %v192, %v191
  %v240 = vpack.c.b16 %v194, %v193
  %v241 = vpack.c.b16 %v196, %v195
  %v242 = vpack.c.b16 %v198, %v197
  %v243 = vpack.c.b16 %v200, %v199
  %v244 = vpack.c.b16 %v202, %v201
  %v245 = vpack.c.b16 %v204, %v203
  %v246 = vpack.c.b16 %v206, %v205
  %v247 = vpack.c.b16 %v208, %v207
  %v248 = vpack.c.b16 %v210, %v209
  %v249 = vpack.c.b16 %v212, %v211
  %v250 = vpack.c.b16 %v214, %v213
  %v251 = vpack.c.b16 %v216, %v215
  %v252 = vpack.c.b16 %v218, %v217
  %v253 = vpack.c.b16 %v220, %v219
  %v254 = vpack.c.b16 %v222, %v221
  %v303 = vunpack.c.l.b16 %v79
  %v304 = vunpack.c.l.b16 %v80
  %v305 = vunpack.c.l.b16 %v81
  %v306 = vunpack.c.l.b16 %v82
  %v307 = vunpack.c.l.b16 %v83
  %v308 = vunpack.c.l.b16 %v84
  %v309 = vunpack.c.l.b16 %v85
  %v310 = vunpack.c.l.b16 %v86
  %v311 = vunpack.c.l.b16 %v87
  %v312 = vunpack.c.l.b16 %v88
  %v313 = vunpack.c.l.b16 %v89
  %v314 = vunpack.c.l.b16 %v90
  %v315 = vunpack.c.l.b16 %v91
  %v316 = vunpack.c.l.b16 %v92
  %v317 = vunpack.c.l.b16 %v93
  %v318 = vunpack.c.l.b16 %v94
  %v319 = vpack.c.b16 %v304, %v303
  %v320 = vpack.c.b16 %v306, %v305
  %v321 = vpack.c.b16 %v308, %v307
  %v322 = vpack.c.b16 %v310, %v309
  %v323 = vpack.c.b16 %v312, %v311
  %v324 = vpack.c.b16 %v314, %v313
  %v325 = vpack.c.b16 %v316, %v315
  %v326 = vpack.c.b16 %v318, %v317
  %335 = vmatprep.subr.bf16.mxu0 0
  %336 = vmatpush1.bf16.msra.mxu0 %v319
  %337 = vmatprep.subr.bf16.mxu0 0
  %338 = vmatpush1.bf16.msra.mxu0 %v320
  %339 = vmatprep.subr.bf16.mxu0 0
  %340 = vmatpush1.bf16.msra.mxu0 %v321
  %341 = vmatprep.subr.bf16.mxu0 0
  %342 = vmatpush1.bf16.msra.mxu0 %v322
  %343 = vmatprep.subr.bf16.mxu0 0
  %344 = vmatpush1.bf16.msra.mxu0 %v323
  %345 = vmatprep.subr.bf16.mxu0 0
  %346 = vmatpush1.bf16.msra.mxu0 %v324
  %347 = vmatprep.subr.bf16.mxu0 0
  %348 = vmatpush1.bf16.msra.mxu0 %v325
  %349 = vmatprep.subr.bf16.mxu0 0
  %350 = vmatpush1.bf16.msra.mxu0 %v326
  %351 = vmatprep.subr.bf16.mxu0 0
  %352 = vmatpush1.bf16.msra.mxu0 0
  %353 = vmatprep.subr.bf16.mxu0 0
  %354 = vmatpush1.bf16.msra.mxu0 0
  %355 = vmatprep.subr.bf16.mxu0 0
  %356 = vmatpush1.bf16.msra.mxu0 0
  %357 = vmatprep.subr.bf16.mxu0 0
  %358 = vmatpush1.bf16.msra.mxu0 0
  %359 = vmatprep.subr.bf16.mxu0 0
  %360 = vmatpush1.bf16.msra.mxu0 0
  %361 = vmatprep.subr.bf16.mxu0 0
  %362 = vmatpush1.bf16.msra.mxu0 0
  %363 = vmatprep.subr.bf16.mxu0 0
  %364 = vmatpush1.bf16.msra.mxu0 0
  %365 = vmatprep.subr.bf16.mxu0 0
  %366 = vmatpush1.bf16.msra.mxu0 0
  %367 = vmatprep.mubr.bf16.mxu0 0
  %368 = vmatmul.mubr.bf16.gmra.mrb[0].mxu0 %v223
  %v369 = vpop.f32.mrb[0].mxu0
  %v370 = vadd.f32 0.0, %v369
  %v371 = vpop.f32.mrb[0].mxu0
  %v372 = vpop.f32.mrb[0].mxu0
  %v373 = vadd.f32 0.0, %v372
  %v374 = vpop.f32.mrb[0].mxu0
  %375 = vmatprep.mubr.bf16.mxu0 0
  %376 = vmatmul.mubr.bf16.gmra.mrb[0].mxu0 %v224
  %v377 = vpop.f32.mrb[0].mxu0
  %v378 = vadd.f32 0.0, %v377
  %v379 = vpop.f32.mrb[0].mxu0
  %v380 = vpop.f32.mrb[0].mxu0
  %v381 = vadd.f32 0.0, %v380
  %v382 = vpop.f32.mrb[0].mxu0
  %383 = vmatprep.mubr.bf16.mxu0 0
  %384 = vmatmul.mubr.bf16.gmra.mrb[0].mxu0 %v225
  %v385 = vpop.f32.mrb[0].mxu0
  %v386 = vadd.f32 0.0, %v385
  %v387 = vpop.f32.mrb[0].mxu0
  %v388 = vpop.f32.mrb[0].mxu0
  %v389 = vadd.f32 0.0, %v388
  %v390 = vpop.f32.mrb[0].mxu0
  %391 = vmatprep.mubr.bf16.mxu0 0
  %392 = vmatmul.mubr.bf16.gmra.mrb[0].mxu0 %v226
  %v393 = vpop.f32.mrb[0].mxu0
  %v394 = vadd.f32 0.0, %v393
  %v395 = vpop.f32.mrb[0].mxu0
  %v396 = vpop.f32.mrb[0].mxu0
  %v397 = vadd.f32 0.0, %v396
  %v398 = vpop.f32.mrb[0].mxu0
  %399 = vmatprep.mubr.bf16.mxu0 0
  %400 = vmatmul.mubr.bf16.gmra.mrb[0].mxu0 %v227
  %v401 = vpop.f32.mrb[0].mxu0
  %v402 = vadd.f32 0.0, %v401
  %v403 = vpop.f32.mrb[0].mxu0
  %v404 = vpop.f32.mrb[0].mxu0
  %v405 = vadd.f32 0.0, %v404
  %v406 = vpop.f32.mrb[0].mxu0
  %407 = vmatprep.mubr.bf16.mxu0 0
  %408 = vmatmul.mubr.bf16.gmra.mrb[0].mxu0 %v228
  %v409 = vpop.f32.mrb[0].mxu0
  %v410 = vadd.f32 0.0, %v409
  %v411 = vpop.f32.mrb[0].mxu0
  %v412 = vpop.f32.mrb[0].mxu0
  %v413 = vadd.f32 0.0, %v412
  %v414 = vpop.f32.mrb[0].mxu0
  %415 = vmatprep.mubr.bf16.mxu0 0
  %416 = vmatmul.mubr.bf16.gmra.mrb[0].mxu0 %v229
  %v417 = vpop.f32.mrb[0].mxu0
  %v418 = vadd.f32 0.0, %v417
  %v419 = vpop.f32.mrb[0].mxu0
  %v420 = vpop.f32.mrb[0].mxu0
  %v421 = vadd.f32 0.0, %v420
  %v422 = vpop.f32.mrb[0].mxu0
  %423 = vmatprep.mubr.bf16.mxu0 0
  %424 = vmatmul.mubr.bf16.gmra.mrb[0].mxu0 %v230
  %v425 = vpop.f32.mrb[0].mxu0
  %v426 = vadd.f32 0.0, %v425
  %v427 = vpop.f32.mrb[0].mxu0
  %v428 = vpop.f32.mrb[0].mxu0
  %v429 = vadd.f32 0.0, %v428
  %v430 = vpop.f32.mrb[0].mxu0
  %431 = vmatprep.mubr.bf16.mxu0 0
  %432 = vmatmul.mubr.bf16.gmra.mrb[0].mxu0 %v231
  %v433 = vpop.f32.mrb[0].mxu0
  %v434 = vadd.f32 0.0, %v433
  %v435 = vpop.f32.mrb[0].mxu0
  %v436 = vpop.f32.mrb[0].mxu0
  %v437 = vadd.f32 0.0, %v436
  %v438 = vpop.f32.mrb[0].mxu0
  %439 = vmatprep.mubr.bf16.mxu0 0
  %440 = vmatmul.mubr.bf16.gmra.mrb[0].mxu0 %v232
  %v441 = vpop.f32.mrb[0].mxu0
  %v442 = vadd.f32 0.0, %v441
  %v443 = vpop.f32.mrb[0].mxu0
  %v444 = vpop.f32.mrb[0].mxu0
  %v445 = vadd.f32 0.0, %v444
  %v446 = vpop.f32.mrb[0].mxu0
  %447 = vmatprep.mubr.bf16.mxu0 0
  %448 = vmatmul.mubr.bf16.gmra.mrb[0].mxu0 %v233
  %v449 = vpop.f32.mrb[0].mxu0
  %v450 = vadd.f32 0.0, %v449
  %v451 = vpop.f32.mrb[0].mxu0
  %v452 = vpop.f32.mrb[0].mxu0
  %v453 = vadd.f32 0.0, %v452
  %v454 = vpop.f32.mrb[0].mxu0
  %455 = vmatprep.mubr.bf16.mxu0 0
  %456 = vmatmul.mubr.bf16.gmra.mrb[0].mxu0 %v234
  %v457 = vpop.f32.mrb[0].mxu0
  %v458 = vadd.f32 0.0, %v457
  %v459 = vpop.f32.mrb[0].mxu0
  %v460 = vpop.f32.mrb[0].mxu0
  %v461 = vadd.f32 0.0, %v460
  %v462 = vpop.f32.mrb[0].mxu0
  %463 = vmatprep.mubr.bf16.mxu0 0
  %464 = vmatmul.mubr.bf16.gmra.mrb[0].mxu0 %v235
  %v465 = vpop.f32.mrb[0].mxu0
  %v466 = vadd.f32 0.0, %v465
  %v467 = vpop.f32.mrb[0].mxu0
  %v468 = vpop.f32.mrb[0].mxu0
  %v469 = vadd.f32 0.0, %v468
  %v470 = vpop.f32.mrb[0].mxu0
  %471 = vmatprep.mubr.bf16.mxu0 0
  %472 = vmatmul.mubr.bf16.gmra.mrb[0].mxu0 %v236
  %v473 = vpop.f32.mrb[0].mxu0
  %v474 = vadd.f32 0.0, %v473
  %v475 = vpop.f32.mrb[0].mxu0
  %v476 = vpop.f32.mrb[0].mxu0
  %v477 = vadd.f32 0.0, %v476
  %v478 = vpop.f32.mrb[0].mxu0
  %479 = vmatprep.mubr.bf16.mxu0 0
  %480 = vmatmul.mubr.bf16.gmra.mrb[0].mxu0 %v237
  %v481 = vpop.f32.mrb[0].mxu0
  %v482 = vadd.f32 0.0, %v481
  %v483 = vpop.f32.mrb[0].mxu0
  %v484 = vpop.f32.mrb[0].mxu0
  %v485 = vadd.f32 0.0, %v484
  %v486 = vpop.f32.mrb[0].mxu0
  %487 = vmatprep.mubr.bf16.mxu0 0
  %488 = vmatmul.mubr.bf16.gmra.mrb[0].mxu0 %v238
  %v489 = vpop.f32.mrb[0].mxu0
  %v490 = vadd.f32 0.0, %v489
  %v491 = vpop.f32.mrb[0].mxu0
  %v492 = vpop.f32.mrb[0].mxu0
  %v493 = vadd.f32 0.0, %v492
  %v494 = vpop.f32.mrb[0].mxu0
  %495 = vmatprep.mubr.bf16.mxu0 0
  %496 = vmatmul.mubr.bf16.gmra.mrb[0].mxu0 %v239
  %v497 = vpop.f32.mrb[0].mxu0
  %v498 = vadd.f32 0.0, %v497
  %v499 = vpop.f32.mrb[0].mxu0
  %v500 = vpop.f32.mrb[0].mxu0
  %v501 = vadd.f32 0.0, %v500
  %v502 = vpop.f32.mrb[0].mxu0
  %503 = vmatprep.mubr.bf16.mxu0 0
  %504 = vmatmul.mubr.bf16.gmra.mrb[0].mxu0 %v240
  %v505 = vpop.f32.mrb[0].mxu0
  %v506 = vadd.f32 0.0, %v505
  %v507 = vpop.f32.mrb[0].mxu0
  %v508 = vpop.f32.mrb[0].mxu0
  %v509 = vadd.f32 0.0, %v508
  %v510 = vpop.f32.mrb[0].mxu0
  %511 = vmatprep.mubr.bf16.mxu0 0
  %512 = vmatmul.mubr.bf16.gmra.mrb[0].mxu0 %v241
  %v513 = vpop.f32.mrb[0].mxu0
  %v514 = vadd.f32 0.0, %v513
  %v515 = vpop.f32.mrb[0].mxu0
  %v516 = vpop.f32.mrb[0].mxu0
  %v517 = vadd.f32 0.0, %v516
  %v518 = vpop.f32.mrb[0].mxu0
  %519 = vmatprep.mubr.bf16.mxu0 0
  %520 = vmatmul.mubr.bf16.gmra.mrb[0].mxu0 %v242
  %v521 = vpop.f32.mrb[0].mxu0
  %v522 = vadd.f32 0.0, %v521
  %v523 = vpop.f32.mrb[0].mxu0
  %v524 = vpop.f32.mrb[0].mxu0
  %v525 = vadd.f32 0.0, %v524
  %v526 = vpop.f32.mrb[0].mxu0
  %527 = vmatprep.mubr.bf16.mxu0 0
  %528 = vmatmul.mubr.bf16.gmra.mrb[0].mxu0 %v243
  %v529 = vpop.f32.mrb[0].mxu0
  %v530 = vadd.f32 0.0, %v529
  %v531 = vpop.f32.mrb[0].mxu0
  %v532 = vpop.f32.mrb[0].mxu0
  %v533 = vadd.f32 0.0, %v532
  %v534 = vpop.f32.mrb[0].mxu0
  %535 = vmatprep.mubr.bf16.mxu0 0
  %536 = vmatmul.mubr.bf16.gmra.mrb[0].mxu0 %v244
  %v537 = vpop.f32.mrb[0].mxu0
  %v538 = vadd.f32 0.0, %v537
  %v539 = vpop.f32.mrb[0].mxu0
  %v540 = vpop.f32.mrb[0].mxu0
  %v541 = vadd.f32 0.0, %v540
  %v542 = vpop.f32.mrb[0].mxu0
  %543 = vmatprep.mubr.bf16.mxu0 0
  %544 = vmatmul.mubr.bf16.gmra.mrb[0].mxu0 %v245
  %v545 = vpop.f32.mrb[0].mxu0
  %v546 = vadd.f32 0.0, %v545
  %v547 = vpop.f32.mrb[0].mxu0
  %v548 = vpop.f32.mrb[0].mxu0
  %v549 = vadd.f32 0.0, %v548
  %v550 = vpop.f32.mrb[0].mxu0
  %551 = vmatprep.mubr.bf16.mxu0 0
  %552 = vmatmul.mubr.bf16.gmra.mrb[0].mxu0 %v246
  %v553 = vpop.f32.mrb[0].mxu0
  %v554 = vadd.f32 0.0, %v553
  %v555 = vpop.f32.mrb[0].mxu0
  %v556 = vpop.f32.mrb[0].mxu0
  %v557 = vadd.f32 0.0, %v556
  %v558 = vpop.f32.mrb[0].mxu0
  %559 = vmatprep.mubr.bf16.mxu0 0
  %560 = vmatmul.mubr.bf16.gmra.mrb[0].mxu0 %v247
  %v561 = vpop.f32.mrb[0].mxu0
  %v562 = vadd.f32 0.0, %v561
  %v563 = vpop.f32.mrb[0].mxu0
  %v564 = vpop.f32.mrb[0].mxu0
  %v565 = vadd.f32 0.0, %v564
  %v566 = vpop.f32.mrb[0].mxu0
  %567 = vmatprep.mubr.bf16.mxu0 0
  %568 = vmatmul.mubr.bf16.gmra.mrb[0].mxu0 %v248
  %v569 = vpop.f32.mrb[0].mxu0
  %v570 = vadd.f32 0.0, %v569
  %v571 = vpop.f32.mrb[0].mxu0
  %v572 = vpop.f32.mrb[0].mxu0
  %v573 = vadd.f32 0.0, %v572
  %v574 = vpop.f32.mrb[0].mxu0
  %575 = vmatprep.mubr.bf16.mxu0 0
  %576 = vmatmul.mubr.bf16.gmra.mrb[0].mxu0 %v249
  %v577 = vpop.f32.mrb[0].mxu0
  %v578 = vadd.f32 0.0, %v577
  %v579 = vpop.f32.mrb[0].mxu0
  %v580 = vpop.f32.mrb[0].mxu0
  %v581 = vadd.f32 0.0, %v580
  %v582 = vpop.f32.mrb[0].mxu0
  %583 = vmatprep.mubr.bf16.mxu0 0
  %584 = vmatmul.mubr.bf16.gmra.mrb[0].mxu0 %v250
  %v585 = vpop.f32.mrb[0].mxu0
  %v586 = vadd.f32 0.0, %v585
  %v587 = vpop.f32.mrb[0].mxu0
  %v588 = vpop.f32.mrb[0].mxu0
  %v589 = vadd.f32 0.0, %v588
  %v590 = vpop.f32.mrb[0].mxu0
  %591 = vmatprep.mubr.bf16.mxu0 0
  %592 = vmatmul.mubr.bf16.gmra.mrb[0].mxu0 %v251
  %v593 = vpop.f32.mrb[0].mxu0
  %v594 = vadd.f32 0.0, %v593
  %v595 = vpop.f32.mrb[0].mxu0
  %v596 = vpop.f32.mrb[0].mxu0
  %v597 = vadd.f32 0.0, %v596
  %v598 = vpop.f32.mrb[0].mxu0
  %599 = vmatprep.mubr.bf16.mxu0 0
  %600 = vmatmul.mubr.bf16.gmra.mrb[0].mxu0 %v252
  %v601 = vpop.f32.mrb[0].mxu0
  %v602 = vadd.f32 0.0, %v601
  %v603 = vpop.f32.mrb[0].mxu0
  %v604 = vpop.f32.mrb[0].mxu0
  %v605 = vadd.f32 0.0, %v604
  %v606 = vpop.f32.mrb[0].mxu0
  %607 = vmatprep.mubr.bf16.mxu0 0
  %608 = vmatmul.mubr.bf16.gmra.mrb[0].mxu0 %v253
  %v609 = vpop.f32.mrb[0].mxu0
  %v610 = vadd.f32 0.0, %v609
  %v611 = vpop.f32.mrb[0].mxu0
  %v612 = vpop.f32.mrb[0].mxu0
  %v613 = vadd.f32 0.0, %v612
  %v614 = vpop.f32.mrb[0].mxu0
  %615 = vmatprep.mubr.bf16.mxu0 0
  %616 = vmatmul.mubr.bf16.gmra.mrb[0].mxu0 %v254
  %v617 = vpop.f32.mrb[0].mxu0
  %v618 = vadd.f32 0.0, %v617
  %v619 = vpop.f32.mrb[0].mxu0
  %v620 = vpop.f32.mrb[0].mxu0
  %v621 = vadd.f32 0.0, %v620
  %v622 = vpop.f32.mrb[0].mxu0
  %623 = vdwg.mxu0
  %v624 = vadd.f32 %v370, %v373
  %v625 = vadd.f32 %v624, %v378
  %v626 = vadd.f32 %v625, %v381
  %v627 = vadd.f32 %v626, %v386
  %v628 = vadd.f32 %v627, %v389
  %v629 = vadd.f32 %v628, %v394
  %v630 = vadd.f32 %v629, %v397
  %v631 = vadd.f32 %v630, %v402
  %v632 = vadd.f32 %v631, %v405
  %v633 = vadd.f32 %v632, %v410
  %v634 = vadd.f32 %v633, %v413
  %v635 = vadd.f32 %v634, %v418
  %v636 = vadd.f32 %v635, %v421
  %v637 = vadd.f32 %v636, %v426
  %v638 = vadd.f32 %v637, %v429
  %v639 = vadd.f32 %v638, %v434
  %v640 = vadd.f32 %v639, %v437
  %v641 = vadd.f32 %v640, %v442
  %v642 = vadd.f32 %v641, %v445
  %v643 = vadd.f32 %v642, %v450
  %v644 = vadd.f32 %v643, %v453
  %v645 = vadd.f32 %v644, %v458
  %v646 = vadd.f32 %v645, %v461
  %v647 = vadd.f32 %v646, %v466
  %v648 = vadd.f32 %v647, %v469
  %v649 = vadd.f32 %v648, %v474
  %v650 = vadd.f32 %v649, %v477
  %v651 = vadd.f32 %v650, %v482
  %v652 = vadd.f32 %v651, %v485
  %v653 = vadd.f32 %v652, %v490
  %v654 = vadd.f32 %v653, %v493
  %v655 = vadd.f32 %v654, %v498
  %v656 = vadd.f32 %v655, %v501
  %v657 = vadd.f32 %v656, %v506
  %v658 = vadd.f32 %v657, %v509
  %v659 = vadd.f32 %v658, %v514
  %v660 = vadd.f32 %v659, %v517
  %v661 = vadd.f32 %v660, %v522
  %v662 = vadd.f32 %v661, %v525
  %v663 = vadd.f32 %v662, %v530
  %v664 = vadd.f32 %v663, %v533
  %v665 = vadd.f32 %v664, %v538
  %v666 = vadd.f32 %v665, %v541
  %v667 = vadd.f32 %v666, %v546
  %v668 = vadd.f32 %v667, %v549
  %v669 = vadd.f32 %v668, %v554
  %v670 = vadd.f32 %v669, %v557
  %v671 = vadd.f32 %v670, %v562
  %v672 = vadd.f32 %v671, %v565
  %v673 = vadd.f32 %v672, %v570
  %v674 = vadd.f32 %v673, %v573
  %v675 = vadd.f32 %v674, %v578
  %v676 = vadd.f32 %v675, %v581
  %v677 = vadd.f32 %v676, %v586
  %v678 = vadd.f32 %v677, %v589
  %v679 = vadd.f32 %v678, %v594
  %v680 = vadd.f32 %v679, %v597
  %v681 = vadd.f32 %v680, %v602
  %v682 = vadd.f32 %v681, %v605
  %v683 = vadd.f32 %v682, %v610
  %v684 = vadd.f32 %v683, %v613
  %v685 = vadd.f32 %v684, %v618
  %v686 = vadd.f32 %v685, %v621
  %v687 = vrot.slane %v686, 4
  %v688 = vadd.f32 %v686, %v687
  %v689 = vrot.slane %v688, 2
  %v690 = vadd.f32 %v688, %v689
  %v691 = vrot.slane %v690, 1
  %v692 = vadd.f32 %v690, %v691
  %v693 = vmul.f32 %v370, %v370
  %v694 = vmul.f32 %v373, %v373
  %v695 = vmul.f32 %v378, %v378
  %v696 = vmul.f32 %v381, %v381
  %v697 = vmul.f32 %v386, %v386
  %v698 = vmul.f32 %v389, %v389
  %v699 = vmul.f32 %v394, %v394
  %v700 = vmul.f32 %v397, %v397
  %v701 = vmul.f32 %v402, %v402
  %v702 = vmul.f32 %v405, %v405
  %v703 = vmul.f32 %v410, %v410
  %v704 = vmul.f32 %v413, %v413
  %v705 = vmul.f32 %v418, %v418
  %v706 = vmul.f32 %v421, %v421
  %v707 = vmul.f32 %v426, %v426
  %v708 = vmul.f32 %v429, %v429
  %v709 = vmul.f32 %v434, %v434
  %v710 = vmul.f32 %v437, %v437
  %v711 = vmul.f32 %v442, %v442
  %v712 = vmul.f32 %v445, %v445
  %v713 = vmul.f32 %v450, %v450
  %v714 = vmul.f32 %v453, %v453
  %v715 = vmul.f32 %v458, %v458
  %v716 = vmul.f32 %v461, %v461
  %v717 = vmul.f32 %v466, %v466
  %v718 = vmul.f32 %v469, %v469
  %v719 = vmul.f32 %v474, %v474
  %v720 = vmul.f32 %v477, %v477
  %v721 = vmul.f32 %v482, %v482
  %v722 = vmul.f32 %v485, %v485
  %v723 = vmul.f32 %v490, %v490
  %v724 = vmul.f32 %v493, %v493
  %v725 = vmul.f32 %v498, %v498
  %v726 = vmul.f32 %v501, %v501
  %v727 = vmul.f32 %v506, %v506
  %v728 = vmul.f32 %v509, %v509
  %v729 = vmul.f32 %v514, %v514
  %v730 = vmul.f32 %v517, %v517
  %v731 = vmul.f32 %v522, %v522
  %v732 = vmul.f32 %v525, %v525
  %v733 = vmul.f32 %v530, %v530
  %v734 = vmul.f32 %v533, %v533
  %v735 = vmul.f32 %v538, %v538
  %v736 = vmul.f32 %v541, %v541
  %v737 = vmul.f32 %v546, %v546
  %v738 = vmul.f32 %v549, %v549
  %v739 = vmul.f32 %v554, %v554
  %v740 = vmul.f32 %v557, %v557
  %v741 = vmul.f32 %v562, %v562
  %v742 = vmul.f32 %v565, %v565
  %v743 = vmul.f32 %v570, %v570
  %v744 = vmul.f32 %v573, %v573
  %v745 = vmul.f32 %v578, %v578
  %v746 = vmul.f32 %v581, %v581
  %v747 = vmul.f32 %v586, %v586
  %v748 = vmul.f32 %v589, %v589
  %v749 = vmul.f32 %v594, %v594
  %v750 = vmul.f32 %v597, %v597
  %v751 = vmul.f32 %v602, %v602
  %v752 = vmul.f32 %v605, %v605
  %v753 = vmul.f32 %v610, %v610
  %v754 = vmul.f32 %v613, %v613
  %v755 = vmul.f32 %v618, %v618
  %v756 = vmul.f32 %v621, %v621
  %v757 = vadd.f32 %v693, %v694
  %v758 = vadd.f32 %v757, %v695
  %v759 = vadd.f32 %v758, %v696
  %v760 = vadd.f32 %v759, %v697
  %v761 = vadd.f32 %v760, %v698
  %v762 = vadd.f32 %v761, %v699
  %v763 = vadd.f32 %v762, %v700
  %v764 = vadd.f32 %v763, %v701
  %v765 = vadd.f32 %v764, %v702
  %v766 = vadd.f32 %v765, %v703
  %v767 = vadd.f32 %v766, %v704
  %v768 = vadd.f32 %v767, %v705
  %v769 = vadd.f32 %v768, %v706
  %v770 = vadd.f32 %v769, %v707
  %v771 = vadd.f32 %v770, %v708
  %v772 = vadd.f32 %v771, %v709
  %v773 = vadd.f32 %v772, %v710
  %v774 = vadd.f32 %v773, %v711
  %v775 = vadd.f32 %v774, %v712
  %v776 = vadd.f32 %v775, %v713
  %v777 = vadd.f32 %v776, %v714
  %v778 = vadd.f32 %v777, %v715
  %v779 = vadd.f32 %v778, %v716
  %v780 = vadd.f32 %v779, %v717
  %v781 = vadd.f32 %v780, %v718
  %v782 = vadd.f32 %v781, %v719
  %v783 = vadd.f32 %v782, %v720
  %v784 = vadd.f32 %v783, %v721
  %v785 = vadd.f32 %v784, %v722
  %v786 = vadd.f32 %v785, %v723
  %v787 = vadd.f32 %v786, %v724
  %v788 = vadd.f32 %v787, %v725
  %v789 = vadd.f32 %v788, %v726
  %v790 = vadd.f32 %v789, %v727
  %v791 = vadd.f32 %v790, %v728
  %v792 = vadd.f32 %v791, %v729
  %v793 = vadd.f32 %v792, %v730
  %v794 = vadd.f32 %v793, %v731
  %v795 = vadd.f32 %v794, %v732
  %v796 = vadd.f32 %v795, %v733
  %v797 = vadd.f32 %v796, %v734
  %v798 = vadd.f32 %v797, %v735
  %v799 = vadd.f32 %v798, %v736
  %v800 = vadd.f32 %v799, %v737
  %v801 = vadd.f32 %v800, %v738
  %v802 = vadd.f32 %v801, %v739
  %v803 = vadd.f32 %v802, %v740
  %v804 = vadd.f32 %v803, %v741
  %v805 = vadd.f32 %v804, %v742
  %v806 = vadd.f32 %v805, %v743
  %v807 = vadd.f32 %v806, %v744
  %v808 = vadd.f32 %v807, %v745
  %v809 = vadd.f32 %v808, %v746
  %v810 = vadd.f32 %v809, %v747
  %v811 = vadd.f32 %v810, %v748
  %v812 = vadd.f32 %v811, %v749
  %v813 = vadd.f32 %v812, %v750
  %v814 = vadd.f32 %v813, %v751
  %v815 = vadd.f32 %v814, %v752
  %v816 = vadd.f32 %v815, %v753
  %v817 = vadd.f32 %v816, %v754
  %v818 = vadd.f32 %v817, %v755
  %v819 = vadd.f32 %v818, %v756
  %v820 = vrot.slane %v819, 4
  %v821 = vadd.f32 %v819, %v820
  %v822 = vrot.slane %v821, 2
  %v823 = vadd.f32 %v821, %v822
  %v824 = vrot.slane %v823, 1
  %v825 = vadd.f32 %v823, %v824
  %826 = vst [vmem:[%s3] sm:$0xff] %v692
  %827 = vst [vmem:[%s4] sm:$0xff] %v825
  %v828 = vpack.c.bf16 %v373, %v370
  %v829 = vpack.c.bf16 %v381, %v378
  %v830 = vpack.c.bf16 %v389, %v386
  %v831 = vpack.c.bf16 %v397, %v394
  %v832 = vpack.c.bf16 %v405, %v402
  %v833 = vpack.c.bf16 %v413, %v410
  %v834 = vpack.c.bf16 %v421, %v418
  %v835 = vpack.c.bf16 %v429, %v426
  %v836 = vpack.c.bf16 %v437, %v434
  %v837 = vpack.c.bf16 %v445, %v442
  %v838 = vpack.c.bf16 %v453, %v450
  %v839 = vpack.c.bf16 %v461, %v458
  %v840 = vpack.c.bf16 %v469, %v466
  %v841 = vpack.c.bf16 %v477, %v474
  %v842 = vpack.c.bf16 %v485, %v482
  %v843 = vpack.c.bf16 %v493, %v490
  %v844 = vpack.c.bf16 %v501, %v498
  %v845 = vpack.c.bf16 %v509, %v506
  %v846 = vpack.c.bf16 %v517, %v514
  %v847 = vpack.c.bf16 %v525, %v522
  %v848 = vpack.c.bf16 %v533, %v530
  %v849 = vpack.c.bf16 %v541, %v538
  %v850 = vpack.c.bf16 %v549, %v546
  %v851 = vpack.c.bf16 %v557, %v554
  %v852 = vpack.c.bf16 %v565, %v562
  %v853 = vpack.c.bf16 %v573, %v570
  %v854 = vpack.c.bf16 %v581, %v578
  %v855 = vpack.c.bf16 %v589, %v586
  %v856 = vpack.c.bf16 %v597, %v594
  %v857 = vpack.c.bf16 %v605, %v602
  %v858 = vpack.c.bf16 %v613, %v610
  %v859 = vpack.c.bf16 %v621, %v618
  %v892 = vunpack.c.l.b16 %v828
  %v893 = vunpack.c.h.b16 %v828
  %v894 = vunpack.c.l.b16 %v829
  %v895 = vunpack.c.h.b16 %v829
  %v896 = vunpack.c.l.b16 %v830
  %v897 = vunpack.c.h.b16 %v830
  %v898 = vunpack.c.l.b16 %v831
  %v899 = vunpack.c.h.b16 %v831
  %v900 = vunpack.c.l.b16 %v832
  %v901 = vunpack.c.h.b16 %v832
  %v902 = vunpack.c.l.b16 %v833
  %v903 = vunpack.c.h.b16 %v833
  %v904 = vunpack.c.l.b16 %v834
  %v905 = vunpack.c.h.b16 %v834
  %v906 = vunpack.c.l.b16 %v835
  %v907 = vunpack.c.h.b16 %v835
  %v908 = vunpack.c.l.b16 %v836
  %v909 = vunpack.c.h.b16 %v836
  %v910 = vunpack.c.l.b16 %v837
  %v911 = vunpack.c.h.b16 %v837
  %v912 = vunpack.c.l.b16 %v838
  %v913 = vunpack.c.h.b16 %v838
  %v914 = vunpack.c.l.b16 %v839
  %v915 = vunpack.c.h.b16 %v839
  %v916 = vunpack.c.l.b16 %v840
  %v917 = vunpack.c.h.b16 %v840
  %v918 = vunpack.c.l.b16 %v841
  %v919 = vunpack.c.h.b16 %v841
  %v920 = vunpack.c.l.b16 %v842
  %v921 = vunpack.c.h.b16 %v842
  %v922 = vunpack.c.l.b16 %v843
  %v923 = vunpack.c.h.b16 %v843
  %v924 = vunpack.c.l.b16 %v844
  %v925 = vunpack.c.h.b16 %v844
  %v926 = vunpack.c.l.b16 %v845
  %v927 = vunpack.c.h.b16 %v845
  %v928 = vunpack.c.l.b16 %v846
  %v929 = vunpack.c.h.b16 %v846
  %v930 = vunpack.c.l.b16 %v847
  %v931 = vunpack.c.h.b16 %v847
  %v932 = vunpack.c.l.b16 %v848
  %v933 = vunpack.c.h.b16 %v848
  %v934 = vunpack.c.l.b16 %v849
  %v935 = vunpack.c.h.b16 %v849
  %v936 = vunpack.c.l.b16 %v850
  %v937 = vunpack.c.h.b16 %v850
  %v938 = vunpack.c.l.b16 %v851
  %v939 = vunpack.c.h.b16 %v851
  %v940 = vunpack.c.l.b16 %v852
  %v941 = vunpack.c.h.b16 %v852
  %v942 = vunpack.c.l.b16 %v853
  %v943 = vunpack.c.h.b16 %v853
  %v944 = vunpack.c.l.b16 %v854
  %v945 = vunpack.c.h.b16 %v854
  %v946 = vunpack.c.l.b16 %v855
  %v947 = vunpack.c.h.b16 %v855
  %v948 = vunpack.c.l.b16 %v856
  %v949 = vunpack.c.h.b16 %v856
  %v950 = vunpack.c.l.b16 %v857
  %v951 = vunpack.c.h.b16 %v857
  %v952 = vunpack.c.l.b16 %v858
  %v953 = vunpack.c.h.b16 %v858
  %v954 = vunpack.c.l.b16 %v859
  %v955 = vunpack.c.h.b16 %v859
  %v956 = vpack.c.b16 %v892, %v892
  %v957 = vpack.c.b16 %v893, %v893
  %v958 = vpack.c.b16 %v894, %v894
  %v959 = vpack.c.b16 %v895, %v895
  %v960 = vpack.c.b16 %v896, %v896
  %v961 = vpack.c.b16 %v897, %v897
  %v962 = vpack.c.b16 %v898, %v898
  %v963 = vpack.c.b16 %v899, %v899
  %v964 = vpack.c.b16 %v900, %v900
  %v965 = vpack.c.b16 %v901, %v901
  %v966 = vpack.c.b16 %v902, %v902
  %v967 = vpack.c.b16 %v903, %v903
  %v968 = vpack.c.b16 %v904, %v904
  %v969 = vpack.c.b16 %v905, %v905
  %v970 = vpack.c.b16 %v906, %v906
  %v971 = vpack.c.b16 %v907, %v907
  %v972 = vpack.c.b16 %v908, %v908
  %v973 = vpack.c.b16 %v909, %v909
  %v974 = vpack.c.b16 %v910, %v910
  %v975 = vpack.c.b16 %v911, %v911
  %v976 = vpack.c.b16 %v912, %v912
  %v977 = vpack.c.b16 %v913, %v913
  %v978 = vpack.c.b16 %v914, %v914
  %v979 = vpack.c.b16 %v915, %v915
  %v980 = vpack.c.b16 %v916, %v916
  %v981 = vpack.c.b16 %v917, %v917
  %v982 = vpack.c.b16 %v918, %v918
  %v983 = vpack.c.b16 %v919, %v919
  %v984 = vpack.c.b16 %v920, %v920
  %v985 = vpack.c.b16 %v921, %v921
  %v986 = vpack.c.b16 %v922, %v922
  %v987 = vpack.c.b16 %v923, %v923
  %v988 = vpack.c.b16 %v924, %v924
  %v989 = vpack.c.b16 %v925, %v925
  %v990 = vpack.c.b16 %v926, %v926
  %v991 = vpack.c.b16 %v927, %v927
  %v992 = vpack.c.b16 %v928, %v928
  %v993 = vpack.c.b16 %v929, %v929
  %v994 = vpack.c.b16 %v930, %v930
  %v995 = vpack.c.b16 %v931, %v931
  %v996 = vpack.c.b16 %v932, %v932
  %v997 = vpack.c.b16 %v933, %v933
  %v998 = vpack.c.b16 %v934, %v934
  %v999 = vpack.c.b16 %v935, %v935
  %v1000 = vpack.c.b16 %v936, %v936
  %v1001 = vpack.c.b16 %v937, %v937
  %v1002 = vpack.c.b16 %v938, %v938
  %v1003 = vpack.c.b16 %v939, %v939
  %v1004 = vpack.c.b16 %v940, %v940
  %v1005 = vpack.c.b16 %v941, %v941
  %v1006 = vpack.c.b16 %v942, %v942
  %v1007 = vpack.c.b16 %v943, %v943
  %v1008 = vpack.c.b16 %v944, %v944
  %v1009 = vpack.c.b16 %v945, %v945
  %v1010 = vpack.c.b16 %v946, %v946
  %v1011 = vpack.c.b16 %v947, %v947
  %v1012 = vpack.c.b16 %v948, %v948
  %v1013 = vpack.c.b16 %v949, %v949
  %v1014 = vpack.c.b16 %v950, %v950
  %v1015 = vpack.c.b16 %v951, %v951
  %v1016 = vpack.c.b16 %v952, %v952
  %v1017 = vpack.c.b16 %v953, %v953
  %v1018 = vpack.c.b16 %v954, %v954
  %v1019 = vpack.c.b16 %v955, %v955
  %1084 = vst [vmem:[%s2] sm:$0xf] %v956
  %1085 = vst [vmem:[%s2 + $0x4] sm:$0xf] %v957
  %1086 = vst [vmem:[%s2 + $0x8] sm:$0xf] %v958
  %1087 = vst [vmem:[%s2 + $0xc] sm:$0xf] %v959
  %1088 = vst [vmem:[%s2 + $0x10] sm:$0xf] %v960
  %1089 = vst [vmem:[%s2 + $0x14] sm:$0xf] %v961
  %1090 = vst [vmem:[%s2 + $0x18] sm:$0xf] %v962
  %1091 = vst [vmem:[%s2 + $0x1c] sm:$0xf] %v963
  %1092 = vst [vmem:[%s2 + $0x20] sm:$0xf] %v964
  %1093 = vst [vmem:[%s2 + $0x24] sm:$0xf] %v965
  %1094 = vst [vmem:[%s2 + $0x28] sm:$0xf] %v966
  %1095 = vst [vmem:[%s2 + $0x2c] sm:$0xf] %v967
  %1096 = vst [vmem:[%s2 + $0x30] sm:$0xf] %v968
  %1097 = vst [vmem:[%s2 + $0x34] sm:$0xf] %v969
  %1098 = vst [vmem:[%s2 + $0x38] sm:$0xf] %v970
  %1099 = vst [vmem:[%s2 + $0x3c] sm:$0xf] %v971
  %1100 = vst [vmem:[%s2 + $0x40] sm:$0xf] %v972
  %1101 = vst [vmem:[%s2 + $0x44] sm:$0xf] %v973
  %1102 = vst [vmem:[%s2 + $0x48] sm:$0xf] %v974
  %1103 = vst [vmem:[%s2 + $0x4c] sm:$0xf] %v975
  %1104 = vst [vmem:[%s2 + $0x50] sm:$0xf] %v976
  %1105 = vst [vmem:[%s2 + $0x54] sm:$0xf] %v977
  %1106 = vst [vmem:[%s2 + $0x58] sm:$0xf] %v978
  %1107 = vst [vmem:[%s2 + $0x5c] sm:$0xf] %v979
  %1108 = vst [vmem:[%s2 + $0x60] sm:$0xf] %v980
  %1109 = vst [vmem:[%s2 + $0x64] sm:$0xf] %v981
  %1110 = vst [vmem:[%s2 + $0x68] sm:$0xf] %v982
  %1111 = vst [vmem:[%s2 + $0x6c] sm:$0xf] %v983
  %1112 = vst [vmem:[%s2 + $0x70] sm:$0xf] %v984
  %1113 = vst [vmem:[%s2 + $0x74] sm:$0xf] %v985
  %1114 = vst [vmem:[%s2 + $0x78] sm:$0xf] %v986
  %1115 = vst [vmem:[%s2 + $0x7c] sm:$0xf] %v987
  %1116 = vst [vmem:[%s2 + $0x80] sm:$0xf] %v988
  %1117 = vst [vmem:[%s2 + $0x84] sm:$0xf] %v989
  %1118 = vst [vmem:[%s2 + $0x88] sm:$0xf] %v990
  %1119 = vst [vmem:[%s2 + $0x8c] sm:$0xf] %v991
  %1120 = vst [vmem:[%s2 + $0x90] sm:$0xf] %v992
  %1121 = vst [vmem:[%s2 + $0x94] sm:$0xf] %v993
  %1122 = vst [vmem:[%s2 + $0x98] sm:$0xf] %v994
  %1123 = vst [vmem:[%s2 + $0x9c] sm:$0xf] %v995
  %1124 = vst [vmem:[%s2 + $0xa0] sm:$0xf] %v996
  %1125 = vst [vmem:[%s2 + $0xa4] sm:$0xf] %v997
  %1126 = vst [vmem:[%s2 + $0xa8] sm:$0xf] %v998
  %1127 = vst [vmem:[%s2 + $0xac] sm:$0xf] %v999
  %1128 = vst [vmem:[%s2 + $0xb0] sm:$0xf] %v1000
  %1129 = vst [vmem:[%s2 + $0xb4] sm:$0xf] %v1001
  %1130 = vst [vmem:[%s2 + $0xb8] sm:$0xf] %v1002
  %1131 = vst [vmem:[%s2 + $0xbc] sm:$0xf] %v1003
  %1132 = vst [vmem:[%s2 + $0xc0] sm:$0xf] %v1004
  %1133 = vst [vmem:[%s2 + $0xc4] sm:$0xf] %v1005
  %1134 = vst [vmem:[%s2 + $0xc8] sm:$0xf] %v1006
  %1135 = vst [vmem:[%s2 + $0xcc] sm:$0xf] %v1007
  %1136 = vst [vmem:[%s2 + $0xd0] sm:$0xf] %v1008
  %1137 = vst [vmem:[%s2 + $0xd4] sm:$0xf] %v1009
  %1138 = vst [vmem:[%s2 + $0xd8] sm:$0xf] %v1010
  %1139 = vst [vmem:[%s2 + $0xdc] sm:$0xf] %v1011
  %1140 = vst [vmem:[%s2 + $0xe0] sm:$0xf] %v1012
  %1141 = vst [vmem:[%s2 + $0xe4] sm:$0xf] %v1013
  %1142 = vst [vmem:[%s2 + $0xe8] sm:$0xf] %v1014
  %1143 = vst [vmem:[%s2 + $0xec] sm:$0xf] %v1015
  %1144 = vst [vmem:[%s2 + $0xf0] sm:$0xf] %v1016
  %1145 = vst [vmem:[%s2 + $0xf4] sm:$0xf] %v1017
  %1146 = vst [vmem:[%s2 + $0xf8] sm:$0xf] %v1018
  %1147 = vst [vmem:[%s2 + $0xfc] sm:$0xf] %v1019
  // Predicated region
  $region10: #{discriminator_forward.5} parent=0 // pred_check
    _
  $region11: #{discriminator_forward.5} parent=0 // pred_check_branch
    %1149 = sbr.rel (0) target = $region13
  $region12: #{discriminator_forward.5} parent=0 // pred_region
    _
  $region13: #{discriminator_forward.5} parent=0 // pred_fallthru
    _
  // Predicated region
  $region14: #{discriminator_forward.5} parent=0 // pred_check
    _
  $region15: #{discriminator_forward.5} parent=0 // pred_check_branch
    %1151 = sbr.rel (0) target = $region17
  $region16: #{discriminator_forward.5} parent=0 // pred_region
    _
  $region17: #{discriminator_forward.5} parent=0 // pred_fallthru
    _
  // Predicated region
  $region18: #{discriminator_forward.5} parent=0 // pred_check
    _
  $region19: #{discriminator_forward.5} parent=0 // pred_check_branch
    %1153 = sbr.rel (0) target = $region21
  $region20: #{discriminator_forward.5} parent=0 // pred_region
    _
  $region21: #{discriminator_forward.5} parent=0 // pred_fallthru
    _
  // Predicated region
  $region22: #{discriminator_forward.5} parent=0 // pred_check
    _
  $region23: #{discriminator_forward.5} parent=0 // pred_check_branch
    %1155 = sbr.rel (0) target = $region25
  $region24: #{discriminator_forward.5} parent=0 // pred_region
    _
  $region25: #{discriminator_forward.5} parent=0 // pred_fallthru
    _
  // Predicated region
  $region26: #{discriminator_forward.5} parent=0 // pred_check
    _
  $region27: #{discriminator_forward.5} parent=0 // pred_check_branch
    %1157 = sbr.rel (0) target = $region29
  $region28: #{discriminator_forward.5} parent=0 // pred_region
    _
  $region29: #{discriminator_forward.5} parent=0 // pred_fallthru
    _
  // Predicated region
  $region30: #{discriminator_forward.5} parent=0 // pred_check
    _
  $region31: #{discriminator_forward.5} parent=0 // pred_check_branch
    %1159 = sbr.rel (0) target = $region33
  $region32: #{discriminator_forward.5} parent=0 // pred_region
    _
  $region33: #{discriminator_forward.5} parent=0 // pred_fallthru
    _

// kernel: discriminator_forward.6
$region0: #{discriminator_forward.6}
  #allocation0 [shape = 'u32[]', space=smem, size = 0x4, offset = 0x4, fixed_abs, tag = 'smem constant byte address 0x4 - core index']
  #allocation1 [shape = 'u32[144,128]{1,0:T(1,128)}', space=vmem, size = 0x12000, scoped, tag = 'internal scratch']
  %s0 = inlined_call_operand.vmem [shape: bf16[128,256], index: 0, kind: input, shape index: {}]
  %s1 = inlined_call_operand.vmem [shape: bf16[256,128], index: 1, kind: input, shape index: {}]
  %s2 = inlined_call_operand.vmem [shape: bf16[128,128], index: 2, kind: output, shape index: {0}]
  %s3 = inlined_call_operand.vmem [shape: f32[1,8,128], index: 3, kind: output, shape index: {1}]
  %s4 = inlined_call_operand.vmem [shape: f32[1,8,128], index: 4, kind: output, shape index: {2}]
  %5 = xla_tuple %s2, %s3, %s4
  %s6 = sld [smem:[#allocation0]]
  $region34: #{discriminator_forward.6} parent=0
    _
  %s8 = ssub.s32 1, %s6
  %s9 = scalar_select 0, %s8, %s6
  // Predicated region
  $region2: #{discriminator_forward.6} parent=0 // pred_check
    _
  $region3: #{discriminator_forward.6} parent=0 // pred_check_branch
    %11 = sbr.rel (0) target = $region5
  $region4: #{discriminator_forward.6} parent=0 // pred_region
    _
  $region5: #{discriminator_forward.6} parent=0 // pred_fallthru
    _
  // Predicated region
  $region6: #{discriminator_forward.6} parent=0 // pred_check
    _
  $region7: #{discriminator_forward.6} parent=0 // pred_check_branch
    %13 = sbr.rel (0) target = $region9
  $region8: #{discriminator_forward.6} parent=0 // pred_region
    _
  $region9: #{discriminator_forward.6} parent=0 // pred_fallthru
    _
  %v15 = vld [vmem:[%s0] sm:$0xff]
  %v16 = vld [vmem:[%s0 + $0x8] sm:$0xff]
  %v17 = vld [vmem:[%s0 + $0x10] sm:$0xff]
  %v18 = vld [vmem:[%s0 + $0x18] sm:$0xff]
  %v19 = vld [vmem:[%s0 + $0x20] sm:$0xff]
  %v20 = vld [vmem:[%s0 + $0x28] sm:$0xff]
  %v21 = vld [vmem:[%s0 + $0x30] sm:$0xff]
  %v22 = vld [vmem:[%s0 + $0x38] sm:$0xff]
  %v23 = vld [vmem:[%s0 + $0x40] sm:$0xff]
  %v24 = vld [vmem:[%s0 + $0x48] sm:$0xff]
  %v25 = vld [vmem:[%s0 + $0x50] sm:$0xff]
  %v26 = vld [vmem:[%s0 + $0x58] sm:$0xff]
  %v27 = vld [vmem:[%s0 + $0x60] sm:$0xff]
  %v28 = vld [vmem:[%s0 + $0x68] sm:$0xff]
  %v29 = vld [vmem:[%s0 + $0x70] sm:$0xff]
  %v30 = vld [vmem:[%s0 + $0x78] sm:$0xff]
  %v31 = vld [vmem:[%s1] sm:$0xf]
  %v32 = vld [vmem:[%s1 + $0x4] sm:$0xf]
  %v33 = vld [vmem:[%s1 + $0x8] sm:$0xf]
  %v34 = vld [vmem:[%s1 + $0xc] sm:$0xf]
  %v35 = vld [vmem:[%s1 + $0x10] sm:$0xf]
  %v36 = vld [vmem:[%s1 + $0x14] sm:$0xf]
  %v37 = vld [vmem:[%s1 + $0x18] sm:$0xf]
  %v38 = vld [vmem:[%s1 + $0x1c] sm:$0xf]
  %v39 = vld [vmem:[%s1 + $0x20] sm:$0xf]
  %v40 = vld [vmem:[%s1 + $0x24] sm:$0xf]
  %v41 = vld [vmem:[%s1 + $0x28] sm:$0xf]
  %v42 = vld [vmem:[%s1 + $0x2c] sm:$0xf]
  %v43 = vld [vmem:[%s1 + $0x30] sm:$0xf]
  %v44 = vld [vmem:[%s1 + $0x34] sm:$0xf]
  %v45 = vld [vmem:[%s1 + $0x38] sm:$0xf]
  %v46 = vld [vmem:[%s1 + $0x3c] sm:$0xf]
  %v47 = vld [vmem:[%s1 + $0x40] sm:$0xf]
  %v48 = vld [vmem:[%s1 + $0x44] sm:$0xf]
  %v49 = vld [vmem:[%s1 + $0x48] sm:$0xf]
  %v50 = vld [vmem:[%s1 + $0x4c] sm:$0xf]
  %v51 = vld [vmem:[%s1 + $0x50] sm:$0xf]
  %v52 = vld [vmem:[%s1 + $0x54] sm:$0xf]
  %v53 = vld [vmem:[%s1 + $0x58] sm:$0xf]
  %v54 = vld [vmem:[%s1 + $0x5c] sm:$0xf]
  %v55 = vld [vmem:[%s1 + $0x60] sm:$0xf]
  %v56 = vld [vmem:[%s1 + $0x64] sm:$0xf]
  %v57 = vld [vmem:[%s1 + $0x68] sm:$0xf]
  %v58 = vld [vmem:[%s1 + $0x6c] sm:$0xf]
  %v59 = vld [vmem:[%s1 + $0x70] sm:$0xf]
  %v60 = vld [vmem:[%s1 + $0x74] sm:$0xf]
  %v61 = vld [vmem:[%s1 + $0x78] sm:$0xf]
  %v62 = vld [vmem:[%s1 + $0x7c] sm:$0xf]
  %v79 = vunpack.c.l.b16 %v15
  %v80 = vunpack.c.h.b16 %v15
  %v81 = vunpack.c.l.b16 %v16
  %v82 = vunpack.c.h.b16 %v16
  %v83 = vunpack.c.l.b16 %v17
  %v84 = vunpack.c.h.b16 %v17
  %v85 = vunpack.c.l.b16 %v18
  %v86 = vunpack.c.h.b16 %v18
  %v87 = vunpack.c.l.b16 %v19
  %v88 = vunpack.c.h.b16 %v19
  %v89 = vunpack.c.l.b16 %v20
  %v90 = vunpack.c.h.b16 %v20
  %v91 = vunpack.c.l.b16 %v21
  %v92 = vunpack.c.h.b16 %v21
  %v93 = vunpack.c.l.b16 %v22
  %v94 = vunpack.c.h.b16 %v22
  %v95 = vunpack.c.l.b16 %v23
  %v96 = vunpack.c.h.b16 %v23
  %v97 = vunpack.c.l.b16 %v24
  %v98 = vunpack.c.h.b16 %v24
  %v99 = vunpack.c.l.b16 %v25
  %v100 = vunpack.c.h.b16 %v25
  %v101 = vunpack.c.l.b16 %v26
  %v102 = vunpack.c.h.b16 %v26
  %v103 = vunpack.c.l.b16 %v27
  %v104 = vunpack.c.h.b16 %v27
  %v105 = vunpack.c.l.b16 %v28
  %v106 = vunpack.c.h.b16 %v28
  %v107 = vunpack.c.l.b16 %v29
  %v108 = vunpack.c.h.b16 %v29
  %v109 = vunpack.c.l.b16 %v30
  %v110 = vunpack.c.h.b16 %v30
  %v111 = vpack.c.b16 %v81, %v79
  %v112 = vpack.c.b16 %v82, %v80
  %v113 = vpack.c.b16 %v85, %v83
  %v114 = vpack.c.b16 %v86, %v84
  %v115 = vpack.c.b16 %v89, %v87
  %v116 = vpack.c.b16 %v90, %v88
  %v117 = vpack.c.b16 %v93, %v91
  %v118 = vpack.c.b16 %v94, %v92
  %v119 = vpack.c.b16 %v97, %v95
  %v120 = vpack.c.b16 %v98, %v96
  %v121 = vpack.c.b16 %v101, %v99
  %v122 = vpack.c.b16 %v102, %v100
  %v123 = vpack.c.b16 %v105, %v103
  %v124 = vpack.c.b16 %v106, %v104
  %v125 = vpack.c.b16 %v109, %v107
  %v126 = vpack.c.b16 %v110, %v108
  %v175 = vunpack.c.l.b16 %v31
  %v176 = vunpack.c.l.b16 %v32
  %v177 = vunpack.c.l.b16 %v33
  %v178 = vunpack.c.l.b16 %v34
  %v179 = vunpack.c.l.b16 %v35
  %v180 = vunpack.c.l.b16 %v36
  %v181 = vunpack.c.l.b16 %v37
  %v182 = vunpack.c.l.b16 %v38
  %v183 = vunpack.c.l.b16 %v39
  %v184 = vunpack.c.l.b16 %v40
  %v185 = vunpack.c.l.b16 %v41
  %v186 = vunpack.c.l.b16 %v42
  %v187 = vunpack.c.l.b16 %v43
  %v188 = vunpack.c.l.b16 %v44
  %v189 = vunpack.c.l.b16 %v45
  %v190 = vunpack.c.l.b16 %v46
  %v191 = vunpack.c.l.b16 %v47
  %v192 = vunpack.c.l.b16 %v48
  %v193 = vunpack.c.l.b16 %v49
  %v194 = vunpack.c.l.b16 %v50
  %v195 = vunpack.c.l.b16 %v51
  %v196 = vunpack.c.l.b16 %v52
  %v197 = vunpack.c.l.b16 %v53
  %v198 = vunpack.c.l.b16 %v54
  %v199 = vunpack.c.l.b16 %v55
  %v200 = vunpack.c.l.b16 %v56
  %v201 = vunpack.c.l.b16 %v57
  %v202 = vunpack.c.l.b16 %v58
  %v203 = vunpack.c.l.b16 %v59
  %v204 = vunpack.c.l.b16 %v60
  %v205 = vunpack.c.l.b16 %v61
  %v206 = vunpack.c.l.b16 %v62
  %v207 = vpack.c.b16 %v176, %v175
  %v208 = vpack.c.b16 %v178, %v177
  %v209 = vpack.c.b16 %v180, %v179
  %v210 = vpack.c.b16 %v182, %v181
  %v211 = vpack.c.b16 %v184, %v183
  %v212 = vpack.c.b16 %v186, %v185
  %v213 = vpack.c.b16 %v188, %v187
  %v214 = vpack.c.b16 %v190, %v189
  %v215 = vpack.c.b16 %v192, %v191
  %v216 = vpack.c.b16 %v194, %v193
  %v217 = vpack.c.b16 %v196, %v195
  %v218 = vpack.c.b16 %v198, %v197
  %v219 = vpack.c.b16 %v200, %v199
  %v220 = vpack.c.b16 %v202, %v201
  %v221 = vpack.c.b16 %v204, %v203
  %v222 = vpack.c.b16 %v206, %v205
  %239 = vmatprep.subr.bf16.mxu0 0
  %240 = vmatpush1.bf16.msra.mxu0 %v207
  %241 = vmatprep.subr.bf16.mxu0 0
  %242 = vmatpush1.bf16.msra.mxu0 %v208
  %243 = vmatprep.subr.bf16.mxu0 0
  %244 = vmatpush1.bf16.msra.mxu0 %v209
  %245 = vmatprep.subr.bf16.mxu0 0
  %246 = vmatpush1.bf16.msra.mxu0 %v210
  %247 = vmatprep.subr.bf16.mxu0 0
  %248 = vmatpush1.bf16.msra.mxu0 %v211
  %249 = vmatprep.subr.bf16.mxu0 0
  %250 = vmatpush1.bf16.msra.mxu0 %v212
  %251 = vmatprep.subr.bf16.mxu0 0
  %252 = vmatpush1.bf16.msra.mxu0 %v213
  %253 = vmatprep.subr.bf16.mxu0 0
  %254 = vmatpush1.bf16.msra.mxu0 %v214
  %255 = vmatprep.subr.bf16.mxu0 0
  %256 = vmatpush1.bf16.msra.mxu0 %v215
  %257 = vmatprep.subr.bf16.mxu0 0
  %258 = vmatpush1.bf16.msra.mxu0 %v216
  %259 = vmatprep.subr.bf16.mxu0 0
  %260 = vmatpush1.bf16.msra.mxu0 %v217
  %261 = vmatprep.subr.bf16.mxu0 0
  %262 = vmatpush1.bf16.msra.mxu0 %v218
  %263 = vmatprep.subr.bf16.mxu0 0
  %264 = vmatpush1.bf16.msra.mxu0 %v219
  %265 = vmatprep.subr.bf16.mxu0 0
  %266 = vmatpush1.bf16.msra.mxu0 %v220
  %267 = vmatprep.subr.bf16.mxu0 0
  %268 = vmatpush1.bf16.msra.mxu0 %v221
  %269 = vmatprep.subr.bf16.mxu0 0
  %270 = vmatpush1.bf16.msra.mxu0 %v222
  %271 = vmatprep.mubr.bf16.mxu0 %v112
  %272 = vmatmul.mubr.bf16.gmra.mrb[0].mxu0 %v111
  %v273 = vpop.f32.mrb[0].mxu0
  %v274 = vadd.f32 0.0, %v273
  %v275 = vpop.f32.mrb[0].mxu0
  %v276 = vpop.f32.mrb[0].mxu0
  %v277 = vadd.f32 0.0, %v276
  %v278 = vpop.f32.mrb[0].mxu0
  %279 = vmatprep.mubr.bf16.mxu0 %v114
  %280 = vmatmul.mubr.bf16.gmra.mrb[0].mxu0 %v113
  %v281 = vpop.f32.mrb[0].mxu0
  %v282 = vadd.f32 0.0, %v281
  %v283 = vpop.f32.mrb[0].mxu0
  %v284 = vpop.f32.mrb[0].mxu0
  %v285 = vadd.f32 0.0, %v284
  %v286 = vpop.f32.mrb[0].mxu0
  %287 = vmatprep.mubr.bf16.mxu0 %v116
  %288 = vmatmul.mubr.bf16.gmra.mrb[0].mxu0 %v115
  %v289 = vpop.f32.mrb[0].mxu0
  %v290 = vadd.f32 0.0, %v289
  %v291 = vpop.f32.mrb[0].mxu0
  %v292 = vpop.f32.mrb[0].mxu0
  %v293 = vadd.f32 0.0, %v292
  %v294 = vpop.f32.mrb[0].mxu0
  %295 = vmatprep.mubr.bf16.mxu0 %v118
  %296 = vmatmul.mubr.bf16.gmra.mrb[0].mxu0 %v117
  %v297 = vpop.f32.mrb[0].mxu0
  %v298 = vadd.f32 0.0, %v297
  %v299 = vpop.f32.mrb[0].mxu0
  %v300 = vpop.f32.mrb[0].mxu0
  %v301 = vadd.f32 0.0, %v300
  %v302 = vpop.f32.mrb[0].mxu0
  %303 = vmatprep.mubr.bf16.mxu0 %v120
  %304 = vmatmul.mubr.bf16.gmra.mrb[0].mxu0 %v119
  %v305 = vpop.f32.mrb[0].mxu0
  %v306 = vadd.f32 0.0, %v305
  %v307 = vpop.f32.mrb[0].mxu0
  %v308 = vpop.f32.mrb[0].mxu0
  %v309 = vadd.f32 0.0, %v308
  %v310 = vpop.f32.mrb[0].mxu0
  %311 = vmatprep.mubr.bf16.mxu0 %v122
  %312 = vmatmul.mubr.bf16.gmra.mrb[0].mxu0 %v121
  %v313 = vpop.f32.mrb[0].mxu0
  %v314 = vadd.f32 0.0, %v313
  %v315 = vpop.f32.mrb[0].mxu0
  %v316 = vpop.f32.mrb[0].mxu0
  %v317 = vadd.f32 0.0, %v316
  %v318 = vpop.f32.mrb[0].mxu0
  %319 = vmatprep.mubr.bf16.mxu0 %v124
  %320 = vmatmul.mubr.bf16.gmra.mrb[0].mxu0 %v123
  %v321 = vpop.f32.mrb[0].mxu0
  %v322 = vadd.f32 0.0, %v321
  %v323 = vpop.f32.mrb[0].mxu0
  %v324 = vpop.f32.mrb[0].mxu0
  %v325 = vadd.f32 0.0, %v324
  %v326 = vpop.f32.mrb[0].mxu0
  %327 = vmatprep.mubr.bf16.mxu0 %v126
  %328 = vmatmul.mubr.bf16.gmra.mrb[0].mxu0 %v125
  %v329 = vpop.f32.mrb[0].mxu0
  %v330 = vadd.f32 0.0, %v329
  %v331 = vpop.f32.mrb[0].mxu0
  %v332 = vpop.f32.mrb[0].mxu0
  %v333 = vadd.f32 0.0, %v332
  %v334 = vpop.f32.mrb[0].mxu0
  %335 = vdwg.mxu0
  %v336 = vadd.f32 %v274, %v277
  %v337 = vadd.f32 %v336, %v282
  %v338 = vadd.f32 %v337, %v285
  %v339 = vadd.f32 %v338, %v290
  %v340 = vadd.f32 %v339, %v293
  %v341 = vadd.f32 %v340, %v298
  %v342 = vadd.f32 %v341, %v301
  %v343 = vadd.f32 %v342, %v306
  %v344 = vadd.f32 %v343, %v309
  %v345 = vadd.f32 %v344, %v314
  %v346 = vadd.f32 %v345, %v317
  %v347 = vadd.f32 %v346, %v322
  %v348 = vadd.f32 %v347, %v325
  %v349 = vadd.f32 %v348, %v330
  %v350 = vadd.f32 %v349, %v333
  %v351 = vrot.slane %v350, 4
  %v352 = vadd.f32 %v350, %v351
  %v353 = vrot.slane %v352, 2
  %v354 = vadd.f32 %v352, %v353
  %v355 = vrot.slane %v354, 1
  %v356 = vadd.f32 %v354, %v355
  %v357 = vmul.f32 %v274, %v274
  %v358 = vmul.f32 %v277, %v277
  %v359 = vmul.f32 %v282, %v282
  %v360 = vmul.f32 %v285, %v285
  %v361 = vmul.f32 %v290, %v290
  %v362 = vmul.f32 %v293, %v293
  %v363 = vmul.f32 %v298, %v298
  %v364 = vmul.f32 %v301, %v301
  %v365 = vmul.f32 %v306, %v306
  %v366 = vmul.f32 %v309, %v309
  %v367 = vmul.f32 %v314, %v314
  %v368 = vmul.f32 %v317, %v317
  %v369 = vmul.f32 %v322, %v322
  %v370 = vmul.f32 %v325, %v325
  %v371 = vmul.f32 %v330, %v330
  %v372 = vmul.f32 %v333, %v333
  %v373 = vadd.f32 %v357, %v358
  %v374 = vadd.f32 %v373, %v359
  %v375 = vadd.f32 %v374, %v360
  %v376 = vadd.f32 %v375, %v361
  %v377 = vadd.f32 %v376, %v362
  %v378 = vadd.f32 %v377, %v363
  %v379 = vadd.f32 %v378, %v364
  %v380 = vadd.f32 %v379, %v365
  %v381 = vadd.f32 %v380, %v366
  %v382 = vadd.f32 %v381, %v367
  %v383 = vadd.f32 %v382, %v368
  %v384 = vadd.f32 %v383, %v369
  %v385 = vadd.f32 %v384, %v370
  %v386 = vadd.f32 %v385, %v371
  %v387 = vadd.f32 %v386, %v372
  %v388 = vrot.slane %v387, 4
  %v389 = vadd.f32 %v387, %v388
  %v390 = vrot.slane %v389, 2
  %v391 = vadd.f32 %v389, %v390
  %v392 = vrot.slane %v391, 1
  %v393 = vadd.f32 %v391, %v392
  %394 = vst [vmem:[%s3] sm:$0xff] %v356
  %395 = vst [vmem:[%s4] sm:$0xff] %v393
  %v396 = vpack.c.bf16 %v277, %v274
  %v397 = vpack.c.bf16 %v285, %v282
  %v398 = vpack.c.bf16 %v293, %v290
  %v399 = vpack.c.bf16 %v301, %v298
  %v400 = vpack.c.bf16 %v309, %v306
  %v401 = vpack.c.bf16 %v317, %v314
  %v402 = vpack.c.bf16 %v325, %v322
  %v403 = vpack.c.bf16 %v333, %v330
  %v412 = vunpack.c.l.b16 %v396
  %v413 = vunpack.c.h.b16 %v396
  %v414 = vunpack.c.l.b16 %v397
  %v415 = vunpack.c.h.b16 %v397
  %v416 = vunpack.c.l.b16 %v398
  %v417 = vunpack.c.h.b16 %v398
  %v418 = vunpack.c.l.b16 %v399
  %v419 = vunpack.c.h.b16 %v399
  %v420 = vunpack.c.l.b16 %v400
  %v421 = vunpack.c.h.b16 %v400
  %v422 = vunpack.c.l.b16 %v401
  %v423 = vunpack.c.h.b16 %v401
  %v424 = vunpack.c.l.b16 %v402
  %v425 = vunpack.c.h.b16 %v402
  %v426 = vunpack.c.l.b16 %v403
  %v427 = vunpack.c.h.b16 %v403
  %v428 = vpack.c.b16 %v412, %v412
  %v429 = vpack.c.b16 %v413, %v413
  %v430 = vpack.c.b16 %v414, %v414
  %v431 = vpack.c.b16 %v415, %v415
  %v432 = vpack.c.b16 %v416, %v416
  %v433 = vpack.c.b16 %v417, %v417
  %v434 = vpack.c.b16 %v418, %v418
  %v435 = vpack.c.b16 %v419, %v419
  %v436 = vpack.c.b16 %v420, %v420
  %v437 = vpack.c.b16 %v421, %v421
  %v438 = vpack.c.b16 %v422, %v422
  %v439 = vpack.c.b16 %v423, %v423
  %v440 = vpack.c.b16 %v424, %v424
  %v441 = vpack.c.b16 %v425, %v425
  %v442 = vpack.c.b16 %v426, %v426
  %v443 = vpack.c.b16 %v427, %v427
  %460 = vst [vmem:[%s2] sm:$0xf] %v428
  %461 = vst [vmem:[%s2 + $0x4] sm:$0xf] %v429
  %462 = vst [vmem:[%s2 + $0x8] sm:$0xf] %v430
  %463 = vst [vmem:[%s2 + $0xc] sm:$0xf] %v431
  %464 = vst [vmem:[%s2 + $0x10] sm:$0xf] %v432
  %465 = vst [vmem:[%s2 + $0x14] sm:$0xf] %v433
  %466 = vst [vmem:[%s2 + $0x18] sm:$0xf] %v434
  %467 = vst [vmem:[%s2 + $0x1c] sm:$0xf] %v435
  %468 = vst [vmem:[%s2 + $0x20] sm:$0xf] %v436
  %469 = vst [vmem:[%s2 + $0x24] sm:$0xf] %v437
  %470 = vst [vmem:[%s2 + $0x28] sm:$0xf] %v438
  %471 = vst [vmem:[%s2 + $0x2c] sm:$0xf] %v439
  %472 = vst [vmem:[%s2 + $0x30] sm:$0xf] %v440
  %473 = vst [vmem:[%s2 + $0x34] sm:$0xf] %v441
  %474 = vst [vmem:[%s2 + $0x38] sm:$0xf] %v442
  %475 = vst [vmem:[%s2 + $0x3c] sm:$0xf] %v443
  // Predicated region
  $region10: #{discriminator_forward.6} parent=0 // pred_check
    _
  $region11: #{discriminator_forward.6} parent=0 // pred_check_branch
    %477 = sbr.rel (0) target = $region13
  $region12: #{discriminator_forward.6} parent=0 // pred_region
    _
  $region13: #{discriminator_forward.6} parent=0 // pred_fallthru
    _
  // Predicated region
  $region14: #{discriminator_forward.6} parent=0 // pred_check
    _
  $region15: #{discriminator_forward.6} parent=0 // pred_check_branch
    %479 = sbr.rel (0) target = $region17
  $region16: #{discriminator_forward.6} parent=0 // pred_region
    _
  $region17: #{discriminator_forward.6} parent=0 // pred_fallthru
    _
  // Predicated region
  $region18: #{discriminator_forward.6} parent=0 // pred_check
    _
  $region19: #{discriminator_forward.6} parent=0 // pred_check_branch
    %481 = sbr.rel (0) target = $region21
  $region20: #{discriminator_forward.6} parent=0 // pred_region
    _
  $region21: #{discriminator_forward.6} parent=0 // pred_fallthru
    _
  // Predicated region
  $region22: #{discriminator_forward.6} parent=0 // pred_check
    _
  $region23: #{discriminator_forward.6} parent=0 // pred_check_branch
    %483 = sbr.rel (0) target = $region25
  $region24: #{discriminator_forward.6} parent=0 // pred_region
    _
  $region25: #{discriminator_forward.6} parent=0 // pred_fallthru
    _
  // Predicated region
  $region26: #{discriminator_forward.6} parent=0 // pred_check
    _
  $region27: #{discriminator_forward.6} parent=0 // pred_check_branch
    %485 = sbr.rel (0) target = $region29
  $region28: #{discriminator_forward.6} parent=0 // pred_region
    _
  $region29: #{discriminator_forward.6} parent=0 // pred_fallthru
    _
  // Predicated region
  $region30: #{discriminator_forward.6} parent=0 // pred_check
    _
  $region31: #{discriminator_forward.6} parent=0 // pred_check_branch
    %487 = sbr.rel (0) target = $region33
  $region32: #{discriminator_forward.6} parent=0 // pred_region
    _
  $region33: #{discriminator_forward.6} parent=0 // pred_fallthru
    _

// kernel: discriminator_forward.7
$region0: #{discriminator_forward.7}
  #allocation0 [shape = 'u32[]', space=smem, size = 0x4, offset = 0x4, fixed_abs, tag = 'smem constant byte address 0x4 - core index']
  #allocation1 [shape = 'u32[144,128]{1,0:T(1,128)}', space=vmem, size = 0x12000, scoped, tag = 'internal scratch']
  %s0 = inlined_call_operand.vmem [shape: bf16[32,512], index: 0, kind: input, shape index: {}]
  %s1 = inlined_call_operand.vmem [shape: bf16[512,128], index: 1, kind: input, shape index: {}]
  %s2 = inlined_call_operand.vmem [shape: bf16[32,128], index: 2, kind: output, shape index: {0}]
  %s3 = inlined_call_operand.vmem [shape: f32[1,8,128], index: 3, kind: output, shape index: {1}]
  %s4 = inlined_call_operand.vmem [shape: f32[1,8,128], index: 4, kind: output, shape index: {2}]
  %5 = xla_tuple %s2, %s3, %s4
  %s6 = sld [smem:[#allocation0]]
  $region34: #{discriminator_forward.7} parent=0
    _
  %s8 = ssub.s32 1, %s6
  %s9 = scalar_select 0, %s8, %s6
  // Predicated region
  $region2: #{discriminator_forward.7} parent=0 // pred_check
    _
  $region3: #{discriminator_forward.7} parent=0 // pred_check_branch
    %11 = sbr.rel (0) target = $region5
  $region4: #{discriminator_forward.7} parent=0 // pred_region
    _
  $region5: #{discriminator_forward.7} parent=0 // pred_fallthru
    _
  // Predicated region
  $region6: #{discriminator_forward.7} parent=0 // pred_check
    _
  $region7: #{discriminator_forward.7} parent=0 // pred_check_branch
    %13 = sbr.rel (0) target = $region9
  $region8: #{discriminator_forward.7} parent=0 // pred_region
    _
  $region9: #{discriminator_forward.7} parent=0 // pred_fallthru
    _
  %v15 = vld [vmem:[%s0] sm:$0xff]
  %v16 = vld [vmem:[%s0 + $0x8] sm:$0xff]
  %v17 = vld [vmem:[%s0 + $0x10] sm:$0xff]
  %v18 = vld [vmem:[%s0 + $0x18] sm:$0xff]
  %v19 = vld [vmem:[%s0 + $0x20] sm:$0xff]
  %v20 = vld [vmem:[%s0 + $0x28] sm:$0xff]
  %v21 = vld [vmem:[%s0 + $0x30] sm:$0xff]
  %v22 = vld [vmem:[%s0 + $0x38] sm:$0xff]
  %v23 = vld [vmem:[%s1] sm:$0xf]
  %v24 = vld [vmem:[%s1 + $0x4] sm:$0xf]
  %v25 = vld [vmem:[%s1 + $0x8] sm:$0xf]
  %v26 = vld [vmem:[%s1 + $0xc] sm:$0xf]
  %v27 = vld [vmem:[%s1 + $0x10] sm:$0xf]
  %v28 = vld [vmem:[%s1 + $0x14] sm:$0xf]
  %v29 = vld [vmem:[%s1 + $0x18] sm:$0xf]
  %v30 = vld [vmem:[%s1 + $0x1c] sm:$0xf]
  %v31 = vld [vmem:[%s1 + $0x20] sm:$0xf]
  %v32 = vld [vmem:[%s1 + $0x24] sm:$0xf]
  %v33 = vld [vmem:[%s1 + $0x28] sm:$0xf]
  %v34 = vld [vmem:[%s1 + $0x2c] sm:$0xf]
  %v35 = vld [vmem:[%s1 + $0x30] sm:$0xf]
  %v36 = vld [vmem:[%s1 + $0x34] sm:$0xf]
  %v37 = vld [vmem:[%s1 + $0x38] sm:$0xf]
  %v38 = vld [vmem:[%s1 + $0x3c] sm:$0xf]
  %v39 = vld [vmem:[%s1 + $0x40] sm:$0xf]
  %v40 = vld [vmem:[%s1 + $0x44] sm:$0xf]
  %v41 = vld [vmem:[%s1 + $0x48] sm:$0xf]
  %v42 = vld [vmem:[%s1 + $0x4c] sm:$0xf]
  %v43 = vld [vmem:[%s1 + $0x50] sm:$0xf]
  %v44 = vld [vmem:[%s1 + $0x54] sm:$0xf]
  %v45 = vld [vmem:[%s1 + $0x58] sm:$0xf]
  %v46 = vld [vmem:[%s1 + $0x5c] sm:$0xf]
  %v47 = vld [vmem:[%s1 + $0x60] sm:$0xf]
  %v48 = vld [vmem:[%s1 + $0x64] sm:$0xf]
  %v49 = vld [vmem:[%s1 + $0x68] sm:$0xf]
  %v50 = vld [vmem:[%s1 + $0x6c] sm:$0xf]
  %v51 = vld [vmem:[%s1 + $0x70] sm:$0xf]
  %v52 = vld [vmem:[%s1 + $0x74] sm:$0xf]
  %v53 = vld [vmem:[%s1 + $0x78] sm:$0xf]
  %v54 = vld [vmem:[%s1 + $0x7c] sm:$0xf]
  %v55 = vld [vmem:[%s1 + $0x80] sm:$0xf]
  %v56 = vld [vmem:[%s1 + $0x84] sm:$0xf]
  %v57 = vld [vmem:[%s1 + $0x88] sm:$0xf]
  %v58 = vld [vmem:[%s1 + $0x8c] sm:$0xf]
  %v59 = vld [vmem:[%s1 + $0x90] sm:$0xf]
  %v60 = vld [vmem:[%s1 + $0x94] sm:$0xf]
  %v61 = vld [vmem:[%s1 + $0x98] sm:$0xf]
  %v62 = vld [vmem:[%s1 + $0x9c] sm:$0xf]
  %v63 = vld [vmem:[%s1 + $0xa0] sm:$0xf]
  %v64 = vld [vmem:[%s1 + $0xa4] sm:$0xf]
  %v65 = vld [vmem:[%s1 + $0xa8] sm:$0xf]
  %v66 = vld [vmem:[%s1 + $0xac] sm:$0xf]
  %v67 = vld [vmem:[%s1 + $0xb0] sm:$0xf]
  %v68 = vld [vmem:[%s1 + $0xb4] sm:$0xf]
  %v69 = vld [vmem:[%s1 + $0xb8] sm:$0xf]
  %v70 = vld [vmem:[%s1 + $0xbc] sm:$0xf]
  %v71 = vld [vmem:[%s1 + $0xc0] sm:$0xf]
  %v72 = vld [vmem:[%s1 + $0xc4] sm:$0xf]
  %v73 = vld [vmem:[%s1 + $0xc8] sm:$0xf]
  %v74 = vld [vmem:[%s1 + $0xcc] sm:$0xf]
  %v75 = vld [vmem:[%s1 + $0xd0] sm:$0xf]
  %v76 = vld [vmem:[%s1 + $0xd4] sm:$0xf]
  %v77 = vld [vmem:[%s1 + $0xd8] sm:$0xf]
  %v78 = vld [vmem:[%s1 + $0xdc] sm:$0xf]
  %v79 = vld [vmem:[%s1 + $0xe0] sm:$0xf]
  %v80 = vld [vmem:[%s1 + $0xe4] sm:$0xf]
  %v81 = vld [vmem:[%s1 + $0xe8] sm:$0xf]
  %v82 = vld [vmem:[%s1 + $0xec] sm:$0xf]
  %v83 = vld [vmem:[%s1 + $0xf0] sm:$0xf]
  %v84 = vld [vmem:[%s1 + $0xf4] sm:$0xf]
  %v85 = vld [vmem:[%s1 + $0xf8] sm:$0xf]
  %v86 = vld [vmem:[%s1 + $0xfc] sm:$0xf]
  %v95 = vunpack.c.l.b16 %v15
  %v96 = vunpack.c.h.b16 %v15
  %v97 = vunpack.c.l.b16 %v16
  %v98 = vunpack.c.h.b16 %v16
  %v99 = vunpack.c.l.b16 %v17
  %v100 = vunpack.c.h.b16 %v17
  %v101 = vunpack.c.l.b16 %v18
  %v102 = vunpack.c.h.b16 %v18
  %v103 = vunpack.c.l.b16 %v19
  %v104 = vunpack.c.h.b16 %v19
  %v105 = vunpack.c.l.b16 %v20
  %v106 = vunpack.c.h.b16 %v20
  %v107 = vunpack.c.l.b16 %v21
  %v108 = vunpack.c.h.b16 %v21
  %v109 = vunpack.c.l.b16 %v22
  %v110 = vunpack.c.h.b16 %v22
  %v111 = vpack.c.b16 %v99, %v95
  %v112 = vpack.c.b16 %v100, %v96
  %v113 = vpack.c.b16 %v101, %v97
  %v114 = vpack.c.b16 %v102, %v98
  %v115 = vpack.c.b16 %v107, %v103
  %v116 = vpack.c.b16 %v108, %v104
  %v117 = vpack.c.b16 %v109, %v105
  %v118 = vpack.c.b16 %v110, %v106
  %v191 = vunpack.c.l.b16 %v23
  %v192 = vunpack.c.l.b16 %v24
  %v193 = vunpack.c.l.b16 %v25
  %v194 = vunpack.c.l.b16 %v26
  %v195 = vunpack.c.l.b16 %v27
  %v196 = vunpack.c.l.b16 %v28
  %v197 = vunpack.c.l.b16 %v29
  %v198 = vunpack.c.l.b16 %v30
  %v199 = vunpack.c.l.b16 %v31
  %v200 = vunpack.c.l.b16 %v32
  %v201 = vunpack.c.l.b16 %v33
  %v202 = vunpack.c.l.b16 %v34
  %v203 = vunpack.c.l.b16 %v35
  %v204 = vunpack.c.l.b16 %v36
  %v205 = vunpack.c.l.b16 %v37
  %v206 = vunpack.c.l.b16 %v38
  %v207 = vunpack.c.l.b16 %v39
  %v208 = vunpack.c.l.b16 %v40
  %v209 = vunpack.c.l.b16 %v41
  %v210 = vunpack.c.l.b16 %v42
  %v211 = vunpack.c.l.b16 %v43
  %v212 = vunpack.c.l.b16 %v44
  %v213 = vunpack.c.l.b16 %v45
  %v214 = vunpack.c.l.b16 %v46
  %v215 = vunpack.c.l.b16 %v47
  %v216 = vunpack.c.l.b16 %v48
  %v217 = vunpack.c.l.b16 %v49
  %v218 = vunpack.c.l.b16 %v50
  %v219 = vunpack.c.l.b16 %v51
  %v220 = vunpack.c.l.b16 %v52
  %v221 = vunpack.c.l.b16 %v53
  %v222 = vunpack.c.l.b16 %v54
  %v223 = vunpack.c.l.b16 %v55
  %v224 = vunpack.c.l.b16 %v56
  %v225 = vunpack.c.l.b16 %v57
  %v226 = vunpack.c.l.b16 %v58
  %v227 = vunpack.c.l.b16 %v59
  %v228 = vunpack.c.l.b16 %v60
  %v229 = vunpack.c.l.b16 %v61
  %v230 = vunpack.c.l.b16 %v62
  %v231 = vunpack.c.l.b16 %v63
  %v232 = vunpack.c.l.b16 %v64
  %v233 = vunpack.c.l.b16 %v65
  %v234 = vunpack.c.l.b16 %v66
  %v235 = vunpack.c.l.b16 %v67
  %v236 = vunpack.c.l.b16 %v68
  %v237 = vunpack.c.l.b16 %v69
  %v238 = vunpack.c.l.b16 %v70
  %v239 = vunpack.c.l.b16 %v71
  %v240 = vunpack.c.l.b16 %v72
  %v241 = vunpack.c.l.b16 %v73
  %v242 = vunpack.c.l.b16 %v74
  %v243 = vunpack.c.l.b16 %v75
  %v244 = vunpack.c.l.b16 %v76
  %v245 = vunpack.c.l.b16 %v77
  %v246 = vunpack.c.l.b16 %v78
  %v247 = vunpack.c.l.b16 %v79
  %v248 = vunpack.c.l.b16 %v80
  %v249 = vunpack.c.l.b16 %v81
  %v250 = vunpack.c.l.b16 %v82
  %v251 = vunpack.c.l.b16 %v83
  %v252 = vunpack.c.l.b16 %v84
  %v253 = vunpack.c.l.b16 %v85
  %v254 = vunpack.c.l.b16 %v86
  %v255 = vpack.c.b16 %v192, %v191
  %v256 = vpack.c.b16 %v194, %v193
  %v257 = vpack.c.b16 %v196, %v195
  %v258 = vpack.c.b16 %v198, %v197
  %v259 = vpack.c.b16 %v200, %v199
  %v260 = vpack.c.b16 %v202, %v201
  %v261 = vpack.c.b16 %v204, %v203
  %v262 = vpack.c.b16 %v206, %v205
  %v263 = vpack.c.b16 %v208, %v207
  %v264 = vpack.c.b16 %v210, %v209
  %v265 = vpack.c.b16 %v212, %v211
  %v266 = vpack.c.b16 %v214, %v213
  %v267 = vpack.c.b16 %v216, %v215
  %v268 = vpack.c.b16 %v218, %v217
  %v269 = vpack.c.b16 %v220, %v219
  %v270 = vpack.c.b16 %v222, %v221
  %v271 = vpack.c.b16 %v224, %v223
  %v272 = vpack.c.b16 %v226, %v225
  %v273 = vpack.c.b16 %v228, %v227
  %v274 = vpack.c.b16 %v230, %v229
  %v275 = vpack.c.b16 %v232, %v231
  %v276 = vpack.c.b16 %v234, %v233
  %v277 = vpack.c.b16 %v236, %v235
  %v278 = vpack.c.b16 %v238, %v237
  %v279 = vpack.c.b16 %v240, %v239
  %v280 = vpack.c.b16 %v242, %v241
  %v281 = vpack.c.b16 %v244, %v243
  %v282 = vpack.c.b16 %v246, %v245
  %v283 = vpack.c.b16 %v248, %v247
  %v284 = vpack.c.b16 %v250, %v249
  %v285 = vpack.c.b16 %v252, %v251
  %v286 = vpack.c.b16 %v254, %v253
  %319 = vmatprep.subr.bf16.mxu0 0
  %320 = vmatpush1.bf16.msra.mxu0 %v255
  %321 = vmatprep.subr.bf16.mxu0 0
  %322 = vmatpush1.bf16.msra.mxu0 %v256
  %323 = vmatprep.subr.bf16.mxu0 0
  %324 = vmatpush1.bf16.msra.mxu0 %v257
  %325 = vmatprep.subr.bf16.mxu0 0
  %326 = vmatpush1.bf16.msra.mxu0 %v258
  %327 = vmatprep.subr.bf16.mxu0 0
  %328 = vmatpush1.bf16.msra.mxu0 %v259
  %329 = vmatprep.subr.bf16.mxu0 0
  %330 = vmatpush1.bf16.msra.mxu0 %v260
  %331 = vmatprep.subr.bf16.mxu0 0
  %332 = vmatpush1.bf16.msra.mxu0 %v261
  %333 = vmatprep.subr.bf16.mxu0 0
  %334 = vmatpush1.bf16.msra.mxu0 %v262
  %335 = vmatprep.subr.bf16.mxu0 0
  %336 = vmatpush1.bf16.msra.mxu0 %v263
  %337 = vmatprep.subr.bf16.mxu0 0
  %338 = vmatpush1.bf16.msra.mxu0 %v264
  %339 = vmatprep.subr.bf16.mxu0 0
  %340 = vmatpush1.bf16.msra.mxu0 %v265
  %341 = vmatprep.subr.bf16.mxu0 0
  %342 = vmatpush1.bf16.msra.mxu0 %v266
  %343 = vmatprep.subr.bf16.mxu0 0
  %344 = vmatpush1.bf16.msra.mxu0 %v267
  %345 = vmatprep.subr.bf16.mxu0 0
  %346 = vmatpush1.bf16.msra.mxu0 %v268
  %347 = vmatprep.subr.bf16.mxu0 0
  %348 = vmatpush1.bf16.msra.mxu0 %v269
  %349 = vmatprep.subr.bf16.mxu0 0
  %350 = vmatpush1.bf16.msra.mxu0 %v270
  %351 = vmatprep.mubr.bf16.mxu0 %v112
  %352 = vmatmul.mubr.bf16.gmra.mrb[0].mxu0 %v111
  %v353 = vpop.f32.mrb[0].mxu0
  %v354 = vadd.f32 0.0, %v353
  %v355 = vpop.f32.mrb[0].mxu0
  %v356 = vpop.f32.mrb[0].mxu0
  %v357 = vadd.f32 0.0, %v356
  %v358 = vpop.f32.mrb[0].mxu0
  %359 = vmatprep.mubr.bf16.mxu0 %v116
  %360 = vmatmul.mubr.bf16.gmra.mrb[0].mxu0 %v115
  %v361 = vpop.f32.mrb[0].mxu0
  %v362 = vadd.f32 0.0, %v361
  %v363 = vpop.f32.mrb[0].mxu0
  %v364 = vpop.f32.mrb[0].mxu0
  %v365 = vadd.f32 0.0, %v364
  %v366 = vpop.f32.mrb[0].mxu0
  %367 = vdwg.mxu0
  %368 = vmatprep.subr.bf16.mxu0 0
  %369 = vmatpush1.bf16.msra.mxu0 %v271
  %370 = vmatprep.subr.bf16.mxu0 0
  %371 = vmatpush1.bf16.msra.mxu0 %v272
  %372 = vmatprep.subr.bf16.mxu0 0
  %373 = vmatpush1.bf16.msra.mxu0 %v273
  %374 = vmatprep.subr.bf16.mxu0 0
  %375 = vmatpush1.bf16.msra.mxu0 %v274
  %376 = vmatprep.subr.bf16.mxu0 0
  %377 = vmatpush1.bf16.msra.mxu0 %v275
  %378 = vmatprep.subr.bf16.mxu0 0
  %379 = vmatpush1.bf16.msra.mxu0 %v276
  %380 = vmatprep.subr.bf16.mxu0 0
  %381 = vmatpush1.bf16.msra.mxu0 %v277
  %382 = vmatprep.subr.bf16.mxu0 0
  %383 = vmatpush1.bf16.msra.mxu0 %v278
  %384 = vmatprep.subr.bf16.mxu0 0
  %385 = vmatpush1.bf16.msra.mxu0 %v279
  %386 = vmatprep.subr.bf16.mxu0 0
  %387 = vmatpush1.bf16.msra.mxu0 %v280
  %388 = vmatprep.subr.bf16.mxu0 0
  %389 = vmatpush1.bf16.msra.mxu0 %v281
  %390 = vmatprep.subr.bf16.mxu0 0
  %391 = vmatpush1.bf16.msra.mxu0 %v282
  %392 = vmatprep.subr.bf16.mxu0 0
  %393 = vmatpush1.bf16.msra.mxu0 %v283
  %394 = vmatprep.subr.bf16.mxu0 0
  %395 = vmatpush1.bf16.msra.mxu0 %v284
  %396 = vmatprep.subr.bf16.mxu0 0
  %397 = vmatpush1.bf16.msra.mxu0 %v285
  %398 = vmatprep.subr.bf16.mxu0 0
  %399 = vmatpush1.bf16.msra.mxu0 %v286
  %400 = vmatprep.mubr.bf16.mxu0 %v114
  %401 = vmatmul.mubr.bf16.gmra.mrb[0].mxu0 %v113
  %v402 = vpop.f32.mrb[0].mxu0
  %v403 = vadd.f32 %v354, %v402
  %v404 = vpop.f32.mrb[0].mxu0
  %v405 = vpop.f32.mrb[0].mxu0
  %v406 = vadd.f32 %v357, %v405
  %v407 = vpop.f32.mrb[0].mxu0
  %408 = vmatprep.mubr.bf16.mxu0 %v118
  %409 = vmatmul.mubr.bf16.gmra.mrb[0].mxu0 %v117
  %v410 = vpop.f32.mrb[0].mxu0
  %v411 = vadd.f32 %v362, %v410
  %v412 = vpop.f32.mrb[0].mxu0
  %v413 = vpop.f32.mrb[0].mxu0
  %v414 = vadd.f32 %v365, %v413
  %v415 = vpop.f32.mrb[0].mxu0
  %416 = vdwg.mxu0
  %v417 = vadd.f32 %v403, %v406
  %v418 = vadd.f32 %v417, %v411
  %v419 = vadd.f32 %v418, %v414
  %v420 = vrot.slane %v419, 4
  %v421 = vadd.f32 %v419, %v420
  %v422 = vrot.slane %v421, 2
  %v423 = vadd.f32 %v421, %v422
  %v424 = vrot.slane %v423, 1
  %v425 = vadd.f32 %v423, %v424
  %v426 = vmul.f32 %v403, %v403
  %v427 = vmul.f32 %v406, %v406
  %v428 = vmul.f32 %v411, %v411
  %v429 = vmul.f32 %v414, %v414
  %v430 = vadd.f32 %v426, %v427
  %v431 = vadd.f32 %v430, %v428
  %v432 = vadd.f32 %v431, %v429
  %v433 = vrot.slane %v432, 4
  %v434 = vadd.f32 %v432, %v433
  %v435 = vrot.slane %v434, 2
  %v436 = vadd.f32 %v434, %v435
  %v437 = vrot.slane %v436, 1
  %v438 = vadd.f32 %v436, %v437
  %439 = vst [vmem:[%s3] sm:$0xff] %v425
  %440 = vst [vmem:[%s4] sm:$0xff] %v438
  %v441 = vpack.c.bf16 %v406, %v403
  %v442 = vpack.c.bf16 %v414, %v411
  %v445 = vunpack.c.l.b16 %v441
  %v446 = vunpack.c.h.b16 %v441
  %v447 = vunpack.c.l.b16 %v442
  %v448 = vunpack.c.h.b16 %v442
  %v449 = vpack.c.b16 %v445, %v445
  %v450 = vpack.c.b16 %v446, %v446
  %v451 = vpack.c.b16 %v447, %v447
  %v452 = vpack.c.b16 %v448, %v448
  %457 = vst [vmem:[%s2] sm:$0xf] %v449
  %458 = vst [vmem:[%s2 + $0x4] sm:$0xf] %v450
  %459 = vst [vmem:[%s2 + $0x8] sm:$0xf] %v451
  %460 = vst [vmem:[%s2 + $0xc] sm:$0xf] %v452
  // Predicated region
  $region10: #{discriminator_forward.7} parent=0 // pred_check
    _
  $region11: #{discriminator_forward.7} parent=0 // pred_check_branch
    %462 = sbr.rel (0) target = $region13
  $region12: #{discriminator_forward.7} parent=0 // pred_region
    _
  $region13: #{discriminator_forward.7} parent=0 // pred_fallthru
    _
  // Predicated region
  $region14: #{discriminator_forward.7} parent=0 // pred_check
    _
  $region15: #{discriminator_forward.7} parent=0 // pred_check_branch
    %464 = sbr.rel (0) target = $region17
  $region16: #{discriminator_forward.7} parent=0 // pred_region
    _
  $region17: #{discriminator_forward.7} parent=0 // pred_fallthru
    _
  // Predicated region
  $region18: #{discriminator_forward.7} parent=0 // pred_check
    _
  $region19: #{discriminator_forward.7} parent=0 // pred_check_branch
    %466 = sbr.rel (0) target = $region21
  $region20: #{discriminator_forward.7} parent=0 // pred_region
    _
  $region21: #{discriminator_forward.7} parent=0 // pred_fallthru
    _
  // Predicated region
  $region22: #{discriminator_forward.7} parent=0 // pred_check
    _
  $region23: #{discriminator_forward.7} parent=0 // pred_check_branch
    %468 = sbr.rel (0) target = $region25
  $region24: #{discriminator_forward.7} parent=0 // pred_region
    _
  $region25: #{discriminator_forward.7} parent=0 // pred_fallthru
    _
  // Predicated region
  $region26: #{discriminator_forward.7} parent=0 // pred_check
    _
  $region27: #{discriminator_forward.7} parent=0 // pred_check_branch
    %470 = sbr.rel (0) target = $region29
  $region28: #{discriminator_forward.7} parent=0 // pred_region
    _
  $region29: #{discriminator_forward.7} parent=0 // pred_fallthru
    _
  // Predicated region
  $region30: #{discriminator_forward.7} parent=0 // pred_check
    _
  $region31: #{discriminator_forward.7} parent=0 // pred_check_branch
    %472 = sbr.rel (0) target = $region33
  $region32: #{discriminator_forward.7} parent=0 // pred_region
    _
  $region33: #{discriminator_forward.7} parent=0 // pred_fallthru
    _

</llo_original>
